<compile_context>
chip_gen: v6e
topology: v6e:2x2x1
jax: 0.10.0
libtpu: 0.0.40
codegen_flags: <defaults>
</compile_context>

<pallas_src>
import math
import jax
import jax.numpy as jnp
from jax.experimental import pallas as pl
from jax.experimental.pallas import tpu as pltpu

# ---------------- config (small, consistent with the module) ----------------
B = 2          # batch
S = 8          # sequence length
H = 32         # hidden_size
NH = 4         # num_attention_heads
DH = H // NH   # head dim
I = 64         # intermediate_size
NLAYERS = 2    # num_hidden_layers
EPS = 1e-12    # layer_norm_eps
OUTPUT_ATTENTIONS = True
OUTPUT_HIDDEN_STATES = True
COMPUTE_DTYPE = jnp.float32   # set to jnp.bfloat16 on v6e/v7x at real sizes


# ---------------- shared math helpers (used in-kernel and in the reference) ----------------
def _layer_norm(x, w, b):
    mu = jnp.mean(x, axis=-1, keepdims=True)
    var = jnp.mean((x - mu) ** 2, axis=-1, keepdims=True)
    return (x - mu) * jax.lax.rsqrt(var + EPS) * w + b


def _gelu(x):
    # hidden_act = "gelu_new" (tanh approximation of GELU)
    return 0.5 * x * (1.0 + jnp.tanh(math.sqrt(2.0 / math.pi) * (x + 0.044715 * x ** 3)))


# ---------------- standalone BertAddNorm kernel (the spec module) ----------------
def add_norm_kernel(h_ref, res_ref, w_ref, b_ref, lnw_ref, lnb_ref, out_ref):
    # dense -> dropout (identity in eval) -> layer_norm(hidden + input_tensor)
    h = h_ref[...].reshape(B * S, I).astype(jnp.float32)
    res = res_ref[...].reshape(B * S, H).astype(jnp.float32)
    y = jnp.dot(h, w_ref[...], preferred_element_type=jnp.float32) + b_ref[...]
    out = _layer_norm(y + res, lnw_ref[...], lnb_ref[...])
    out_ref[...] = out.reshape(B, S, H).astype(out_ref.dtype)


def bert_add_norm(hidden_states, input_tensor, w, b, lnw, lnb):
    """BertAddNorm.forward in one pallas_call, whole batch in a single block."""
    return pl.pallas_call(
        add_norm_kernel,
        out_shape=jax.ShapeDtypeStruct((B, S, H), jnp.float32),
    )(hidden_states, input_tensor, w, b, lnw, lnb)


# ---------------- fused BertEncoder kernel: grid over layers, state in VMEM ----------------
def encoder_kernel(*refs):
    h_scr = refs[-1]                         # VMEM scratch: (B*S, H) hidden state
    if OUTPUT_ATTENTIONS:
        attn_ref = refs[-2]
        hid_ref = refs[-3]
        in_refs = refs[:-3]
    else:
        attn_ref = None
        hid_ref = refs[-2]
        in_refs = refs[:-2]
    (x_ref, mask_ref,
     wq_ref, bq_ref, wk_ref, bk_ref, wv_ref, bv_ref,
     wo_ref, bo_ref, ln1w_ref, ln1b_ref,
     wi_ref, bi_ref, wf_ref, bf_ref, ln2w_ref, ln2b_ref) = in_refs

    layer = pl.program_id(0)

    # Layer 0: load the input activations into the VMEM-resident hidden state.
    @pl.when(layer == 0)
    def _():
        h_scr[...] = x_ref[...].reshape(B * S, H).astype(jnp.float32)

    cd = COMPUTE_DTYPE
    x2 = h_scr[...]                              # (B*S, H) f32, resident across layers
    mask = mask_ref[...].astype(jnp.float32)     # (B, 1, S) additive attention mask
    xc = x2.astype(cd)

    # ---- self-attention: QKV projections over the whole batch (MXU) ----
    q = jnp.dot(xc, wq_ref[0].astype(cd), preferred_element_type=jnp.float32) + bq_ref[0]
    k = jnp.dot(xc, wk_ref[0].astype(cd), preferred_element_type=jnp.float32) + bk_ref[0]
    v = jnp.dot(xc, wv_ref[0].astype(cd), preferred_element_type=jnp.float32) + bv_ref[0]

    scale = 1.0 / math.sqrt(DH)
    wo = wo_ref[0].astype(cd)
    attn_out = jnp.zeros((B * S, H), jnp.float32)
    probs = []
    for h in range(NH):   # static loop; each step is a whole-batch 3-D contraction
        sl = slice(h * DH, (h + 1) * DH)
        qh = q[:, sl].reshape(B, S, DH)
        kh = k[:, sl].reshape(B, S, DH)
        vh = v[:, sl].reshape(B, S, DH)
        s = jnp.einsum("bqd,bkd->bqk", qh, kh,
                       preferred_element_type=jnp.float32) * scale + mask      # (B, S, S)
        s = s - jnp.max(s, axis=-1, keepdims=True)
        e = jnp.exp(s)
        # softmax divide -> EUP reciprocal + multiply (frees VPU slots)
        p = e * pl.reciprocal(jnp.sum(e, axis=-1, keepdims=True), approx=True)
        probs.append(p)
        ctx = jnp.einsum("bqk,bkd->bqd", p.astype(cd), vh.astype(cd),
                         preferred_element_type=jnp.float32)                   # (B, S, DH)
        # Fold the attention output projection into the head loop: no concatenate.
        attn_out = attn_out + jnp.dot(ctx.reshape(B * S, DH).astype(cd), wo[sl, :],
                                      preferred_element_type=jnp.float32)
    if attn_ref is not None:
        attn_ref[0] = jnp.stack(probs, axis=1)   # (B, NH, S, S) — single store/layer

    attn_out = attn_out + bo_ref[0]
    # BertAddNorm #1 (dropout = identity in eval mode)
    h1 = _layer_norm(attn_out + x2, ln1w_ref[0], ln1b_ref[0])

    # ---- feed-forward ----
    inter = _gelu(jnp.dot(h1.astype(cd), wi_ref[0].astype(cd),
                          preferred_element_type=jnp.float32) + bi_ref[0])
    ffn = jnp.dot(inter.astype(cd), wf_ref[0].astype(cd),
                  preferred_element_type=jnp.float32) + bf_ref[0]
    # BertAddNorm #2
    out = _layer_norm(ffn + h1, ln2w_ref[0], ln2b_ref[0])

    h_scr[...] = out                                          # carry to next layer (VMEM)
    hid_ref[0] = out.reshape(B, S, H).astype(hid_ref.dtype)   # per-layer hidden state


def bert_encoder_pallas(x, mask3d, stacked_params):
    """x: (B,S,H), mask3d: (B,1,S), stacked_params: 16 arrays of shape (NLAYERS, ...)."""
    def stacked_spec(p):
        return pl.BlockSpec((1,) + p.shape[1:], lambda l: (l, 0, 0))

    in_specs = [
        pl.BlockSpec((B, S, H), lambda l: (0, 0, 0)),   # constant block: stays resident
        pl.BlockSpec((B, 1, S), lambda l: (0, 0, 0)),
    ] + [stacked_spec(p) for p in stacked_params]

    out_specs = [pl.BlockSpec((1, B, S, H), lambda l: (l, 0, 0, 0))]
    out_shape = [jax.ShapeDtypeStruct((NLAYERS, B, S, H), jnp.float32)]
    if OUTPUT_ATTENTIONS:
        out_specs.append(pl.BlockSpec((1, B, NH, S, S), lambda l: (l, 0, 0, 0, 0)))
        out_shape.append(jax.ShapeDtypeStruct((NLAYERS, B, NH, S, S), jnp.float32))

    return pl.pallas_call(
        encoder_kernel,
        grid=(NLAYERS,),
        in_specs=in_specs,
        out_specs=out_specs,
        out_shape=out_shape,
        scratch_shapes=[pltpu.VMEM((B * S, H), jnp.float32)],
        compiler_params=pltpu.CompilerParams(
            dimension_semantics=("arbitrary",)),   # layers are sequentially dependent
    )(x, mask3d, *stacked_params)


# ---------------- parameter construction (deterministic) ----------------
def init_layer_params(key):
    ks = jax.random.split(key, 8)
    std = 0.02
    wq = std * jax.random.normal(ks[0], (H, H), jnp.float32)
    wk = std * jax.random.normal(ks[1], (H, H), jnp.float32)
    wv = std * jax.random.normal(ks[2], (H, H), jnp.float32)
    wo = std * jax.random.normal(ks[3], (H, H), jnp.float32)
    wi = std * jax.random.normal(ks[4], (H, I), jnp.float32)
    wf = std * jax.random.normal(ks[5], (I, H), jnp.float32)
    bq = 0.01 * jax.random.normal(ks[6], (1, H), jnp.float32)
    bk = jnp.zeros((1, H), jnp.float32)
    bv = 0.01 * jax.random.normal(ks[7], (1, H), jnp.float32)
    bo = jnp.zeros((1, H), jnp.float32)
    bi = jnp.zeros((1, I), jnp.float32)
    bf = jnp.zeros((1, H), jnp.float32)
    ln1w = jnp.ones((1, H), jnp.float32); ln1b = jnp.zeros((1, H), jnp.float32)
    ln2w = jnp.ones((1, H), jnp.float32); ln2b = jnp.zeros((1, H), jnp.float32)
    return [wq, bq, wk, bk, wv, bv, wo, bo, ln1w, ln1b, wi, bi, wf, bf, ln2w, ln2b]


def stack_params(all_params):
    return [jnp.stack([lp[i] for lp in all_params], axis=0)
            for i in range(len(all_params[0]))]


# ---------------- pure-JAX reference (for correctness check) ----------------
def bert_layer_ref(x, mask3d, params):
    (wq, bq, wk, bk, wv, bv, wo, bo, ln1w, ln1b, wi, bi, wf, bf, ln2w, ln2b) = params
    q = x @ wq + bq
    k = x @ wk + bk
    v = x @ wv + bv
    qh = q.reshape(B, S, NH, DH).transpose(0, 2, 1, 3)
    kh = k.reshape(B, S, NH, DH).transpose(0, 2, 1, 3)
    vh = v.reshape(B, S, NH, DH).transpose(0, 2, 1, 3)
    s = jnp.einsum("bhqd,bhkd->bhqk", qh, kh) / math.sqrt(DH) + mask3d[:, None, :, :]
    p = jax.nn.softmax(s, axis=-1)
    ctx = jnp.einsum("bhqk,bhkd->bhqd", p, vh).transpose(0, 2, 1, 3).reshape(B, S, H)
    attn_out = ctx @ wo + bo
    h1 = _layer_norm(attn_out + x, ln1w, ln1b)
    inter = _gelu(h1 @ wi + bi)
    ffn = inter @ wf + bf
    out = _layer_norm(ffn + h1, ln2w, ln2b)
    return out, p


# ---------------- BertEncoder forward (single fused pallas_call) ----------------
def bert_encoder(hidden_states, attention_mask, all_params):
    stacked = stack_params(all_params)
    results = bert_encoder_pallas(hidden_states, attention_mask, stacked)
    hid_all = results[0]                       # (NLAYERS, B, S, H)
    last_hidden = hid_all[-1]
    outputs = (last_hidden,)
    if OUTPUT_HIDDEN_STATES:
        all_hidden = (hidden_states,) + tuple(hid_all[l] for l in range(NLAYERS))
        outputs = outputs + (all_hidden,)
    if OUTPUT_ATTENTIONS:
        attn_all = results[1]                  # (NLAYERS, B, NH, S, S)
        outputs = outputs + (tuple(attn_all[l] for l in range(NLAYERS)),)
    return outputs


if __name__ == "__main__":
    key = jax.random.PRNGKey(0)
    k_x, k_p, k_h = jax.random.split(key, 3)
    x = jax.random.normal(k_x, (B, S, H), jnp.float32)

    # additive attention mask (B, 1, S): mask out the last two keys of batch 1
    mask = jnp.zeros((B, 1, S), jnp.float32)
    mask = mask.at[1, 0, -2:].set(-10000.0)

    layer_keys = jax.random.split(k_p, NLAYERS)
    all_params = [init_layer_params(layer_keys[i]) for i in range(NLAYERS)]

    # ---- fused encoder kernel ----
    outputs = bert_encoder(x, mask, all_params)
    final_hidden = jax.block_until_ready(outputs[0])

    # pure-JAX reference
    h_ref = x
    ref_hiddens, ref_attns = [], []
    for params in all_params:
        h_ref, p_ref = bert_layer_ref(h_ref, mask, params)
        ref_hiddens.append(h_ref)
        ref_attns.append(p_ref)

    # tolerance covers the approximate EUP reciprocal in the softmax denominator
    TOL = 5e-3
    assert jnp.allclose(final_hidden, h_ref, atol=TOL, rtol=TOL), "final hidden mismatch"
    if OUTPUT_HIDDEN_STATES:
        for l in range(NLAYERS):
            assert jnp.allclose(outputs[1][l + 1], ref_hiddens[l], atol=TOL, rtol=TOL), \
                f"hidden state mismatch at layer {l}"
    if OUTPUT_ATTENTIONS:
        for l in range(NLAYERS):
            assert jnp.allclose(outputs[2][l], ref_attns[l], atol=TOL, rtol=TOL), \
                f"attention probs mismatch at layer {l}"

    # ---- standalone BertAddNorm kernel (the spec module itself) ----
    inter_act = jax.random.normal(k_h, (B, S, I), jnp.float32)   # "hidden_states" (I-dim)
    wf, bf, ln2w, ln2b = all_params[0][12], all_params[0][13], all_params[0][14], all_params[0][15]
    an_out = jax.block_until_ready(bert_add_norm(inter_act, x, wf, bf, ln2w, ln2b))
    an_ref = _layer_norm(inter_act.reshape(B * S, I) @ wf + bf + x.reshape(B * S, H),
                         ln2w, ln2b).reshape(B, S, H)
    assert jnp.allclose(an_out, an_ref, atol=1e-4, rtol=1e-4), "BertAddNorm mismatch"

    print("KERNEL_OK")
</pallas_src>

<mosaic_0001>
module attributes {stable_mosaic.version = 11 : i64} {
  func.func @encoder_kernel(%arg0: i32, %arg1: memref<2x8x32xf32, #tpu.memory_space<vmem>>, %arg2: memref<2x1x8xf32, #tpu.memory_space<vmem>>, %arg3: memref<1x32x32xf32, #tpu.memory_space<vmem>>, %arg4: memref<1x1x32xf32, #tpu.memory_space<vmem>>, %arg5: memref<1x32x32xf32, #tpu.memory_space<vmem>>, %arg6: memref<1x1x32xf32, #tpu.memory_space<vmem>>, %arg7: memref<1x32x32xf32, #tpu.memory_space<vmem>>, %arg8: memref<1x1x32xf32, #tpu.memory_space<vmem>>, %arg9: memref<1x32x32xf32, #tpu.memory_space<vmem>>, %arg10: memref<1x1x32xf32, #tpu.memory_space<vmem>>, %arg11: memref<1x1x32xf32, #tpu.memory_space<vmem>>, %arg12: memref<1x1x32xf32, #tpu.memory_space<vmem>>, %arg13: memref<1x32x64xf32, #tpu.memory_space<vmem>>, %arg14: memref<1x1x64xf32, #tpu.memory_space<vmem>>, %arg15: memref<1x64x32xf32, #tpu.memory_space<vmem>>, %arg16: memref<1x1x32xf32, #tpu.memory_space<vmem>>, %arg17: memref<1x1x32xf32, #tpu.memory_space<vmem>>, %arg18: memref<1x1x32xf32, #tpu.memory_space<vmem>>, %arg19: memref<1x2x8x32xf32, #tpu.memory_space<vmem>>, %arg20: memref<1x2x4x8x8xf32, #tpu.memory_space<vmem>>, %arg21: memref<16x32xf32, #tpu.memory_space<vmem>>) attributes {dimension_semantics = [#tpu.dimension_semantics<arbitrary>], iteration_bounds = array<i64: 2>, scalar_prefetch = 0 : i64, scratch_operands = 1 : i64, tpu.core_type = #tpu.core_type<tc>, window_params = [{pipeline_mode = #tpu.pipeline_mode<synchronous>, transform_indices = @transform_0, window_bounds = array<i64: 2, 8, 32>}, {pipeline_mode = #tpu.pipeline_mode<synchronous>, transform_indices = @transform_1, window_bounds = array<i64: 2, 1, 8>}, {transform_indices = @transform_2, window_bounds = array<i64: 1, 32, 32>}, {transform_indices = @transform_3, window_bounds = array<i64: 1, 1, 32>}, {transform_indices = @transform_4, window_bounds = array<i64: 1, 32, 32>}, {transform_indices = @transform_5, window_bounds = array<i64: 1, 1, 32>}, {transform_indices = @transform_6, window_bounds = array<i64: 1, 32, 32>}, {transform_indices = @transform_7, window_bounds = array<i64: 1, 1, 32>}, {transform_indices = @transform_8, window_bounds = array<i64: 1, 32, 32>}, {transform_indices = @transform_9, window_bounds = array<i64: 1, 1, 32>}, {transform_indices = @transform_10, window_bounds = array<i64: 1, 1, 32>}, {transform_indices = @transform_11, window_bounds = array<i64: 1, 1, 32>}, {transform_indices = @transform_12, window_bounds = array<i64: 1, 32, 64>}, {transform_indices = @transform_13, window_bounds = array<i64: 1, 1, 64>}, {transform_indices = @transform_14, window_bounds = array<i64: 1, 64, 32>}, {transform_indices = @transform_15, window_bounds = array<i64: 1, 1, 32>}, {transform_indices = @transform_16, window_bounds = array<i64: 1, 1, 32>}, {transform_indices = @transform_17, window_bounds = array<i64: 1, 1, 32>}, {transform_indices = @transform_18, window_bounds = array<i64: 1, 2, 8, 32>}, {transform_indices = @transform_19, window_bounds = array<i64: 1, 2, 4, 8, 8>}]} {
    %c0_i32 = arith.constant 0 : i32
    %0 = arith.cmpi eq, %arg0, %c0_i32 : i32
    %1 = arith.extui %0 : i1 to i32
    %c0_i32_0 = arith.constant 0 : i32
    %2 = arith.cmpi ne, %1, %c0_i32_0 : i32
    scf.if %2 {
      %c0_107 = arith.constant 0 : index
      %c0_108 = arith.constant 0 : index
      %c0_109 = arith.constant 0 : index
      %231 = vector.load %arg1[%c0_107, %c0_108, %c0_109] : memref<2x8x32xf32, #tpu.memory_space<vmem>>, vector<2x8x32xf32>
      %232 = vector.shape_cast %231 : vector<2x8x32xf32> to vector<16x32xf32>
      %c0_110 = arith.constant 0 : index
      %c0_111 = arith.constant 0 : index
      %233 = vector.load %arg21[%c0_110, %c0_111] : memref<16x32xf32, #tpu.memory_space<vmem>>, vector<16x32xf32>
      tpu.vector_store %arg21[%c0_110, %c0_111], %232 {strides = array<i32>} : memref<16x32xf32, #tpu.memory_space<vmem>>, vector<16x32xf32>,
    } else {
    }
    %c0 = arith.constant 0 : index
    %c0_1 = arith.constant 0 : index
    %3 = vector.load %arg21[%c0, %c0_1] : memref<16x32xf32, #tpu.memory_space<vmem>>, vector<16x32xf32>
    %c0_2 = arith.constant 0 : index
    %c0_3 = arith.constant 0 : index
    %c0_4 = arith.constant 0 : index
    %4 = vector.load %arg2[%c0_2, %c0_3, %c0_4] : memref<2x1x8xf32, #tpu.memory_space<vmem>>, vector<2x1x8xf32>
    %c0_5 = arith.constant 0 : index
    %c0_6 = arith.constant 0 : index
    %c0_7 = arith.constant 0 : index
    %5 = vector.load %arg3[%c0_5, %c0_6, %c0_7] : memref<1x32x32xf32, #tpu.memory_space<vmem>>, vector<1x32x32xf32>
    %6 = vector.shape_cast %5 : vector<1x32x32xf32> to vector<32x32xf32>
    %cst = arith.constant dense<0.000000e+00> : vector<16x32xf32>
    %7 = tpu.matmul %3, %6, %cst {dimension_numbers = #tpu.dot_dimension_numbers<[1], [0], [0], [1], [0, 0, 1, 1], [], []>} : vector<16x32xf32>, vector<32x32xf32>, vector<16x32xf32> -> vector<16x32xf32>
    %c0_8 = arith.constant 0 : index
    %c0_9 = arith.constant 0 : index
    %c0_10 = arith.constant 0 : index
    %8 = vector.load %arg4[%c0_8, %c0_9, %c0_10] : memref<1x1x32xf32, #tpu.memory_space<vmem>>, vector<1x1x32xf32>
    %9 = vector.shape_cast %8 : vector<1x1x32xf32> to vector<1x32xf32>
    %10 = vector.broadcast %9 : vector<1x32xf32> to vector<16x32xf32>
    %11 = arith.addf %7, %10 : vector<16x32xf32>
    %c0_11 = arith.constant 0 : index
    %c0_12 = arith.constant 0 : index
    %c0_13 = arith.constant 0 : index
    %12 = vector.load %arg5[%c0_11, %c0_12, %c0_13] : memref<1x32x32xf32, #tpu.memory_space<vmem>>, vector<1x32x32xf32>
    %13 = vector.shape_cast %12 : vector<1x32x32xf32> to vector<32x32xf32>
    %cst_14 = arith.constant dense<0.000000e+00> : vector<16x32xf32>
    %14 = tpu.matmul %3, %13, %cst_14 {dimension_numbers = #tpu.dot_dimension_numbers<[1], [0], [0], [1], [0, 0, 1, 1], [], []>} : vector<16x32xf32>, vector<32x32xf32>, vector<16x32xf32> -> vector<16x32xf32>
    %c0_15 = arith.constant 0 : index
    %c0_16 = arith.constant 0 : index
    %c0_17 = arith.constant 0 : index
    %15 = vector.load %arg6[%c0_15, %c0_16, %c0_17] : memref<1x1x32xf32, #tpu.memory_space<vmem>>, vector<1x1x32xf32>
    %16 = vector.shape_cast %15 : vector<1x1x32xf32> to vector<1x32xf32>
    %17 = vector.broadcast %16 : vector<1x32xf32> to vector<16x32xf32>
    %18 = arith.addf %14, %17 : vector<16x32xf32>
    %c0_18 = arith.constant 0 : index
    %c0_19 = arith.constant 0 : index
    %c0_20 = arith.constant 0 : index
    %19 = vector.load %arg7[%c0_18, %c0_19, %c0_20] : memref<1x32x32xf32, #tpu.memory_space<vmem>>, vector<1x32x32xf32>
    %20 = vector.shape_cast %19 : vector<1x32x32xf32> to vector<32x32xf32>
    %cst_21 = arith.constant dense<0.000000e+00> : vector<16x32xf32>
    %21 = tpu.matmul %3, %20, %cst_21 {dimension_numbers = #tpu.dot_dimension_numbers<[1], [0], [0], [1], [0, 0, 1, 1], [], []>} : vector<16x32xf32>, vector<32x32xf32>, vector<16x32xf32> -> vector<16x32xf32>
    %c0_22 = arith.constant 0 : index
    %c0_23 = arith.constant 0 : index
    %c0_24 = arith.constant 0 : index
    %22 = vector.load %arg8[%c0_22, %c0_23, %c0_24] : memref<1x1x32xf32, #tpu.memory_space<vmem>>, vector<1x1x32xf32>
    %23 = vector.shape_cast %22 : vector<1x1x32xf32> to vector<1x32xf32>
    %24 = vector.broadcast %23 : vector<1x32xf32> to vector<16x32xf32>
    %25 = arith.addf %21, %24 : vector<16x32xf32>
    %c0_25 = arith.constant 0 : index
    %c0_26 = arith.constant 0 : index
    %c0_27 = arith.constant 0 : index
    %26 = vector.load %arg9[%c0_25, %c0_26, %c0_27] : memref<1x32x32xf32, #tpu.memory_space<vmem>>, vector<1x32x32xf32>
    %27 = vector.shape_cast %26 : vector<1x32x32xf32> to vector<32x32xf32>
    %cst_28 = arith.constant 0.000000e+00 : f32
    %28 = vector.broadcast %cst_28 : f32 to vector<16x32xf32>
    %29 = vector.extract_strided_slice %11 {offsets = [0, 0], sizes = [16, 8], strides = [1, 1]} : vector<16x32xf32> to vector<16x8xf32>
    %30 = vector.shape_cast %29 : vector<16x8xf32> to vector<2x8x8xf32>
    %31 = vector.extract_strided_slice %18 {offsets = [0, 0], sizes = [16, 8], strides = [1, 1]} : vector<16x32xf32> to vector<16x8xf32>
    %32 = vector.shape_cast %31 : vector<16x8xf32> to vector<2x8x8xf32>
    %33 = vector.extract_strided_slice %25 {offsets = [0, 0], sizes = [16, 8], strides = [1, 1]} : vector<16x32xf32> to vector<16x8xf32>
    %34 = vector.shape_cast %33 : vector<16x8xf32> to vector<2x8x8xf32>
    "tpu.trace_start"() <{level = 10 : i32, message = "bqd,bkd->bqk"}> : () -> ()
    %cst_29 = arith.constant dense<0.000000e+00> : vector<2x8x8xf32>
    %35 = tpu.matmul %30, %32, %cst_29 {dimension_numbers = #tpu.dot_dimension_numbers<[2], [2], [1], [1], [0, 0, 0, 1, 1, 1], [0], [0]>} : vector<2x8x8xf32>, vector<2x8x8xf32>, vector<2x8x8xf32> -> vector<2x8x8xf32>
    "tpu.trace_stop"() : () -> ()
    %cst_30 = arith.constant 0.353553385 : f32
    %36 = vector.broadcast %cst_30 : f32 to vector<2x8x8xf32>
    %37 = arith.mulf %35, %36 : vector<2x8x8xf32>
    %38 = vector.broadcast %4 : vector<2x1x8xf32> to vector<2x8x8xf32>
    %39 = arith.addf %37, %38 : vector<2x8x8xf32>
    %cst_31 = arith.constant dense<0xFF800000> : vector<2x8xf32>
    %40 = vector.multi_reduction <maximumf>, %39, %cst_31 [2] : vector<2x8x8xf32> to vector<2x8xf32>
    %41 = vector.shape_cast %40 : vector<2x8xf32> to vector<2x8x1xf32>
    %42 = vector.broadcast %41 : vector<2x8x1xf32> to vector<2x8x8xf32>
    %43 = arith.subf %39, %42 : vector<2x8x8xf32>
    %44 = math.exp %43 : vector<2x8x8xf32>
    %cst_32 = arith.constant dense<0.000000e+00> : vector<2x8xf32>
    %45 = vector.multi_reduction <add>, %44, %cst_32 [2] : vector<2x8x8xf32> to vector<2x8xf32>
    %46 = vector.shape_cast %45 : vector<2x8xf32> to vector<2x8x1xf32>
    %47 = tpu.reciprocal %46 {approx = true} : vector<2x8x1xf32> -> vector<2x8x1xf32>
    %48 = vector.broadcast %47 : vector<2x8x1xf32> to vector<2x8x8xf32>
    %49 = arith.mulf %44, %48 : vector<2x8x8xf32>
    "tpu.trace_start"() <{level = 10 : i32, message = "bqk,bkd->bqd"}> : () -> ()
    %cst_33 = arith.constant dense<0.000000e+00> : vector<2x8x8xf32>
    %50 = tpu.matmul %49, %34, %cst_33 {dimension_numbers = #tpu.dot_dimension_numbers<[2], [1], [1], [2], [0, 0, 0, 1, 1, 2], [0], [0]>} : vector<2x8x8xf32>, vector<2x8x8xf32>, vector<2x8x8xf32> -> vector<2x8x8xf32>
    "tpu.trace_stop"() : () -> ()
    %51 = vector.shape_cast %50 : vector<2x8x8xf32> to vector<16x8xf32>
    %52 = vector.extract_strided_slice %27 {offsets = [0, 0], sizes = [8, 32], strides = [1, 1]} : vector<32x32xf32> to vector<8x32xf32>
    %cst_34 = arith.constant dense<0.000000e+00> : vector<16x32xf32>
    %53 = tpu.matmul %51, %52, %cst_34 {dimension_numbers = #tpu.dot_dimension_numbers<[1], [0], [0], [1], [0, 0, 1, 1], [], []>} : vector<16x8xf32>, vector<8x32xf32>, vector<16x32xf32> -> vector<16x32xf32>
    %54 = arith.addf %28, %53 : vector<16x32xf32>
    %55 = vector.extract_strided_slice %11 {offsets = [0, 8], sizes = [16, 8], strides = [1, 1]} : vector<16x32xf32> to vector<16x8xf32>
    %56 = vector.shape_cast %55 : vector<16x8xf32> to vector<2x8x8xf32>
    %57 = vector.extract_strided_slice %18 {offsets = [0, 8], sizes = [16, 8], strides = [1, 1]} : vector<16x32xf32> to vector<16x8xf32>
    %58 = vector.shape_cast %57 : vector<16x8xf32> to vector<2x8x8xf32>
    %59 = vector.extract_strided_slice %25 {offsets = [0, 8], sizes = [16, 8], strides = [1, 1]} : vector<16x32xf32> to vector<16x8xf32>
    %60 = vector.shape_cast %59 : vector<16x8xf32> to vector<2x8x8xf32>
    "tpu.trace_start"() <{level = 10 : i32, message = "bqd,bkd->bqk"}> : () -> ()
    %cst_35 = arith.constant dense<0.000000e+00> : vector<2x8x8xf32>
    %61 = tpu.matmul %56, %58, %cst_35 {dimension_numbers = #tpu.dot_dimension_numbers<[2], [2], [1], [1], [0, 0, 0, 1, 1, 1], [0], [0]>} : vector<2x8x8xf32>, vector<2x8x8xf32>, vector<2x8x8xf32> -> vector<2x8x8xf32>
    "tpu.trace_stop"() : () -> ()
    %cst_36 = arith.constant 0.353553385 : f32
    %62 = vector.broadcast %cst_36 : f32 to vector<2x8x8xf32>
    %63 = arith.mulf %61, %62 : vector<2x8x8xf32>
    %64 = vector.broadcast %4 : vector<2x1x8xf32> to vector<2x8x8xf32>
    %65 = arith.addf %63, %64 : vector<2x8x8xf32>
    %cst_37 = arith.constant dense<0xFF800000> : vector<2x8xf32>
    %66 = vector.multi_reduction <maximumf>, %65, %cst_37 [2] : vector<2x8x8xf32> to vector<2x8xf32>
    %67 = vector.shape_cast %66 : vector<2x8xf32> to vector<2x8x1xf32>
    %68 = vector.broadcast %67 : vector<2x8x1xf32> to vector<2x8x8xf32>
    %69 = arith.subf %65, %68 : vector<2x8x8xf32>
    %70 = math.exp %69 : vector<2x8x8xf32>
    %cst_38 = arith.constant dense<0.000000e+00> : vector<2x8xf32>
    %71 = vector.multi_reduction <add>, %70, %cst_38 [2] : vector<2x8x8xf32> to vector<2x8xf32>
    %72 = vector.shape_cast %71 : vector<2x8xf32> to vector<2x8x1xf32>
    %73 = tpu.reciprocal %72 {approx = true} : vector<2x8x1xf32> -> vector<2x8x1xf32>
    %74 = vector.broadcast %73 : vector<2x8x1xf32> to vector<2x8x8xf32>
    %75 = arith.mulf %70, %74 : vector<2x8x8xf32>
    "tpu.trace_start"() <{level = 10 : i32, message = "bqk,bkd->bqd"}> : () -> ()
    %cst_39 = arith.constant dense<0.000000e+00> : vector<2x8x8xf32>
    %76 = tpu.matmul %75, %60, %cst_39 {dimension_numbers = #tpu.dot_dimension_numbers<[2], [1], [1], [2], [0, 0, 0, 1, 1, 2], [0], [0]>} : vector<2x8x8xf32>, vector<2x8x8xf32>, vector<2x8x8xf32> -> vector<2x8x8xf32>
    "tpu.trace_stop"() : () -> ()
    %77 = vector.shape_cast %76 : vector<2x8x8xf32> to vector<16x8xf32>
    %78 = vector.extract_strided_slice %27 {offsets = [8, 0], sizes = [8, 32], strides = [1, 1]} : vector<32x32xf32> to vector<8x32xf32>
    %cst_40 = arith.constant dense<0.000000e+00> : vector<16x32xf32>
    %79 = tpu.matmul %77, %78, %cst_40 {dimension_numbers = #tpu.dot_dimension_numbers<[1], [0], [0], [1], [0, 0, 1, 1], [], []>} : vector<16x8xf32>, vector<8x32xf32>, vector<16x32xf32> -> vector<16x32xf32>
    %80 = arith.addf %54, %79 : vector<16x32xf32>
    %81 = vector.extract_strided_slice %11 {offsets = [0, 16], sizes = [16, 8], strides = [1, 1]} : vector<16x32xf32> to vector<16x8xf32>
    %82 = vector.shape_cast %81 : vector<16x8xf32> to vector<2x8x8xf32>
    %83 = vector.extract_strided_slice %18 {offsets = [0, 16], sizes = [16, 8], strides = [1, 1]} : vector<16x32xf32> to vector<16x8xf32>
    %84 = vector.shape_cast %83 : vector<16x8xf32> to vector<2x8x8xf32>
    %85 = vector.extract_strided_slice %25 {offsets = [0, 16], sizes = [16, 8], strides = [1, 1]} : vector<16x32xf32> to vector<16x8xf32>
    %86 = vector.shape_cast %85 : vector<16x8xf32> to vector<2x8x8xf32>
    "tpu.trace_start"() <{level = 10 : i32, message = "bqd,bkd->bqk"}> : () -> ()
    %cst_41 = arith.constant dense<0.000000e+00> : vector<2x8x8xf32>
    %87 = tpu.matmul %82, %84, %cst_41 {dimension_numbers = #tpu.dot_dimension_numbers<[2], [2], [1], [1], [0, 0, 0, 1, 1, 1], [0], [0]>} : vector<2x8x8xf32>, vector<2x8x8xf32>, vector<2x8x8xf32> -> vector<2x8x8xf32>
    "tpu.trace_stop"() : () -> ()
    %cst_42 = arith.constant 0.353553385 : f32
    %88 = vector.broadcast %cst_42 : f32 to vector<2x8x8xf32>
    %89 = arith.mulf %87, %88 : vector<2x8x8xf32>
    %90 = vector.broadcast %4 : vector<2x1x8xf32> to vector<2x8x8xf32>
    %91 = arith.addf %89, %90 : vector<2x8x8xf32>
    %cst_43 = arith.constant dense<0xFF800000> : vector<2x8xf32>
    %92 = vector.multi_reduction <maximumf>, %91, %cst_43 [2] : vector<2x8x8xf32> to vector<2x8xf32>
    %93 = vector.shape_cast %92 : vector<2x8xf32> to vector<2x8x1xf32>
    %94 = vector.broadcast %93 : vector<2x8x1xf32> to vector<2x8x8xf32>
    %95 = arith.subf %91, %94 : vector<2x8x8xf32>
    %96 = math.exp %95 : vector<2x8x8xf32>
    %cst_44 = arith.constant dense<0.000000e+00> : vector<2x8xf32>
    %97 = vector.multi_reduction <add>, %96, %cst_44 [2] : vector<2x8x8xf32> to vector<2x8xf32>
    %98 = vector.shape_cast %97 : vector<2x8xf32> to vector<2x8x1xf32>
    %99 = tpu.reciprocal %98 {approx = true} : vector<2x8x1xf32> -> vector<2x8x1xf32>
    %100 = vector.broadcast %99 : vector<2x8x1xf32> to vector<2x8x8xf32>
    %101 = arith.mulf %96, %100 : vector<2x8x8xf32>
    "tpu.trace_start"() <{level = 10 : i32, message = "bqk,bkd->bqd"}> : () -> ()
    %cst_45 = arith.constant dense<0.000000e+00> : vector<2x8x8xf32>
    %102 = tpu.matmul %101, %86, %cst_45 {dimension_numbers = #tpu.dot_dimension_numbers<[2], [1], [1], [2], [0, 0, 0, 1, 1, 2], [0], [0]>} : vector<2x8x8xf32>, vector<2x8x8xf32>, vector<2x8x8xf32> -> vector<2x8x8xf32>
    "tpu.trace_stop"() : () -> ()
    %103 = vector.shape_cast %102 : vector<2x8x8xf32> to vector<16x8xf32>
    %104 = vector.extract_strided_slice %27 {offsets = [16, 0], sizes = [8, 32], strides = [1, 1]} : vector<32x32xf32> to vector<8x32xf32>
    %cst_46 = arith.constant dense<0.000000e+00> : vector<16x32xf32>
    %105 = tpu.matmul %103, %104, %cst_46 {dimension_numbers = #tpu.dot_dimension_numbers<[1], [0], [0], [1], [0, 0, 1, 1], [], []>} : vector<16x8xf32>, vector<8x32xf32>, vector<16x32xf32> -> vector<16x32xf32>
    %106 = arith.addf %80, %105 : vector<16x32xf32>
    %107 = vector.extract_strided_slice %11 {offsets = [0, 24], sizes = [16, 8], strides = [1, 1]} : vector<16x32xf32> to vector<16x8xf32>
    %108 = vector.shape_cast %107 : vector<16x8xf32> to vector<2x8x8xf32>
    %109 = vector.extract_strided_slice %18 {offsets = [0, 24], sizes = [16, 8], strides = [1, 1]} : vector<16x32xf32> to vector<16x8xf32>
    %110 = vector.shape_cast %109 : vector<16x8xf32> to vector<2x8x8xf32>
    %111 = vector.extract_strided_slice %25 {offsets = [0, 24], sizes = [16, 8], strides = [1, 1]} : vector<16x32xf32> to vector<16x8xf32>
    %112 = vector.shape_cast %111 : vector<16x8xf32> to vector<2x8x8xf32>
    "tpu.trace_start"() <{level = 10 : i32, message = "bqd,bkd->bqk"}> : () -> ()
    %cst_47 = arith.constant dense<0.000000e+00> : vector<2x8x8xf32>
    %113 = tpu.matmul %108, %110, %cst_47 {dimension_numbers = #tpu.dot_dimension_numbers<[2], [2], [1], [1], [0, 0, 0, 1, 1, 1], [0], [0]>} : vector<2x8x8xf32>, vector<2x8x8xf32>, vector<2x8x8xf32> -> vector<2x8x8xf32>
    "tpu.trace_stop"() : () -> ()
    %cst_48 = arith.constant 0.353553385 : f32
    %114 = vector.broadcast %cst_48 : f32 to vector<2x8x8xf32>
    %115 = arith.mulf %113, %114 : vector<2x8x8xf32>
    %116 = vector.broadcast %4 : vector<2x1x8xf32> to vector<2x8x8xf32>
    %117 = arith.addf %115, %116 : vector<2x8x8xf32>
    %cst_49 = arith.constant dense<0xFF800000> : vector<2x8xf32>
    %118 = vector.multi_reduction <maximumf>, %117, %cst_49 [2] : vector<2x8x8xf32> to vector<2x8xf32>
    %119 = vector.shape_cast %118 : vector<2x8xf32> to vector<2x8x1xf32>
    %120 = vector.broadcast %119 : vector<2x8x1xf32> to vector<2x8x8xf32>
    %121 = arith.subf %117, %120 : vector<2x8x8xf32>
    %122 = math.exp %121 : vector<2x8x8xf32>
    %cst_50 = arith.constant dense<0.000000e+00> : vector<2x8xf32>
    %123 = vector.multi_reduction <add>, %122, %cst_50 [2] : vector<2x8x8xf32> to vector<2x8xf32>
    %124 = vector.shape_cast %123 : vector<2x8xf32> to vector<2x8x1xf32>
    %125 = tpu.reciprocal %124 {approx = true} : vector<2x8x1xf32> -> vector<2x8x1xf32>
    %126 = vector.broadcast %125 : vector<2x8x1xf32> to vector<2x8x8xf32>
    %127 = arith.mulf %122, %126 : vector<2x8x8xf32>
    "tpu.trace_start"() <{level = 10 : i32, message = "bqk,bkd->bqd"}> : () -> ()
    %cst_51 = arith.constant dense<0.000000e+00> : vector<2x8x8xf32>
    %128 = tpu.matmul %127, %112, %cst_51 {dimension_numbers = #tpu.dot_dimension_numbers<[2], [1], [1], [2], [0, 0, 0, 1, 1, 2], [0], [0]>} : vector<2x8x8xf32>, vector<2x8x8xf32>, vector<2x8x8xf32> -> vector<2x8x8xf32>
    "tpu.trace_stop"() : () -> ()
    %129 = vector.shape_cast %128 : vector<2x8x8xf32> to vector<16x8xf32>
    %130 = vector.extract_strided_slice %27 {offsets = [24, 0], sizes = [8, 32], strides = [1, 1]} : vector<32x32xf32> to vector<8x32xf32>
    %cst_52 = arith.constant dense<0.000000e+00> : vector<16x32xf32>
    %131 = tpu.matmul %129, %130, %cst_52 {dimension_numbers = #tpu.dot_dimension_numbers<[1], [0], [0], [1], [0, 0, 1, 1], [], []>} : vector<16x8xf32>, vector<8x32xf32>, vector<16x32xf32> -> vector<16x32xf32>
    %132 = arith.addf %106, %131 : vector<16x32xf32>
    %133 = vector.shape_cast %49 : vector<2x8x8xf32> to vector<2x1x8x8xf32>
    %134 = vector.shape_cast %75 : vector<2x8x8xf32> to vector<2x1x8x8xf32>
    %135 = vector.shape_cast %101 : vector<2x8x8xf32> to vector<2x1x8x8xf32>
    %136 = vector.shape_cast %127 : vector<2x8x8xf32> to vector<2x1x8x8xf32>
    %137 = tpu.concatenate %133, %134, %135, %136 in 1 : vector<2x1x8x8xf32>, vector<2x1x8x8xf32>, vector<2x1x8x8xf32>, vector<2x1x8x8xf32> -> vector<2x4x8x8xf32>
    %c0_53 = arith.constant 0 : index
    %c0_54 = arith.constant 0 : index
    %c0_55 = arith.constant 0 : index
    %c0_56 = arith.constant 0 : index
    %c0_57 = arith.constant 0 : index
    %138 = vector.load %arg20[%c0_53, %c0_54, %c0_55, %c0_56, %c0_57] : memref<1x2x4x8x8xf32, #tpu.memory_space<vmem>>, vector<1x2x4x8x8xf32>
    %139 = vector.shape_cast %138 : vector<1x2x4x8x8xf32> to vector<2x4x8x8xf32>
    %140 = vector.shape_cast %137 : vector<2x4x8x8xf32> to vector<1x2x4x8x8xf32>
    tpu.vector_store %arg20[%c0_53, %c0_54, %c0_55, %c0_56, %c0_57], %140 {strides = array<i32>} : memref<1x2x4x8x8xf32, #tpu.memory_space<vmem>>, vector<1x2x4x8x8xf32>,
    %c0_58 = arith.constant 0 : index
    %c0_59 = arith.constant 0 : index
    %c0_60 = arith.constant 0 : index
    %141 = vector.load %arg10[%c0_58, %c0_59, %c0_60] : memref<1x1x32xf32, #tpu.memory_space<vmem>>, vector<1x1x32xf32>
    %142 = vector.shape_cast %141 : vector<1x1x32xf32> to vector<1x32xf32>
    %143 = vector.broadcast %142 : vector<1x32xf32> to vector<16x32xf32>
    %144 = arith.addf %132, %143 : vector<16x32xf32>
    %145 = arith.addf %144, %3 : vector<16x32xf32>
    %c0_61 = arith.constant 0 : index
    %c0_62 = arith.constant 0 : index
    %c0_63 = arith.constant 0 : index
    %146 = vector.load %arg11[%c0_61, %c0_62, %c0_63] : memref<1x1x32xf32, #tpu.memory_space<vmem>>, vector<1x1x32xf32>
    %147 = vector.shape_cast %146 : vector<1x1x32xf32> to vector<1x32xf32>
    %c0_64 = arith.constant 0 : index
    %c0_65 = arith.constant 0 : index
    %c0_66 = arith.constant 0 : index
    %148 = vector.load %arg12[%c0_64, %c0_65, %c0_66] : memref<1x1x32xf32, #tpu.memory_space<vmem>>, vector<1x1x32xf32>
    %149 = vector.shape_cast %148 : vector<1x1x32xf32> to vector<1x32xf32>
    %cst_67 = arith.constant dense<0.000000e+00> : vector<16xf32>
    %150 = vector.multi_reduction <add>, %145, %cst_67 [1] : vector<16x32xf32> to vector<16xf32>
    %151 = vector.shape_cast %150 : vector<16xf32> to vector<16x1xf32>
    %cst_68 = arith.constant 3.200000e+01 : f32
    %152 = vector.broadcast %cst_68 : f32 to vector<16x1xf32>
    %153 = arith.divf %151, %152 : vector<16x1xf32>
    %154 = vector.broadcast %153 : vector<16x1xf32> to vector<16x32xf32>
    %155 = arith.subf %145, %154 : vector<16x32xf32>
    %156 = arith.mulf %155, %155 : vector<16x32xf32>
    %cst_69 = arith.constant dense<0.000000e+00> : vector<16xf32>
    %157 = vector.multi_reduction <add>, %156, %cst_69 [1] : vector<16x32xf32> to vector<16xf32>
    %158 = vector.shape_cast %157 : vector<16xf32> to vector<16x1xf32>
    %cst_70 = arith.constant 3.200000e+01 : f32
    %159 = vector.broadcast %cst_70 : f32 to vector<16x1xf32>
    %160 = arith.divf %158, %159 : vector<16x1xf32>
    %161 = vector.broadcast %153 : vector<16x1xf32> to vector<16x32xf32>
    %162 = arith.subf %145, %161 : vector<16x32xf32>
    %cst_71 = arith.constant 9.99999996E-13 : f32
    %163 = vector.broadcast %cst_71 : f32 to vector<16x1xf32>
    %164 = arith.addf %160, %163 : vector<16x1xf32>
    %165 = math.rsqrt %164 : vector<16x1xf32>
    %166 = vector.broadcast %165 : vector<16x1xf32> to vector<16x32xf32>
    %167 = arith.mulf %162, %166 : vector<16x32xf32>
    %168 = vector.broadcast %147 : vector<1x32xf32> to vector<16x32xf32>
    %169 = arith.mulf %167, %168 : vector<16x32xf32>
    %170 = vector.broadcast %149 : vector<1x32xf32> to vector<16x32xf32>
    %171 = arith.addf %169, %170 : vector<16x32xf32>
    %c0_72 = arith.constant 0 : index
    %c0_73 = arith.constant 0 : index
    %c0_74 = arith.constant 0 : index
    %172 = vector.load %arg13[%c0_72, %c0_73, %c0_74] : memref<1x32x64xf32, #tpu.memory_space<vmem>>, vector<1x32x64xf32>
    %173 = vector.shape_cast %172 : vector<1x32x64xf32> to vector<32x64xf32>
    %cst_75 = arith.constant dense<0.000000e+00> : vector<16x64xf32>
    %174 = tpu.matmul %171, %173, %cst_75 {dimension_numbers = #tpu.dot_dimension_numbers<[1], [0], [0], [1], [0, 0, 1, 1], [], []>} : vector<16x32xf32>, vector<32x64xf32>, vector<16x64xf32> -> vector<16x64xf32>
    %c0_76 = arith.constant 0 : index
    %c0_77 = arith.constant 0 : index
    %c0_78 = arith.constant 0 : index
    %175 = vector.load %arg14[%c0_76, %c0_77, %c0_78] : memref<1x1x64xf32, #tpu.memory_space<vmem>>, vector<1x1x64xf32>
    %176 = vector.shape_cast %175 : vector<1x1x64xf32> to vector<1x64xf32>
    %177 = vector.broadcast %176 : vector<1x64xf32> to vector<16x64xf32>
    %178 = arith.addf %174, %177 : vector<16x64xf32>
    %cst_79 = arith.constant 5.000000e-01 : f32
    %179 = vector.broadcast %cst_79 : f32 to vector<16x64xf32>
    %180 = arith.mulf %179, %178 : vector<16x64xf32>
    %181 = arith.mulf %178, %178 : vector<16x64xf32>
    %182 = arith.mulf %178, %181 : vector<16x64xf32>
    %cst_80 = arith.constant 4.471500e-02 : f32
    %183 = vector.broadcast %cst_80 : f32 to vector<16x64xf32>
    %184 = arith.mulf %183, %182 : vector<16x64xf32>
    %185 = arith.addf %178, %184 : vector<16x64xf32>
    %cst_81 = arith.constant 0.797884583 : f32
    %186 = vector.broadcast %cst_81 : f32 to vector<16x64xf32>
    %187 = arith.mulf %186, %185 : vector<16x64xf32>
    %188 = math.tanh %187 : vector<16x64xf32>
    %cst_82 = arith.constant 1.000000e+00 : f32
    %189 = vector.broadcast %cst_82 : f32 to vector<16x64xf32>
    %190 = arith.addf %189, %188 : vector<16x64xf32>
    %191 = arith.mulf %180, %190 : vector<16x64xf32>
    %c0_83 = arith.constant 0 : index
    %c0_84 = arith.constant 0 : index
    %c0_85 = arith.constant 0 : index
    %192 = vector.load %arg15[%c0_83, %c0_84, %c0_85] : memref<1x64x32xf32, #tpu.memory_space<vmem>>, vector<1x64x32xf32>
    %193 = vector.shape_cast %192 : vector<1x64x32xf32> to vector<64x32xf32>
    %cst_86 = arith.constant dense<0.000000e+00> : vector<16x32xf32>
    %194 = tpu.matmul %191, %193, %cst_86 {dimension_numbers = #tpu.dot_dimension_numbers<[1], [0], [0], [1], [0, 0, 1, 1], [], []>} : vector<16x64xf32>, vector<64x32xf32>, vector<16x32xf32> -> vector<16x32xf32>
    %c0_87 = arith.constant 0 : index
    %c0_88 = arith.constant 0 : index
    %c0_89 = arith.constant 0 : index
    %195 = vector.load %arg16[%c0_87, %c0_88, %c0_89] : memref<1x1x32xf32, #tpu.memory_space<vmem>>, vector<1x1x32xf32>
    %196 = vector.shape_cast %195 : vector<1x1x32xf32> to vector<1x32xf32>
    %197 = vector.broadcast %196 : vector<1x32xf32> to vector<16x32xf32>
    %198 = arith.addf %194, %197 : vector<16x32xf32>
    %199 = arith.addf %198, %171 : vector<16x32xf32>
    %c0_90 = arith.constant 0 : index
    %c0_91 = arith.constant 0 : index
    %c0_92 = arith.constant 0 : index
    %200 = vector.load %arg17[%c0_90, %c0_91, %c0_92] : memref<1x1x32xf32, #tpu.memory_space<vmem>>, vector<1x1x32xf32>
    %201 = vector.shape_cast %200 : vector<1x1x32xf32> to vector<1x32xf32>
    %c0_93 = arith.constant 0 : index
    %c0_94 = arith.constant 0 : index
    %c0_95 = arith.constant 0 : index
    %202 = vector.load %arg18[%c0_93, %c0_94, %c0_95] : memref<1x1x32xf32, #tpu.memory_space<vmem>>, vector<1x1x32xf32>
    %203 = vector.shape_cast %202 : vector<1x1x32xf32> to vector<1x32xf32>
    %cst_96 = arith.constant dense<0.000000e+00> : vector<16xf32>
    %204 = vector.multi_reduction <add>, %199, %cst_96 [1] : vector<16x32xf32> to vector<16xf32>
    %205 = vector.shape_cast %204 : vector<16xf32> to vector<16x1xf32>
    %cst_97 = arith.constant 3.200000e+01 : f32
    %206 = vector.broadcast %cst_97 : f32 to vector<16x1xf32>
    %207 = arith.divf %205, %206 : vector<16x1xf32>
    %208 = vector.broadcast %207 : vector<16x1xf32> to vector<16x32xf32>
    %209 = arith.subf %199, %208 : vector<16x32xf32>
    %210 = arith.mulf %209, %209 : vector<16x32xf32>
    %cst_98 = arith.constant dense<0.000000e+00> : vector<16xf32>
    %211 = vector.multi_reduction <add>, %210, %cst_98 [1] : vector<16x32xf32> to vector<16xf32>
    %212 = vector.shape_cast %211 : vector<16xf32> to vector<16x1xf32>
    %cst_99 = arith.constant 3.200000e+01 : f32
    %213 = vector.broadcast %cst_99 : f32 to vector<16x1xf32>
    %214 = arith.divf %212, %213 : vector<16x1xf32>
    %215 = vector.broadcast %207 : vector<16x1xf32> to vector<16x32xf32>
    %216 = arith.subf %199, %215 : vector<16x32xf32>
    %cst_100 = arith.constant 9.99999996E-13 : f32
    %217 = vector.broadcast %cst_100 : f32 to vector<16x1xf32>
    %218 = arith.addf %214, %217 : vector<16x1xf32>
    %219 = math.rsqrt %218 : vector<16x1xf32>
    %220 = vector.broadcast %219 : vector<16x1xf32> to vector<16x32xf32>
    %221 = arith.mulf %216, %220 : vector<16x32xf32>
    %222 = vector.broadcast %201 : vector<1x32xf32> to vector<16x32xf32>
    %223 = arith.mulf %221, %222 : vector<16x32xf32>
    %224 = vector.broadcast %203 : vector<1x32xf32> to vector<16x32xf32>
    %225 = arith.addf %223, %224 : vector<16x32xf32>
    %c0_101 = arith.constant 0 : index
    %c0_102 = arith.constant 0 : index
    %226 = vector.load %arg21[%c0_101, %c0_102] : memref<16x32xf32, #tpu.memory_space<vmem>>, vector<16x32xf32>
    tpu.vector_store %arg21[%c0_101, %c0_102], %225 {strides = array<i32>} : memref<16x32xf32, #tpu.memory_space<vmem>>, vector<16x32xf32>,
    %227 = vector.shape_cast %225 : vector<16x32xf32> to vector<2x8x32xf32>
    %c0_103 = arith.constant 0 : index
    %c0_104 = arith.constant 0 : index
    %c0_105 = arith.constant 0 : index
    %c0_106 = arith.constant 0 : index
    %228 = vector.load %arg19[%c0_103, %c0_104, %c0_105, %c0_106] : memref<1x2x8x32xf32, #tpu.memory_space<vmem>>, vector<1x2x8x32xf32>
    %229 = vector.shape_cast %228 : vector<1x2x8x32xf32> to vector<2x8x32xf32>
    %230 = vector.shape_cast %227 : vector<2x8x32xf32> to vector<1x2x8x32xf32>
    tpu.vector_store %arg19[%c0_103, %c0_104, %c0_105, %c0_106], %230 {strides = array<i32>} : memref<1x2x8x32xf32, #tpu.memory_space<vmem>>, vector<1x2x8x32xf32>,
    return
  }
  func.func @transform_0(%arg0: i32) -> (i32, i32, i32) {
    %c0_i32 = arith.constant 0 : i32
    %c0_i32_0 = arith.constant 0 : i32
    %c0_i32_1 = arith.constant 0 : i32
    %c0_i32_2 = arith.constant 0 : i32
    return %c0_i32, %c0_i32_0, %c0_i32_1 : i32, i32, i32
  }
  func.func @transform_1(%arg0: i32) -> (i32, i32, i32) {
    %c0_i32 = arith.constant 0 : i32
    %c0_i32_0 = arith.constant 0 : i32
    %c0_i32_1 = arith.constant 0 : i32
    %c0_i32_2 = arith.constant 0 : i32
    return %c0_i32, %c0_i32_0, %c0_i32_1 : i32, i32, i32
  }
  func.func @transform_2(%arg0: i32) -> (i32, i32, i32) {
    %c0_i32 = arith.constant 0 : i32
    %c0_i32_0 = arith.constant 0 : i32
    %c0_i32_1 = arith.constant 0 : i32
    return %arg0, %c0_i32, %c0_i32_0 : i32, i32, i32
  }
  func.func @transform_3(%arg0: i32) -> (i32, i32, i32) {
    %c0_i32 = arith.constant 0 : i32
    %c0_i32_0 = arith.constant 0 : i32
    %c0_i32_1 = arith.constant 0 : i32
    return %arg0, %c0_i32, %c0_i32_0 : i32, i32, i32
  }
  func.func @transform_4(%arg0: i32) -> (i32, i32, i32) {
    %c0_i32 = arith.constant 0 : i32
    %c0_i32_0 = arith.constant 0 : i32
    %c0_i32_1 = arith.constant 0 : i32
    return %arg0, %c0_i32, %c0_i32_0 : i32, i32, i32
  }
  func.func @transform_5(%arg0: i32) -> (i32, i32, i32) {
    %c0_i32 = arith.constant 0 : i32
    %c0_i32_0 = arith.constant 0 : i32
    %c0_i32_1 = arith.constant 0 : i32
    return %arg0, %c0_i32, %c0_i32_0 : i32, i32, i32
  }
  func.func @transform_6(%arg0: i32) -> (i32, i32, i32) {
    %c0_i32 = arith.constant 0 : i32
    %c0_i32_0 = arith.constant 0 : i32
    %c0_i32_1 = arith.constant 0 : i32
    return %arg0, %c0_i32, %c0_i32_0 : i32, i32, i32
  }
  func.func @transform_7(%arg0: i32) -> (i32, i32, i32) {
    %c0_i32 = arith.constant 0 : i32
    %c0_i32_0 = arith.constant 0 : i32
    %c0_i32_1 = arith.constant 0 : i32
    return %arg0, %c0_i32, %c0_i32_0 : i32, i32, i32
  }
  func.func @transform_8(%arg0: i32) -> (i32, i32, i32) {
    %c0_i32 = arith.constant 0 : i32
    %c0_i32_0 = arith.constant 0 : i32
    %c0_i32_1 = arith.constant 0 : i32
    return %arg0, %c0_i32, %c0_i32_0 : i32, i32, i32
  }
  func.func @transform_9(%arg0: i32) -> (i32, i32, i32) {
    %c0_i32 = arith.constant 0 : i32
    %c0_i32_0 = arith.constant 0 : i32
    %c0_i32_1 = arith.constant 0 : i32
    return %arg0, %c0_i32, %c0_i32_0 : i32, i32, i32
  }
  func.func @transform_10(%arg0: i32) -> (i32, i32, i32) {
    %c0_i32 = arith.constant 0 : i32
    %c0_i32_0 = arith.constant 0 : i32
    %c0_i32_1 = arith.constant 0 : i32
    return %arg0, %c0_i32, %c0_i32_0 : i32, i32, i32
  }
  func.func @transform_11(%arg0: i32) -> (i32, i32, i32) {
    %c0_i32 = arith.constant 0 : i32
    %c0_i32_0 = arith.constant 0 : i32
    %c0_i32_1 = arith.constant 0 : i32
    return %arg0, %c0_i32, %c0_i32_0 : i32, i32, i32
  }
  func.func @transform_12(%arg0: i32) -> (i32, i32, i32) {
    %c0_i32 = arith.constant 0 : i32
    %c0_i32_0 = arith.constant 0 : i32
    %c0_i32_1 = arith.constant 0 : i32
    return %arg0, %c0_i32, %c0_i32_0 : i32, i32, i32
  }
  func.func @transform_13(%arg0: i32) -> (i32, i32, i32) {
    %c0_i32 = arith.constant 0 : i32
    %c0_i32_0 = arith.constant 0 : i32
    %c0_i32_1 = arith.constant 0 : i32
    return %arg0, %c0_i32, %c0_i32_0 : i32, i32, i32
  }
  func.func @transform_14(%arg0: i32) -> (i32, i32, i32) {
    %c0_i32 = arith.constant 0 : i32
    %c0_i32_0 = arith.constant 0 : i32
    %c0_i32_1 = arith.constant 0 : i32
    return %arg0, %c0_i32, %c0_i32_0 : i32, i32, i32
  }
  func.func @transform_15(%arg0: i32) -> (i32, i32, i32) {
    %c0_i32 = arith.constant 0 : i32
    %c0_i32_0 = arith.constant 0 : i32
    %c0_i32_1 = arith.constant 0 : i32
    return %arg0, %c0_i32, %c0_i32_0 : i32, i32, i32
  }
  func.func @transform_16(%arg0: i32) -> (i32, i32, i32) {
    %c0_i32 = arith.constant 0 : i32
    %c0_i32_0 = arith.constant 0 : i32
    %c0_i32_1 = arith.constant 0 : i32
    return %arg0, %c0_i32, %c0_i32_0 : i32, i32, i32
  }
  func.func @transform_17(%arg0: i32) -> (i32, i32, i32) {
    %c0_i32 = arith.constant 0 : i32
    %c0_i32_0 = arith.constant 0 : i32
    %c0_i32_1 = arith.constant 0 : i32
    return %arg0, %c0_i32, %c0_i32_0 : i32, i32, i32
  }
  func.func @transform_18(%arg0: i32) -> (i32, i32, i32, i32) {
    %c0_i32 = arith.constant 0 : i32
    %c0_i32_0 = arith.constant 0 : i32
    %c0_i32_1 = arith.constant 0 : i32
    %c0_i32_2 = arith.constant 0 : i32
    return %arg0, %c0_i32, %c0_i32_0, %c0_i32_1 : i32, i32, i32, i32
  }
  func.func @transform_19(%arg0: i32) -> (i32, i32, i32, i32, i32) {
    %c0_i32 = arith.constant 0 : i32
    %c0_i32_0 = arith.constant 0 : i32
    %c0_i32_1 = arith.constant 0 : i32
    %c0_i32_2 = arith.constant 0 : i32
    %c0_i32_3 = arith.constant 0 : i32
    return %arg0, %c0_i32, %c0_i32_0, %c0_i32_1, %c0_i32_2 : i32, i32, i32, i32, i32
  }
}

</mosaic_0001>

<llo_original>
// kernel: tpu_custom_call.1
$region0: #{tpu_custom_call.1}
  #allocation0 [shape = 'u32[]', space=smem, size = 0x4, offset = 0x4, fixed_abs, tag = 'smem constant byte address 0x4 - core index']
  #allocation1 [shape = 'u32[144,128]{1,0:T(1,128)}', space=vmem, size = 0x12000, scoped, tag = 'internal scratch']
  #allocation2 [shape = 'f32[16,32]{1,0:T(8,128)}', space=vmem, size = 0x2000, scoped, tag = 'scratch operand']
  %s0 = inlined_call_operand.hbm [shape: f32[2,8,32], index: 0, kind: input, shape index: {}]
  %s1 = inlined_call_operand.hbm [shape: f32[2,1,8], index: 1, kind: input, shape index: {}]
  %s2 = inlined_call_operand.vmem [shape: f32[2,32,32], index: 2, kind: input, shape index: {}]
  %s3 = inlined_call_operand.vmem [shape: f32[2,1,32], index: 3, kind: input, shape index: {}]
  %s4 = inlined_call_operand.vmem [shape: f32[2,32,32], index: 4, kind: input, shape index: {}]
  %s5 = inlined_call_operand.vmem [shape: f32[2,1,32], index: 5, kind: input, shape index: {}]
  %s6 = inlined_call_operand.vmem [shape: f32[2,32,32], index: 6, kind: input, shape index: {}]
  %s7 = inlined_call_operand.vmem [shape: f32[2,1,32], index: 7, kind: input, shape index: {}]
  %s8 = inlined_call_operand.hbm [shape: f32[2,32,32], index: 8, kind: input, shape index: {}]
  %s9 = inlined_call_operand.vmem [shape: f32[2,1,32], index: 9, kind: input, shape index: {}]
  %s10 = inlined_call_operand.vmem [shape: f32[2,1,32], index: 10, kind: input, shape index: {}]
  %s11 = inlined_call_operand.vmem [shape: f32[2,1,32], index: 11, kind: input, shape index: {}]
  %s12 = inlined_call_operand.hbm [shape: f32[2,32,64], index: 12, kind: input, shape index: {}]
  %s13 = inlined_call_operand.vmem [shape: f32[2,1,64], index: 13, kind: input, shape index: {}]
  %s14 = inlined_call_operand.vmem [shape: f32[2,64,32], index: 14, kind: input, shape index: {}]
  %s15 = inlined_call_operand.vmem [shape: f32[2,1,32], index: 15, kind: input, shape index: {}]
  %s16 = inlined_call_operand.vmem [shape: f32[2,1,32], index: 16, kind: input, shape index: {}]
  %s17 = inlined_call_operand.vmem [shape: f32[2,1,32], index: 17, kind: input, shape index: {}]
  %s18 = inlined_call_operand.hbm [shape: f32[2,2,8,32], index: 18, kind: output, shape index: {0}]
  %s19 = inlined_call_operand.hbm [shape: f32[2,2,4,8,8], index: 19, kind: output, shape index: {1}]
  %20 = xla_tuple %s18, %s19
  %s21 = sld [smem:[#allocation0]]
  $region133: #{tpu_custom_call.1} parent=0
    _
  %s23 = ssub.s32 1, %s21
  %s24 = scalar_select 0, %s23, %s21
  $region1: #{tpu_custom_call.1} parent=0
    #allocation3 [shape = 'u8[8192]{0}', space=vmem, size = 0x2000, scoped, tag = 'input window, operand 0, single buffered']
    #allocation4 [shape = 's32[2]{0}', space=sflag, size = 0x8, scoped, tag = 'scoped memory for tpu_custom_call.1']
    #allocation5 [shape = 's32[2]{0}', space=sflag, size = 0x8, scoped, tag = 'scoped memory for tpu_custom_call.1']
    #allocation6 [shape = 'u8[1024]{0}', space=vmem, size = 0x400, scoped, tag = 'input window, operand 1, single buffered']
    #allocation7 [shape = 's32[1]{0}', space=sflag, size = 0x4, scoped, tag = 'scoped memory for tpu_custom_call.1']
    #allocation8 [shape = 'u8[32768]{0}', space=vmem, size = 0x8000, scoped, tag = 'input window, operand 8']
    #allocation9 [shape = 'u8[32768]{0}', space=vmem, size = 0x8000, scoped, tag = 'input window, operand 12']
    #allocation10 [shape = 'u8[16384]{0}', space=vmem, size = 0x4000, scoped, tag = 'output window, operand 0']
    #allocation11 [shape = 'u8[65536]{0}', space=vmem, size = 0x10000, scoped, tag = 'output window, operand 1']
    #allocation12 [shape = 's32[2]{0}', space=sflag, size = 0x8, scoped, tag = 'scoped memory for tpu_custom_call.1']
    %25 = vsyncpa [#allocation4], 0
    %26 = vsyncpa [#allocation7], 0
    %27 = vsyncpa [#allocation5], 0
    %s28 = scalar_lea.sflag [#allocation5], 1
    %29 = vsyncpa %s28, 0
    %30 = vsyncpa [#allocation12], 0
    %s31 = scalar_lea.sflag [#allocation12], 1
    %32 = vsyncpa %s31, 0
    loop: start=0, step=1, limit=4
    $region2: #{tpu_custom_call.1} parent=1 // loop_pre_header
      _
    $region3: #{tpu_custom_call.1} parent=1 // loop_header
      %s34 = sphi 0, %s38
      %p35 = scmp.ge.s32.totalorder %s34, 4
      %s42 = sphi 0, %s42
      %s44 = sphi 0, %s42
      %s45 = sphi 0, %s44
      %s59 = sphi 0, %s45
      %s63 = sphi 0, %s63
      %s65 = sphi 0, %s63
      %s66 = sphi 0, %s65
      %s80 = sphi 0, %s66
      %s86 = sphi 0, %s88
      %s89 = sphi 0, %s86
      %s90 = sphi 0, %s89
      %s106 = sphi 0, %s90
      %s112 = sphi 0, %s114
      %s115 = sphi 0, %s112
      %s116 = sphi 0, %s115
      %s132 = sphi 0, %s116
      %s138 = sphi 0, %s140
      %s141 = sphi 0, %s138
      %s142 = sphi 0, %s141
      %s158 = sphi 0, %s142
      %s164 = sphi 0, %s166
      %s167 = sphi 0, %s164
      %s168 = sphi 0, %s167
      %s184 = sphi 0, %s168
      %s190 = sphi 0, %s192
      %s193 = sphi 0, %s190
      %s194 = sphi 0, %s193
      %s210 = sphi 0, %s194
      %s216 = sphi 0, %s218
      %s219 = sphi 0, %s216
      %s220 = sphi 0, %s219
      %s236 = sphi 0, %s220
      %s242 = sphi 0, %s244
      %s245 = sphi 0, %s242
      %s246 = sphi 0, %s245
      %s262 = sphi 0, %s246
      %s268 = sphi 0, %s270
      %s271 = sphi 0, %s268
      %s272 = sphi 0, %s271
      %s288 = sphi 0, %s272
      %s294 = sphi 0, %s296
      %s297 = sphi 0, %s294
      %s298 = sphi 0, %s297
      %s314 = sphi 0, %s298
      %s320 = sphi 0, %s322
      %s323 = sphi 0, %s320
      %s324 = sphi 0, %s323
      %s340 = sphi 0, %s324
      %s346 = sphi 0, %s348
      %s349 = sphi 0, %s346
      %s350 = sphi 0, %s349
      %s366 = sphi 0, %s350
      %s372 = sphi 0, %s374
      %s375 = sphi 0, %s372
      %s376 = sphi 0, %s375
      %s392 = sphi 0, %s376
      %s398 = sphi 0, %s400
      %s401 = sphi 0, %s398
      %s402 = sphi 0, %s401
      %s418 = sphi 0, %s402
      %s424 = sphi 0, %s426
      %s427 = sphi 0, %s424
      %s428 = sphi 0, %s427
      %s444 = sphi 0, %s428
      %s450 = sphi 0, %s452
      %s453 = sphi 0, %s450
      %s454 = sphi 0, %s453
      %s470 = sphi 0, %s454
      %s476 = sphi 0, %s478
      %s479 = sphi 0, %s476
      %s480 = sphi 0, %s479
      %s496 = sphi 0, %s480
      %s502 = sphi 0, %s504
      %s505 = sphi 0, %s502
      %s506 = sphi 0, %s505
      %s522 = sphi 0, %s506
      %s528 = sphi 0, %s530
      %s531 = sphi 0, %s528
      %s532 = sphi 0, %s531
      %s548 = sphi 0, %s532
    $region4: #{tpu_custom_call.1} parent=1 // loop_header_branch
      %37 = sbr.rel (%p35) target = $region8
    $region5: #{tpu_custom_call.1} parent=1 // loop_body
      %s39 = ssub.s32 %s34, 1
      %s40 = ssub.s32 %s34, 2
      %s41 = sadd.s32 %s34, 1
      %s43 = sadd.s32 %s42, 1
      %p46 = scmp.eq.s32.totalorder %s34, 1
      %p47 = scmp.ne.s32.totalorder %s42, %s44
      %p48 = scmp.eq.s32.totalorder %s34, 0
      %p49 = por %p47, %p48
      %p50 = scmp.ne.s32.totalorder %s42, %s44
      %p51 = scmp.eq.s32.totalorder %s39, 1
      %p52 = por %p50, %p51
      %p53 = scmp.ne.s32.totalorder %s44, %s45
      %p54 = scmp.eq.s32.totalorder %s39, 0
      %p55 = por %p53, %p54
      %p56 = scmp.ne.s32.totalorder %s44, %s45
      %p57 = scmp.eq.s32.totalorder %s40, 1
      %p58 = por %p56, %p57
      %p60 = scmp.ne.s32.totalorder %s45, %s59
      %p61 = scmp.eq.s32.totalorder %s40, 0
      %p62 = por %p60, %p61
      %s64 = sadd.s32 %s63, 1
      %p67 = scmp.eq.s32.totalorder %s34, 1
      %p68 = scmp.ne.s32.totalorder %s63, %s65
      %p69 = scmp.eq.s32.totalorder %s34, 0
      %p70 = por %p68, %p69
      %p71 = scmp.ne.s32.totalorder %s63, %s65
      %p72 = scmp.eq.s32.totalorder %s39, 1
      %p73 = por %p71, %p72
      %p74 = scmp.ne.s32.totalorder %s65, %s66
      %p75 = scmp.eq.s32.totalorder %s39, 0
      %p76 = por %p74, %p75
      %p77 = scmp.ne.s32.totalorder %s65, %s66
      %p78 = scmp.eq.s32.totalorder %s40, 1
      %p79 = por %p77, %p78
      %p81 = scmp.ne.s32.totalorder %s66, %s80
      %p82 = scmp.eq.s32.totalorder %s40, 0
      %p83 = por %p81, %p82
      %s84 = ssub.s32 %s34, %s41
      %p85 = scmp.eq.s32.totalorder %s84, 0
      %s87 = sadd.s32 %s86, 1
      %s88 = scalar_select %p85, %s86, %s87
      %p91 = pneg %p85
      %p92 = scmp.eq.s32.totalorder %s34, 1
      %p93 = por %p91, %p92
      %p94 = scmp.ne.s32.totalorder %s86, %s89
      %p95 = scmp.eq.s32.totalorder %s34, 0
      %p96 = por %p94, %p95
      %p97 = scmp.ne.s32.totalorder %s86, %s89
      %p98 = scmp.eq.s32.totalorder %s39, 1
      %p99 = por %p97, %p98
      %p100 = scmp.ne.s32.totalorder %s89, %s90
      %p101 = scmp.eq.s32.totalorder %s39, 0
      %p102 = por %p100, %p101
      %p103 = scmp.ne.s32.totalorder %s89, %s90
      %p104 = scmp.eq.s32.totalorder %s40, 1
      %p105 = por %p103, %p104
      %p107 = scmp.ne.s32.totalorder %s90, %s106
      %p108 = scmp.eq.s32.totalorder %s40, 0
      %p109 = por %p107, %p108
      %s110 = ssub.s32 %s34, %s41
      %p111 = scmp.eq.s32.totalorder %s110, 0
      %s113 = sadd.s32 %s112, 1
      %s114 = scalar_select %p111, %s112, %s113
      %p117 = pneg %p111
      %p118 = scmp.eq.s32.totalorder %s34, 1
      %p119 = por %p117, %p118
      %p120 = scmp.ne.s32.totalorder %s112, %s115
      %p121 = scmp.eq.s32.totalorder %s34, 0
      %p122 = por %p120, %p121
      %p123 = scmp.ne.s32.totalorder %s112, %s115
      %p124 = scmp.eq.s32.totalorder %s39, 1
      %p125 = por %p123, %p124
      %p126 = scmp.ne.s32.totalorder %s115, %s116
      %p127 = scmp.eq.s32.totalorder %s39, 0
      %p128 = por %p126, %p127
      %p129 = scmp.ne.s32.totalorder %s115, %s116
      %p130 = scmp.eq.s32.totalorder %s40, 1
      %p131 = por %p129, %p130
      %p133 = scmp.ne.s32.totalorder %s116, %s132
      %p134 = scmp.eq.s32.totalorder %s40, 0
      %p135 = por %p133, %p134
      %s136 = ssub.s32 %s34, %s41
      %p137 = scmp.eq.s32.totalorder %s136, 0
      %s139 = sadd.s32 %s138, 1
      %s140 = scalar_select %p137, %s138, %s139
      %p143 = pneg %p137
      %p144 = scmp.eq.s32.totalorder %s34, 1
      %p145 = por %p143, %p144
      %p146 = scmp.ne.s32.totalorder %s138, %s141
      %p147 = scmp.eq.s32.totalorder %s34, 0
      %p148 = por %p146, %p147
      %p149 = scmp.ne.s32.totalorder %s138, %s141
      %p150 = scmp.eq.s32.totalorder %s39, 1
      %p151 = por %p149, %p150
      %p152 = scmp.ne.s32.totalorder %s141, %s142
      %p153 = scmp.eq.s32.totalorder %s39, 0
      %p154 = por %p152, %p153
      %p155 = scmp.ne.s32.totalorder %s141, %s142
      %p156 = scmp.eq.s32.totalorder %s40, 1
      %p157 = por %p155, %p156
      %p159 = scmp.ne.s32.totalorder %s142, %s158
      %p160 = scmp.eq.s32.totalorder %s40, 0
      %p161 = por %p159, %p160
      %s162 = ssub.s32 %s34, %s41
      %p163 = scmp.eq.s32.totalorder %s162, 0
      %s165 = sadd.s32 %s164, 1
      %s166 = scalar_select %p163, %s164, %s165
      %p169 = pneg %p163
      %p170 = scmp.eq.s32.totalorder %s34, 1
      %p171 = por %p169, %p170
      %p172 = scmp.ne.s32.totalorder %s164, %s167
      %p173 = scmp.eq.s32.totalorder %s34, 0
      %p174 = por %p172, %p173
      %p175 = scmp.ne.s32.totalorder %s164, %s167
      %p176 = scmp.eq.s32.totalorder %s39, 1
      %p177 = por %p175, %p176
      %p178 = scmp.ne.s32.totalorder %s167, %s168
      %p179 = scmp.eq.s32.totalorder %s39, 0
      %p180 = por %p178, %p179
      %p181 = scmp.ne.s32.totalorder %s167, %s168
      %p182 = scmp.eq.s32.totalorder %s40, 1
      %p183 = por %p181, %p182
      %p185 = scmp.ne.s32.totalorder %s168, %s184
      %p186 = scmp.eq.s32.totalorder %s40, 0
      %p187 = por %p185, %p186
      %s188 = ssub.s32 %s34, %s41
      %p189 = scmp.eq.s32.totalorder %s188, 0
      %s191 = sadd.s32 %s190, 1
      %s192 = scalar_select %p189, %s190, %s191
      %p195 = pneg %p189
      %p196 = scmp.eq.s32.totalorder %s34, 1
      %p197 = por %p195, %p196
      %p198 = scmp.ne.s32.totalorder %s190, %s193
      %p199 = scmp.eq.s32.totalorder %s34, 0
      %p200 = por %p198, %p199
      %p201 = scmp.ne.s32.totalorder %s190, %s193
      %p202 = scmp.eq.s32.totalorder %s39, 1
      %p203 = por %p201, %p202
      %p204 = scmp.ne.s32.totalorder %s193, %s194
      %p205 = scmp.eq.s32.totalorder %s39, 0
      %p206 = por %p204, %p205
      %p207 = scmp.ne.s32.totalorder %s193, %s194
      %p208 = scmp.eq.s32.totalorder %s40, 1
      %p209 = por %p207, %p208
      %p211 = scmp.ne.s32.totalorder %s194, %s210
      %p212 = scmp.eq.s32.totalorder %s40, 0
      %p213 = por %p211, %p212
      %s214 = ssub.s32 %s34, %s41
      %p215 = scmp.eq.s32.totalorder %s214, 0
      %s217 = sadd.s32 %s216, 1
      %s218 = scalar_select %p215, %s216, %s217
      %p221 = pneg %p215
      %p222 = scmp.eq.s32.totalorder %s34, 1
      %p223 = por %p221, %p222
      %p224 = scmp.ne.s32.totalorder %s216, %s219
      %p225 = scmp.eq.s32.totalorder %s34, 0
      %p226 = por %p224, %p225
      %p227 = scmp.ne.s32.totalorder %s216, %s219
      %p228 = scmp.eq.s32.totalorder %s39, 1
      %p229 = por %p227, %p228
      %p230 = scmp.ne.s32.totalorder %s219, %s220
      %p231 = scmp.eq.s32.totalorder %s39, 0
      %p232 = por %p230, %p231
      %p233 = scmp.ne.s32.totalorder %s219, %s220
      %p234 = scmp.eq.s32.totalorder %s40, 1
      %p235 = por %p233, %p234
      %p237 = scmp.ne.s32.totalorder %s220, %s236
      %p238 = scmp.eq.s32.totalorder %s40, 0
      %p239 = por %p237, %p238
      %s240 = ssub.s32 %s34, %s41
      %p241 = scmp.eq.s32.totalorder %s240, 0
      %s243 = sadd.s32 %s242, 1
      %s244 = scalar_select %p241, %s242, %s243
      %p247 = pneg %p241
      %p248 = scmp.eq.s32.totalorder %s34, 1
      %p249 = por %p247, %p248
      %p250 = scmp.ne.s32.totalorder %s242, %s245
      %p251 = scmp.eq.s32.totalorder %s34, 0
      %p252 = por %p250, %p251
      %p253 = scmp.ne.s32.totalorder %s242, %s245
      %p254 = scmp.eq.s32.totalorder %s39, 1
      %p255 = por %p253, %p254
      %p256 = scmp.ne.s32.totalorder %s245, %s246
      %p257 = scmp.eq.s32.totalorder %s39, 0
      %p258 = por %p256, %p257
      %p259 = scmp.ne.s32.totalorder %s245, %s246
      %p260 = scmp.eq.s32.totalorder %s40, 1
      %p261 = por %p259, %p260
      %p263 = scmp.ne.s32.totalorder %s246, %s262
      %p264 = scmp.eq.s32.totalorder %s40, 0
      %p265 = por %p263, %p264
      %s266 = ssub.s32 %s34, %s41
      %p267 = scmp.eq.s32.totalorder %s266, 0
      %s269 = sadd.s32 %s268, 1
      %s270 = scalar_select %p267, %s268, %s269
      %p273 = pneg %p267
      %p274 = scmp.eq.s32.totalorder %s34, 1
      %p275 = por %p273, %p274
      %p276 = scmp.ne.s32.totalorder %s268, %s271
      %p277 = scmp.eq.s32.totalorder %s34, 0
      %p278 = por %p276, %p277
      %p279 = scmp.ne.s32.totalorder %s268, %s271
      %p280 = scmp.eq.s32.totalorder %s39, 1
      %p281 = por %p279, %p280
      %p282 = scmp.ne.s32.totalorder %s271, %s272
      %p283 = scmp.eq.s32.totalorder %s39, 0
      %p284 = por %p282, %p283
      %p285 = scmp.ne.s32.totalorder %s271, %s272
      %p286 = scmp.eq.s32.totalorder %s40, 1
      %p287 = por %p285, %p286
      %p289 = scmp.ne.s32.totalorder %s272, %s288
      %p290 = scmp.eq.s32.totalorder %s40, 0
      %p291 = por %p289, %p290
      %s292 = ssub.s32 %s34, %s41
      %p293 = scmp.eq.s32.totalorder %s292, 0
      %s295 = sadd.s32 %s294, 1
      %s296 = scalar_select %p293, %s294, %s295
      %p299 = pneg %p293
      %p300 = scmp.eq.s32.totalorder %s34, 1
      %p301 = por %p299, %p300
      %p302 = scmp.ne.s32.totalorder %s294, %s297
      %p303 = scmp.eq.s32.totalorder %s34, 0
      %p304 = por %p302, %p303
      %p305 = scmp.ne.s32.totalorder %s294, %s297
      %p306 = scmp.eq.s32.totalorder %s39, 1
      %p307 = por %p305, %p306
      %p308 = scmp.ne.s32.totalorder %s297, %s298
      %p309 = scmp.eq.s32.totalorder %s39, 0
      %p310 = por %p308, %p309
      %p311 = scmp.ne.s32.totalorder %s297, %s298
      %p312 = scmp.eq.s32.totalorder %s40, 1
      %p313 = por %p311, %p312
      %p315 = scmp.ne.s32.totalorder %s298, %s314
      %p316 = scmp.eq.s32.totalorder %s40, 0
      %p317 = por %p315, %p316
      %s318 = ssub.s32 %s34, %s41
      %p319 = scmp.eq.s32.totalorder %s318, 0
      %s321 = sadd.s32 %s320, 1
      %s322 = scalar_select %p319, %s320, %s321
      %p325 = pneg %p319
      %p326 = scmp.eq.s32.totalorder %s34, 1
      %p327 = por %p325, %p326
      %p328 = scmp.ne.s32.totalorder %s320, %s323
      %p329 = scmp.eq.s32.totalorder %s34, 0
      %p330 = por %p328, %p329
      %p331 = scmp.ne.s32.totalorder %s320, %s323
      %p332 = scmp.eq.s32.totalorder %s39, 1
      %p333 = por %p331, %p332
      %p334 = scmp.ne.s32.totalorder %s323, %s324
      %p335 = scmp.eq.s32.totalorder %s39, 0
      %p336 = por %p334, %p335
      %p337 = scmp.ne.s32.totalorder %s323, %s324
      %p338 = scmp.eq.s32.totalorder %s40, 1
      %p339 = por %p337, %p338
      %p341 = scmp.ne.s32.totalorder %s324, %s340
      %p342 = scmp.eq.s32.totalorder %s40, 0
      %p343 = por %p341, %p342
      %s344 = ssub.s32 %s34, %s41
      %p345 = scmp.eq.s32.totalorder %s344, 0
      %s347 = sadd.s32 %s346, 1
      %s348 = scalar_select %p345, %s346, %s347
      %p351 = pneg %p345
      %p352 = scmp.eq.s32.totalorder %s34, 1
      %p353 = por %p351, %p352
      %p354 = scmp.ne.s32.totalorder %s346, %s349
      %p355 = scmp.eq.s32.totalorder %s34, 0
      %p356 = por %p354, %p355
      %p357 = scmp.ne.s32.totalorder %s346, %s349
      %p358 = scmp.eq.s32.totalorder %s39, 1
      %p359 = por %p357, %p358
      %p360 = scmp.ne.s32.totalorder %s349, %s350
      %p361 = scmp.eq.s32.totalorder %s39, 0
      %p362 = por %p360, %p361
      %p363 = scmp.ne.s32.totalorder %s349, %s350
      %p364 = scmp.eq.s32.totalorder %s40, 1
      %p365 = por %p363, %p364
      %p367 = scmp.ne.s32.totalorder %s350, %s366
      %p368 = scmp.eq.s32.totalorder %s40, 0
      %p369 = por %p367, %p368
      %s370 = ssub.s32 %s34, %s41
      %p371 = scmp.eq.s32.totalorder %s370, 0
      %s373 = sadd.s32 %s372, 1
      %s374 = scalar_select %p371, %s372, %s373
      %p377 = pneg %p371
      %p378 = scmp.eq.s32.totalorder %s34, 1
      %p379 = por %p377, %p378
      %p380 = scmp.ne.s32.totalorder %s372, %s375
      %p381 = scmp.eq.s32.totalorder %s34, 0
      %p382 = por %p380, %p381
      %p383 = scmp.ne.s32.totalorder %s372, %s375
      %p384 = scmp.eq.s32.totalorder %s39, 1
      %p385 = por %p383, %p384
      %p386 = scmp.ne.s32.totalorder %s375, %s376
      %p387 = scmp.eq.s32.totalorder %s39, 0
      %p388 = por %p386, %p387
      %p389 = scmp.ne.s32.totalorder %s375, %s376
      %p390 = scmp.eq.s32.totalorder %s40, 1
      %p391 = por %p389, %p390
      %p393 = scmp.ne.s32.totalorder %s376, %s392
      %p394 = scmp.eq.s32.totalorder %s40, 0
      %p395 = por %p393, %p394
      %s396 = ssub.s32 %s34, %s41
      %p397 = scmp.eq.s32.totalorder %s396, 0
      %s399 = sadd.s32 %s398, 1
      %s400 = scalar_select %p397, %s398, %s399
      %p403 = pneg %p397
      %p404 = scmp.eq.s32.totalorder %s34, 1
      %p405 = por %p403, %p404
      %p406 = scmp.ne.s32.totalorder %s398, %s401
      %p407 = scmp.eq.s32.totalorder %s34, 0
      %p408 = por %p406, %p407
      %p409 = scmp.ne.s32.totalorder %s398, %s401
      %p410 = scmp.eq.s32.totalorder %s39, 1
      %p411 = por %p409, %p410
      %p412 = scmp.ne.s32.totalorder %s401, %s402
      %p413 = scmp.eq.s32.totalorder %s39, 0
      %p414 = por %p412, %p413
      %p415 = scmp.ne.s32.totalorder %s401, %s402
      %p416 = scmp.eq.s32.totalorder %s40, 1
      %p417 = por %p415, %p416
      %p419 = scmp.ne.s32.totalorder %s402, %s418
      %p420 = scmp.eq.s32.totalorder %s40, 0
      %p421 = por %p419, %p420
      %s422 = ssub.s32 %s34, %s41
      %p423 = scmp.eq.s32.totalorder %s422, 0
      %s425 = sadd.s32 %s424, 1
      %s426 = scalar_select %p423, %s424, %s425
      %p429 = pneg %p423
      %p430 = scmp.eq.s32.totalorder %s34, 1
      %p431 = por %p429, %p430
      %p432 = scmp.ne.s32.totalorder %s424, %s427
      %p433 = scmp.eq.s32.totalorder %s34, 0
      %p434 = por %p432, %p433
      %p435 = scmp.ne.s32.totalorder %s424, %s427
      %p436 = scmp.eq.s32.totalorder %s39, 1
      %p437 = por %p435, %p436
      %p438 = scmp.ne.s32.totalorder %s427, %s428
      %p439 = scmp.eq.s32.totalorder %s39, 0
      %p440 = por %p438, %p439
      %p441 = scmp.ne.s32.totalorder %s427, %s428
      %p442 = scmp.eq.s32.totalorder %s40, 1
      %p443 = por %p441, %p442
      %p445 = scmp.ne.s32.totalorder %s428, %s444
      %p446 = scmp.eq.s32.totalorder %s40, 0
      %p447 = por %p445, %p446
      %s448 = ssub.s32 %s34, %s41
      %p449 = scmp.eq.s32.totalorder %s448, 0
      %s451 = sadd.s32 %s450, 1
      %s452 = scalar_select %p449, %s450, %s451
      %p455 = pneg %p449
      %p456 = scmp.eq.s32.totalorder %s34, 1
      %p457 = por %p455, %p456
      %p458 = scmp.ne.s32.totalorder %s450, %s453
      %p459 = scmp.eq.s32.totalorder %s34, 0
      %p460 = por %p458, %p459
      %p461 = scmp.ne.s32.totalorder %s450, %s453
      %p462 = scmp.eq.s32.totalorder %s39, 1
      %p463 = por %p461, %p462
      %p464 = scmp.ne.s32.totalorder %s453, %s454
      %p465 = scmp.eq.s32.totalorder %s39, 0
      %p466 = por %p464, %p465
      %p467 = scmp.ne.s32.totalorder %s453, %s454
      %p468 = scmp.eq.s32.totalorder %s40, 1
      %p469 = por %p467, %p468
      %p471 = scmp.ne.s32.totalorder %s454, %s470
      %p472 = scmp.eq.s32.totalorder %s40, 0
      %p473 = por %p471, %p472
      %s474 = ssub.s32 %s34, %s41
      %p475 = scmp.eq.s32.totalorder %s474, 0
      %s477 = sadd.s32 %s476, 1
      %s478 = scalar_select %p475, %s476, %s477
      %p481 = pneg %p475
      %p482 = scmp.eq.s32.totalorder %s34, 1
      %p483 = por %p481, %p482
      %p484 = scmp.ne.s32.totalorder %s476, %s479
      %p485 = scmp.eq.s32.totalorder %s34, 0
      %p486 = por %p484, %p485
      %p487 = scmp.ne.s32.totalorder %s476, %s479
      %p488 = scmp.eq.s32.totalorder %s39, 1
      %p489 = por %p487, %p488
      %p490 = scmp.ne.s32.totalorder %s479, %s480
      %p491 = scmp.eq.s32.totalorder %s39, 0
      %p492 = por %p490, %p491
      %p493 = scmp.ne.s32.totalorder %s479, %s480
      %p494 = scmp.eq.s32.totalorder %s40, 1
      %p495 = por %p493, %p494
      %p497 = scmp.ne.s32.totalorder %s480, %s496
      %p498 = scmp.eq.s32.totalorder %s40, 0
      %p499 = por %p497, %p498
      %s500 = ssub.s32 %s34, %s41
      %p501 = scmp.eq.s32.totalorder %s500, 0
      %s503 = sadd.s32 %s502, 1
      %s504 = scalar_select %p501, %s502, %s503
      %p507 = pneg %p501
      %p508 = scmp.eq.s32.totalorder %s34, 1
      %p509 = por %p507, %p508
      %p510 = scmp.ne.s32.totalorder %s502, %s505
      %p511 = scmp.eq.s32.totalorder %s34, 0
      %p512 = por %p510, %p511
      %p513 = scmp.ne.s32.totalorder %s502, %s505
      %p514 = scmp.eq.s32.totalorder %s39, 1
      %p515 = por %p513, %p514
      %p516 = scmp.ne.s32.totalorder %s505, %s506
      %p517 = scmp.eq.s32.totalorder %s39, 0
      %p518 = por %p516, %p517
      %p519 = scmp.ne.s32.totalorder %s505, %s506
      %p520 = scmp.eq.s32.totalorder %s40, 1
      %p521 = por %p519, %p520
      %p523 = scmp.ne.s32.totalorder %s506, %s522
      %p524 = scmp.eq.s32.totalorder %s40, 0
      %p525 = por %p523, %p524
      %s526 = ssub.s32 %s34, %s41
      %p527 = scmp.eq.s32.totalorder %s526, 0
      %s529 = sadd.s32 %s528, 1
      %s530 = scalar_select %p527, %s528, %s529
      %p533 = pneg %p527
      %p534 = scmp.eq.s32.totalorder %s34, 1
      %p535 = por %p533, %p534
      %p536 = scmp.ne.s32.totalorder %s528, %s531
      %p537 = scmp.eq.s32.totalorder %s34, 0
      %p538 = por %p536, %p537
      %p539 = scmp.ne.s32.totalorder %s528, %s531
      %p540 = scmp.eq.s32.totalorder %s39, 1
      %p541 = por %p539, %p540
      %p542 = scmp.ne.s32.totalorder %s531, %s532
      %p543 = scmp.eq.s32.totalorder %s39, 0
      %p544 = por %p542, %p543
      %p545 = scmp.ne.s32.totalorder %s531, %s532
      %p546 = scmp.eq.s32.totalorder %s40, 1
      %p547 = por %p545, %p546
      %p549 = scmp.ne.s32.totalorder %s532, %s548
      %p550 = scmp.eq.s32.totalorder %s40, 0
      %p551 = por %p549, %p550
      %p552 = scmp.le.s32.totalorder 1, %s34
      %p553 = scmp.lt.s32.totalorder %s34, 3
      %p554 = pnand %p552, %p553
      %p555 = pneg %p554
      // Predicated region
      $region9: #{tpu_custom_call.1} parent=5 // pred_check
        _
      $region10: #{tpu_custom_call.1} parent=5 // pred_check_branch
        %557 = sbr.rel (%p554) target = $region12
      $region11: #{tpu_custom_call.1} parent=5 // pred_region
        %s558 = ssub.s32 %s34, 1
        // Predicated region
        $region13: #{tpu_custom_call.1} parent=11 // pred_check
          %p559 = pneg %p55
        $region14: #{tpu_custom_call.1} parent=11 // pred_check_branch
          %561 = sbr.rel (%p559) target = $region16
        $region15: #{tpu_custom_call.1} parent=11 // pred_region
          %s563 = ssub.s32 256, 256
          %564 = vsyncadd [#allocation4], %s563
          %s565 = sshll.u32 [#allocation3], 4
          %s566 = int_to_ptr.vmem [resolvable:$true] %s565
          %571 = dma.hbm_to_vmem [thread:$0]  %s0, 256, %s566, [#allocation4], 128, 128, 8
        $region16: #{tpu_custom_call.1} parent=11 // pred_fallthru
          _
        // Predicated region
        $region17: #{tpu_custom_call.1} parent=11 // pred_check
          %p572 = pneg %p76
        $region18: #{tpu_custom_call.1} parent=11 // pred_check_branch
          %574 = sbr.rel (%p572) target = $region20
        $region19: #{tpu_custom_call.1} parent=11 // pred_region
          %s576 = ssub.s32 32, 32
          %577 = vsyncadd [#allocation7], %s576
          %s578 = sshll.u32 [#allocation6], 4
          %s579 = int_to_ptr.vmem [resolvable:$true] %s578
          %584 = dma.hbm_to_vmem [thread:$0]  %s1, 32, %s579, [#allocation7], 16, 16, 1
        $region20: #{tpu_custom_call.1} parent=11 // pred_fallthru
          _
      $region12: #{tpu_custom_call.1} parent=5 // pred_fallthru
        _
      %p585 = scmp.lt.s32.totalorder %s34, 2
      // Predicated region
      $region21: #{tpu_custom_call.1} parent=5 // pred_check
        %p586 = pneg %p585
      $region22: #{tpu_custom_call.1} parent=5 // pred_check_branch
        %588 = sbr.rel (%p586) target = $region24
      $region23: #{tpu_custom_call.1} parent=5 // pred_region
        // Predicated region
        $region25: #{tpu_custom_call.1} parent=23 // pred_check
          %p589 = pneg %p96
        $region26: #{tpu_custom_call.1} parent=23 // pred_check_branch
          %591 = sbr.rel (%p589) target = $region28
        $region27: #{tpu_custom_call.1} parent=23 // pred_region
          %p592 = scmp.lt.s32.totalorder %s34, 1
          %s593 = scalar_select %p592, %s34, 1
          %s594 = smul.addr %s593, 4
          %s595 = smul.addr %s594, 8
          %s596 = scalar_lea.vmem %s2, %s595
        $region28: #{tpu_custom_call.1} parent=23 // pred_fallthru
          _
        // Predicated region
        $region29: #{tpu_custom_call.1} parent=23 // pred_check
          %p597 = pneg %p122
        $region30: #{tpu_custom_call.1} parent=23 // pred_check_branch
          %599 = sbr.rel (%p597) target = $region32
        $region31: #{tpu_custom_call.1} parent=23 // pred_region
          %p600 = scmp.lt.s32.totalorder %s34, 1
          %s601 = scalar_select %p600, %s34, 1
          %s602 = scalar_lea.vmem %s3, %s601
        $region32: #{tpu_custom_call.1} parent=23 // pred_fallthru
          _
        // Predicated region
        $region33: #{tpu_custom_call.1} parent=23 // pred_check
          %p603 = pneg %p148
        $region34: #{tpu_custom_call.1} parent=23 // pred_check_branch
          %605 = sbr.rel (%p603) target = $region36
        $region35: #{tpu_custom_call.1} parent=23 // pred_region
          %p606 = scmp.lt.s32.totalorder %s34, 1
          %s607 = scalar_select %p606, %s34, 1
          %s608 = smul.addr %s607, 4
          %s609 = smul.addr %s608, 8
          %s610 = scalar_lea.vmem %s4, %s609
        $region36: #{tpu_custom_call.1} parent=23 // pred_fallthru
          _
        // Predicated region
        $region37: #{tpu_custom_call.1} parent=23 // pred_check
          %p611 = pneg %p174
        $region38: #{tpu_custom_call.1} parent=23 // pred_check_branch
          %613 = sbr.rel (%p611) target = $region40
        $region39: #{tpu_custom_call.1} parent=23 // pred_region
          %p614 = scmp.lt.s32.totalorder %s34, 1
          %s615 = scalar_select %p614, %s34, 1
          %s616 = scalar_lea.vmem %s5, %s615
        $region40: #{tpu_custom_call.1} parent=23 // pred_fallthru
          _
        // Predicated region
        $region41: #{tpu_custom_call.1} parent=23 // pred_check
          %p617 = pneg %p200
        $region42: #{tpu_custom_call.1} parent=23 // pred_check_branch
          %619 = sbr.rel (%p617) target = $region44
        $region43: #{tpu_custom_call.1} parent=23 // pred_region
          %p620 = scmp.lt.s32.totalorder %s34, 1
          %s621 = scalar_select %p620, %s34, 1
          %s622 = smul.addr %s621, 4
          %s623 = smul.addr %s622, 8
          %s624 = scalar_lea.vmem %s6, %s623
        $region44: #{tpu_custom_call.1} parent=23 // pred_fallthru
          _
        // Predicated region
        $region45: #{tpu_custom_call.1} parent=23 // pred_check
          %p625 = pneg %p226
        $region46: #{tpu_custom_call.1} parent=23 // pred_check_branch
          %627 = sbr.rel (%p625) target = $region48
        $region47: #{tpu_custom_call.1} parent=23 // pred_region
          %p628 = scmp.lt.s32.totalorder %s34, 1
          %s629 = scalar_select %p628, %s34, 1
          %s630 = scalar_lea.vmem %s7, %s629
        $region48: #{tpu_custom_call.1} parent=23 // pred_fallthru
          _
        // Predicated region
        $region49: #{tpu_custom_call.1} parent=23 // pred_check
          %p631 = pneg %p252
        $region50: #{tpu_custom_call.1} parent=23 // pred_check_branch
          %633 = sbr.rel (%p631) target = $region52
        $region51: #{tpu_custom_call.1} parent=23 // pred_region
          %s634 = sand.u32 %s34, 1
          %s635 = scalar_lea.sflag [#allocation4], %s634
          %s636 = sand.u32 %s242, 1
          %s637 = smul.addr %s636, 32
          %s638 = scalar_lea.vmem [#allocation8], %s637
          %s640 = ssub.s32 512, 512
          %641 = vsyncadd %s635, %s640
          %s642 = smul.addr %s34, 4
          %s643 = smul.addr %s642, 128
          %s644 = scalar_lea.hbm %s8, %s643
          %s645 = sshll.u32 %s638, 4
          %s646 = int_to_ptr.vmem [resolvable:$true] %s645
          %651 = dma.hbm_to_vmem [thread:$0]  %s644, 512, %s646, %s635, 128, 128, 8
        $region52: #{tpu_custom_call.1} parent=23 // pred_fallthru
          _
        // Predicated region
        $region53: #{tpu_custom_call.1} parent=23 // pred_check
          %p652 = pneg %p278
        $region54: #{tpu_custom_call.1} parent=23 // pred_check_branch
          %654 = sbr.rel (%p652) target = $region56
        $region55: #{tpu_custom_call.1} parent=23 // pred_region
          %p655 = scmp.lt.s32.totalorder %s34, 1
          %s656 = scalar_select %p655, %s34, 1
          %s657 = scalar_lea.vmem %s9, %s656
        $region56: #{tpu_custom_call.1} parent=23 // pred_fallthru
          _
        // Predicated region
        $region57: #{tpu_custom_call.1} parent=23 // pred_check
          %p658 = pneg %p304
        $region58: #{tpu_custom_call.1} parent=23 // pred_check_branch
          %660 = sbr.rel (%p658) target = $region60
        $region59: #{tpu_custom_call.1} parent=23 // pred_region
          %p661 = scmp.lt.s32.totalorder %s34, 1
          %s662 = scalar_select %p661, %s34, 1
          %s663 = scalar_lea.vmem %s10, %s662
        $region60: #{tpu_custom_call.1} parent=23 // pred_fallthru
          _
        // Predicated region
        $region61: #{tpu_custom_call.1} parent=23 // pred_check
          %p664 = pneg %p330
        $region62: #{tpu_custom_call.1} parent=23 // pred_check_branch
          %666 = sbr.rel (%p664) target = $region64
        $region63: #{tpu_custom_call.1} parent=23 // pred_region
          %p667 = scmp.lt.s32.totalorder %s34, 1
          %s668 = scalar_select %p667, %s34, 1
          %s669 = scalar_lea.vmem %s11, %s668
        $region64: #{tpu_custom_call.1} parent=23 // pred_fallthru
          _
        // Predicated region
        $region65: #{tpu_custom_call.1} parent=23 // pred_check
          %p670 = pneg %p356
        $region66: #{tpu_custom_call.1} parent=23 // pred_check_branch
          %672 = sbr.rel (%p670) target = $region68
        $region67: #{tpu_custom_call.1} parent=23 // pred_region
          %s673 = sand.u32 %s34, 1
          %s674 = scalar_lea.sflag [#allocation4], %s673
          %s675 = sand.u32 %s346, 1
          %s676 = smul.addr %s675, 32
          %s677 = scalar_lea.vmem [#allocation9], %s676
          %s679 = ssub.s32 512, 512
          %680 = vsyncadd %s674, %s679
          %s681 = smul.addr %s34, 4
          %s682 = smul.addr %s681, 128
          %s683 = scalar_lea.hbm %s12, %s682
          %s684 = sshll.u32 %s677, 4
          %s685 = int_to_ptr.vmem [resolvable:$true] %s684
          %690 = dma.hbm_to_vmem [thread:$0]  %s683, 512, %s685, %s674, 128, 128, 8
        $region68: #{tpu_custom_call.1} parent=23 // pred_fallthru
          _
        // Predicated region
        $region69: #{tpu_custom_call.1} parent=23 // pred_check
          %p691 = pneg %p382
        $region70: #{tpu_custom_call.1} parent=23 // pred_check_branch
          %693 = sbr.rel (%p691) target = $region72
        $region71: #{tpu_custom_call.1} parent=23 // pred_region
          %p694 = scmp.lt.s32.totalorder %s34, 1
          %s695 = scalar_select %p694, %s34, 1
          %s696 = scalar_lea.vmem %s13, %s695
        $region72: #{tpu_custom_call.1} parent=23 // pred_fallthru
          _
        // Predicated region
        $region73: #{tpu_custom_call.1} parent=23 // pred_check
          %p697 = pneg %p408
        $region74: #{tpu_custom_call.1} parent=23 // pred_check_branch
          %699 = sbr.rel (%p697) target = $region76
        $region75: #{tpu_custom_call.1} parent=23 // pred_region
          %p700 = scmp.lt.s32.totalorder %s34, 1
          %s701 = scalar_select %p700, %s34, 1
          %s702 = smul.addr %s701, 8
          %s703 = smul.addr %s702, 8
          %s704 = scalar_lea.vmem %s14, %s703
        $region76: #{tpu_custom_call.1} parent=23 // pred_fallthru
          _
        // Predicated region
        $region77: #{tpu_custom_call.1} parent=23 // pred_check
          %p705 = pneg %p434
        $region78: #{tpu_custom_call.1} parent=23 // pred_check_branch
          %707 = sbr.rel (%p705) target = $region80
        $region79: #{tpu_custom_call.1} parent=23 // pred_region
          %p708 = scmp.lt.s32.totalorder %s34, 1
          %s709 = scalar_select %p708, %s34, 1
          %s710 = scalar_lea.vmem %s15, %s709
        $region80: #{tpu_custom_call.1} parent=23 // pred_fallthru
          _
        // Predicated region
        $region81: #{tpu_custom_call.1} parent=23 // pred_check
          %p711 = pneg %p460
        $region82: #{tpu_custom_call.1} parent=23 // pred_check_branch
          %713 = sbr.rel (%p711) target = $region84
        $region83: #{tpu_custom_call.1} parent=23 // pred_region
          %p714 = scmp.lt.s32.totalorder %s34, 1
          %s715 = scalar_select %p714, %s34, 1
          %s716 = scalar_lea.vmem %s16, %s715
        $region84: #{tpu_custom_call.1} parent=23 // pred_fallthru
          _
        // Predicated region
        $region85: #{tpu_custom_call.1} parent=23 // pred_check
          %p717 = pneg %p486
        $region86: #{tpu_custom_call.1} parent=23 // pred_check_branch
          %719 = sbr.rel (%p717) target = $region88
        $region87: #{tpu_custom_call.1} parent=23 // pred_region
          %p720 = scmp.lt.s32.totalorder %s34, 1
          %s721 = scalar_select %p720, %s34, 1
          %s722 = scalar_lea.vmem %s17, %s721
        $region88: #{tpu_custom_call.1} parent=23 // pred_fallthru
          _
      $region24: #{tpu_custom_call.1} parent=5 // pred_fallthru
        _
      %p723 = scmp.le.s32.totalorder 1, %s34
      %p724 = scmp.lt.s32.totalorder %s34, 3
      %p725 = pnand %p723, %p724
      %p726 = pneg %p725
      // Predicated region
      $region89: #{tpu_custom_call.1} parent=5 // pred_check
        _
      $region90: #{tpu_custom_call.1} parent=5 // pred_check_branch
        %728 = sbr.rel (%p725) target = $region92
      $region91: #{tpu_custom_call.1} parent=5 // pred_region
        %s729 = ssub.s32 %s34, 1
        // Predicated region
        $region93: #{tpu_custom_call.1} parent=91 // pred_check
          %p730 = pneg %p55
        $region94: #{tpu_custom_call.1} parent=91 // pred_check_branch
          %732 = sbr.rel (%p730) target = $region96
        $region95: #{tpu_custom_call.1} parent=91 // pred_region
          %733 = dma.done [#allocation4], 256
        $region96: #{tpu_custom_call.1} parent=91 // pred_fallthru
          _
        // Predicated region
        $region97: #{tpu_custom_call.1} parent=91 // pred_check
          %p734 = pneg %p76
        $region98: #{tpu_custom_call.1} parent=91 // pred_check_branch
          %736 = sbr.rel (%p734) target = $region100
        $region99: #{tpu_custom_call.1} parent=91 // pred_region
          %737 = dma.done [#allocation7], 32
        $region100: #{tpu_custom_call.1} parent=91 // pred_fallthru
          _
        %s738 = sand.u32 %s39, 1
        %s739 = scalar_lea.sflag [#allocation4], %s738
        %s740 = sand.u32 %s245, 1
        %s741 = smul.addr %s740, 32
        %s742 = scalar_lea.vmem [#allocation8], %s741
        // Predicated region
        $region101: #{tpu_custom_call.1} parent=91 // pred_check
          %p743 = pneg %p258
        $region102: #{tpu_custom_call.1} parent=91 // pred_check_branch
          %745 = sbr.rel (%p743) target = $region104
        $region103: #{tpu_custom_call.1} parent=91 // pred_region
          %746 = dma.done %s739, 512
        $region104: #{tpu_custom_call.1} parent=91 // pred_fallthru
          _
        %s747 = sand.u32 %s39, 1
        %s748 = scalar_lea.sflag [#allocation4], %s747
        %s749 = sand.u32 %s349, 1
        %s750 = smul.addr %s749, 32
        %s751 = scalar_lea.vmem [#allocation9], %s750
        // Predicated region
        $region105: #{tpu_custom_call.1} parent=91 // pred_check
          %p752 = pneg %p362
        $region106: #{tpu_custom_call.1} parent=91 // pred_check_branch
          %754 = sbr.rel (%p752) target = $region108
        $region107: #{tpu_custom_call.1} parent=91 // pred_region
          %755 = dma.done %s748, 512
        $region108: #{tpu_custom_call.1} parent=91 // pred_fallthru
          _
        %p756 = pneg %p55
        %p757 = pneg %p52
        %p758 = pneg %p76
        %p759 = pneg %p73
        %p760 = scmp.lt.s32.totalorder %s39, 1
        %s761 = scalar_select %p760, %s39, 1
        %s762 = smul.addr %s761, 4
        %s763 = smul.addr %s762, 8
        %s764 = scalar_lea.vmem %s2, %s763
        %p765 = pneg %p102
        %p766 = pneg %p99
        %p767 = scmp.lt.s32.totalorder %s39, 1
        %s768 = scalar_select %p767, %s39, 1
        %s769 = scalar_lea.vmem %s3, %s768
        %p770 = pneg %p128
        %p771 = pneg %p125
        %p772 = scmp.lt.s32.totalorder %s39, 1
        %s773 = scalar_select %p772, %s39, 1
        %s774 = smul.addr %s773, 4
        %s775 = smul.addr %s774, 8
        %s776 = scalar_lea.vmem %s4, %s775
        %p777 = pneg %p154
        %p778 = pneg %p151
        %p779 = scmp.lt.s32.totalorder %s39, 1
        %s780 = scalar_select %p779, %s39, 1
        %s781 = scalar_lea.vmem %s5, %s780
        %p782 = pneg %p180
        %p783 = pneg %p177
        %p784 = scmp.lt.s32.totalorder %s39, 1
        %s785 = scalar_select %p784, %s39, 1
        %s786 = smul.addr %s785, 4
        %s787 = smul.addr %s786, 8
        %s788 = scalar_lea.vmem %s6, %s787
        %p789 = pneg %p206
        %p790 = pneg %p203
        %p791 = scmp.lt.s32.totalorder %s39, 1
        %s792 = scalar_select %p791, %s39, 1
        %s793 = scalar_lea.vmem %s7, %s792
        %p794 = pneg %p232
        %p795 = pneg %p229
        %s796 = sand.u32 %s39, 1
        %s797 = scalar_lea.sflag [#allocation4], %s796
        %s798 = sand.u32 %s245, 1
        %s799 = smul.addr %s798, 32
        %s800 = scalar_lea.vmem [#allocation8], %s799
        %p801 = pneg %p258
        %p802 = pneg %p255
        %p803 = scmp.lt.s32.totalorder %s39, 1
        %s804 = scalar_select %p803, %s39, 1
        %s805 = scalar_lea.vmem %s9, %s804
        %p806 = pneg %p284
        %p807 = pneg %p281
        %p808 = scmp.lt.s32.totalorder %s39, 1
        %s809 = scalar_select %p808, %s39, 1
        %s810 = scalar_lea.vmem %s10, %s809
        %p811 = pneg %p310
        %p812 = pneg %p307
        %p813 = scmp.lt.s32.totalorder %s39, 1
        %s814 = scalar_select %p813, %s39, 1
        %s815 = scalar_lea.vmem %s11, %s814
        %p816 = pneg %p336
        %p817 = pneg %p333
        %s818 = sand.u32 %s39, 1
        %s819 = scalar_lea.sflag [#allocation4], %s818
        %s820 = sand.u32 %s349, 1
        %s821 = smul.addr %s820, 32
        %s822 = scalar_lea.vmem [#allocation9], %s821
        %p823 = pneg %p362
        %p824 = pneg %p359
        %p825 = scmp.lt.s32.totalorder %s39, 1
        %s826 = scalar_select %p825, %s39, 1
        %s827 = scalar_lea.vmem %s13, %s826
        %p828 = pneg %p388
        %p829 = pneg %p385
        %p830 = scmp.lt.s32.totalorder %s39, 1
        %s831 = scalar_select %p830, %s39, 1
        %s832 = smul.addr %s831, 8
        %s833 = smul.addr %s832, 8
        %s834 = scalar_lea.vmem %s14, %s833
        %p835 = pneg %p414
        %p836 = pneg %p411
        %p837 = scmp.lt.s32.totalorder %s39, 1
        %s838 = scalar_select %p837, %s39, 1
        %s839 = scalar_lea.vmem %s15, %s838
        %p840 = pneg %p440
        %p841 = pneg %p437
        %p842 = scmp.lt.s32.totalorder %s39, 1
        %s843 = scalar_select %p842, %s39, 1
        %s844 = scalar_lea.vmem %s16, %s843
        %p845 = pneg %p466
        %p846 = pneg %p463
        %p847 = scmp.lt.s32.totalorder %s39, 1
        %s848 = scalar_select %p847, %s39, 1
        %s849 = scalar_lea.vmem %s17, %s848
        %p850 = pneg %p492
        %p851 = pneg %p489
        %p852 = pneg %p518
        %p853 = pneg %p515
        %s854 = sand.u32 %s505, 1
        %s855 = scalar_lea.sflag [#allocation5], %s854
        %s856 = sand.u32 %s505, 1
        %s857 = smul.addr %s856, 16
        %s858 = scalar_lea.vmem [#allocation10], %s857
        %p859 = pneg %p544
        %p860 = pneg %p541
        %s861 = sand.u32 %s531, 1
        %s862 = scalar_lea.sflag [#allocation12], %s861
        %s863 = sand.u32 %s531, 1
        %s864 = smul.addr %s863, 64
        %s865 = scalar_lea.vmem [#allocation11], %s864
        %p866 = scmp.lt.s32.totalorder %s39, 1
        %s867 = scalar_select %p866, %s39, 1
        %s868 = smul.addr %s867, 4
        %s869 = smul.addr %s868, 8
        %s870 = scalar_lea.vmem %s2, %s869
        %p871 = scmp.lt.s32.totalorder %s39, 1
        %s872 = scalar_select %p871, %s39, 1
        %s873 = scalar_lea.vmem %s3, %s872
        %p874 = scmp.lt.s32.totalorder %s39, 1
        %s875 = scalar_select %p874, %s39, 1
        %s876 = smul.addr %s875, 4
        %s877 = smul.addr %s876, 8
        %s878 = scalar_lea.vmem %s4, %s877
        %p879 = scmp.lt.s32.totalorder %s39, 1
        %s880 = scalar_select %p879, %s39, 1
        %s881 = scalar_lea.vmem %s5, %s880
        %p882 = scmp.lt.s32.totalorder %s39, 1
        %s883 = scalar_select %p882, %s39, 1
        %s884 = smul.addr %s883, 4
        %s885 = smul.addr %s884, 8
        %s886 = scalar_lea.vmem %s6, %s885
        %p887 = scmp.lt.s32.totalorder %s39, 1
        %s888 = scalar_select %p887, %s39, 1
        %s889 = scalar_lea.vmem %s7, %s888
        %p890 = scmp.lt.s32.totalorder %s39, 1
        %s891 = scalar_select %p890, %s39, 1
        %s892 = scalar_lea.vmem %s9, %s891
        %p893 = scmp.lt.s32.totalorder %s39, 1
        %s894 = scalar_select %p893, %s39, 1
        %s895 = scalar_lea.vmem %s10, %s894
        %p896 = scmp.lt.s32.totalorder %s39, 1
        %s897 = scalar_select %p896, %s39, 1
        %s898 = scalar_lea.vmem %s11, %s897
        %p899 = scmp.lt.s32.totalorder %s39, 1
        %s900 = scalar_select %p899, %s39, 1
        %s901 = scalar_lea.vmem %s13, %s900
        %p902 = scmp.lt.s32.totalorder %s39, 1
        %s903 = scalar_select %p902, %s39, 1
        %s904 = smul.addr %s903, 8
        %s905 = smul.addr %s904, 8
        %s906 = scalar_lea.vmem %s14, %s905
        %p907 = scmp.lt.s32.totalorder %s39, 1
        %s908 = scalar_select %p907, %s39, 1
        %s909 = scalar_lea.vmem %s15, %s908
        %p910 = scmp.lt.s32.totalorder %s39, 1
        %s911 = scalar_select %p910, %s39, 1
        %s912 = scalar_lea.vmem %s16, %s911
        %p913 = scmp.lt.s32.totalorder %s39, 1
        %s914 = scalar_select %p913, %s39, 1
        %s915 = scalar_lea.vmem %s17, %s914
        %p916 = scmp.eq.s32.totalorder %s39, 0
        // Predicated region
        $region109: #{tpu_custom_call.1} parent=91 // pred_check
          %p917 = pneg %p916
        $region110: #{tpu_custom_call.1} parent=91 // pred_check_branch
          %919 = sbr.rel (%p917) target = $region112
        $region111: #{tpu_custom_call.1} parent=91 // pred_region
          %v920 = vld [vmem:[#allocation3] sm:$0xff]
          %v921 = vld [vmem:[#allocation3 + $0x8] sm:$0xff]
          %vm922 = vcmask 261120
          %923 = vst.msk [vmem:[#allocation2] sm:$0xff] %vm922, %v920
          %924 = vst.msk [vmem:[#allocation2 + $0x8] sm:$0xff] %vm922, %v921
        $region112: #{tpu_custom_call.1} parent=91 // pred_fallthru
          _
        %v925 = vld [vmem:[#allocation2] sm:$0xff]
        %v926 = vld [vmem:[#allocation2 + $0x8] sm:$0xff]
        %v927 = vld [vmem:[#allocation6] sm:$0x1]
        %v928 = vld [vmem:[#allocation6 + $0x1] sm:$0x1]
        %v929 = vld [vmem:[%s870] sm:$0xff]
        %v930 = vld [vmem:[%s870 + $0x8] sm:$0xff]
        %v931 = vld [vmem:[%s870 + $0x10] sm:$0xff]
        %v932 = vld [vmem:[%s870 + $0x18] sm:$0xff]
        %v933 = vld [vmem:[%s873] sm:$0x1]
        %v935 = vlaneseq
        %v936 = vshrl.u32 %v935, 7
        %v937 = vsub.s32 0, %v936
        %v938 = vrot.slane %v933, %v937
        %vm940 = vcmask 261120
        %v942 = vsel %vm940, %v925, 0
        %v945 = vsel %vm940, %v926, 0
        %947 = vmatprep.subr.mxu0 0.0
        %948 = vmatpush1.msra.mxu0 0.0
        %949 = vmatprep.subr.mxu0 0.0
        %950 = vmatpush1.msra.mxu0 0.0
        %951 = vmatprep.subr.mxu0 0.0
        %952 = vmatpush1.msra.mxu0 0.0
        %953 = vmatprep.subr.mxu0 0.0
        %954 = vmatpush1.msra.mxu0 0.0
        %955 = vmatprep.subr.mxu0 0.0
        %956 = vmatpush1.msra.mxu0 0.0
        %957 = vmatprep.subr.mxu0 0.0
        %958 = vmatpush1.msra.mxu0 0.0
        %959 = vmatprep.subr.mxu0 0.0
        %960 = vmatpush1.msra.mxu0 0.0
        %961 = vmatprep.subr.mxu0 0.0
        %962 = vmatpush1.msra.mxu0 0.0
        %963 = vmatprep.subr.mxu0 0.0
        %964 = vmatpush1.msra.mxu0 0.0
        %965 = vmatprep.subr.mxu0 0.0
        %966 = vmatpush1.msra.mxu0 0.0
        %967 = vmatprep.subr.mxu0 0.0
        %968 = vmatpush1.msra.mxu0 0.0
        %969 = vmatprep.subr.mxu0 0.0
        %970 = vmatpush1.msra.mxu0 0.0
        %971 = vmatprep.subr.mxu0 0.0
        %972 = vmatpush1.msra.mxu0 %v932
        %973 = vmatprep.subr.mxu0 0.0
        %974 = vmatpush1.msra.mxu0 %v931
        %975 = vmatprep.subr.mxu0 0.0
        %976 = vmatpush1.msra.mxu0 %v930
        %977 = vmatprep.subr.mxu0 0.0
        %978 = vmatpush1.msra.mxu0 %v929
        %979 = vmatprep.subr.mxu0 0.0
        %980 = vmatpush2.msra.mxu0 0.0
        %981 = vmatprep.subr.mxu0 0.0
        %982 = vmatpush2.msra.mxu0 0.0
        %983 = vmatprep.subr.mxu0 0.0
        %984 = vmatpush2.msra.mxu0 0.0
        %985 = vmatprep.subr.mxu0 0.0
        %986 = vmatpush2.msra.mxu0 0.0
        %987 = vmatprep.subr.mxu0 0.0
        %988 = vmatpush2.msra.mxu0 0.0
        %989 = vmatprep.subr.mxu0 0.0
        %990 = vmatpush2.msra.mxu0 0.0
        %991 = vmatprep.subr.mxu0 0.0
        %992 = vmatpush2.msra.mxu0 0.0
        %993 = vmatprep.subr.mxu0 0.0
        %994 = vmatpush2.msra.mxu0 0.0
        %995 = vmatprep.subr.mxu0 0.0
        %996 = vmatpush2.msra.mxu0 0.0
        %997 = vmatprep.subr.mxu0 0.0
        %998 = vmatpush2.msra.mxu0 0.0
        %999 = vmatprep.subr.mxu0 0.0
        %1000 = vmatpush2.msra.mxu0 0.0
        %1001 = vmatprep.subr.mxu0 0.0
        %1002 = vmatpush2.msra.mxu0 0.0
        %1003 = vmatprep.subr.mxu0 0.0
        %1004 = vmatpush2.msra.mxu0 0.0
        %1005 = vmatprep.subr.mxu0 0.0
        %1006 = vmatpush2.msra.mxu0 0.0
        %1007 = vmatprep.subr.mxu0 0.0
        %1008 = vmatpush2.msra.mxu0 0.0
        %1009 = vmatprep.subr.mxu0 0.0
        %1010 = vmatpush2.msra.mxu0 0.0
        %1011 = vmatprep.mubr.f32.mxu0 0.0
        %1012 = vmatmul.mubr.f32.gmra.mxu0 %v942
        %v1013 = vpop.f32.mrf.mxu0
        %v1014 = vadd.f32 %v938, %v1013
        %v1015 = vpop.f32.mrf.mxu0
        %1016 = vmatprep.mubr.f32.mxu0 0.0
        %1017 = vmatmul.mubr.f32.gmra.mxu0 %v945
        %v1018 = vpop.f32.mrf.mxu0
        %v1019 = vadd.f32 %v938, %v1018
        %v1020 = vpop.f32.mrf.mxu0
        %1021 = vdwg.mxu0
        %v1022 = vld [vmem:[%s878] sm:$0xff]
        %v1023 = vld [vmem:[%s878 + $0x8] sm:$0xff]
        %v1024 = vld [vmem:[%s878 + $0x10] sm:$0xff]
        %v1025 = vld [vmem:[%s878 + $0x18] sm:$0xff]
        %v1026 = vld [vmem:[%s881] sm:$0x1]
        %v1028 = vlaneseq
        %v1029 = vshrl.u32 %v1028, 7
        %v1030 = vsub.s32 0, %v1029
        %v1031 = vrot.slane %v1026, %v1030
        %1033 = vmatprep.subr.mxu0 0.0
        %1034 = vmatpush1.msra.mxu0 0.0
        %1035 = vmatprep.subr.mxu0 0.0
        %1036 = vmatpush1.msra.mxu0 0.0
        %1037 = vmatprep.subr.mxu0 0.0
        %1038 = vmatpush1.msra.mxu0 0.0
        %1039 = vmatprep.subr.mxu0 0.0
        %1040 = vmatpush1.msra.mxu0 0.0
        %1041 = vmatprep.subr.mxu0 0.0
        %1042 = vmatpush1.msra.mxu0 0.0
        %1043 = vmatprep.subr.mxu0 0.0
        %1044 = vmatpush1.msra.mxu0 0.0
        %1045 = vmatprep.subr.mxu0 0.0
        %1046 = vmatpush1.msra.mxu0 0.0
        %1047 = vmatprep.subr.mxu0 0.0
        %1048 = vmatpush1.msra.mxu0 0.0
        %1049 = vmatprep.subr.mxu0 0.0
        %1050 = vmatpush1.msra.mxu0 0.0
        %1051 = vmatprep.subr.mxu0 0.0
        %1052 = vmatpush1.msra.mxu0 0.0
        %1053 = vmatprep.subr.mxu0 0.0
        %1054 = vmatpush1.msra.mxu0 0.0
        %1055 = vmatprep.subr.mxu0 0.0
        %1056 = vmatpush1.msra.mxu0 0.0
        %1057 = vmatprep.subr.mxu0 0.0
        %1058 = vmatpush1.msra.mxu0 %v1025
        %1059 = vmatprep.subr.mxu0 0.0
        %1060 = vmatpush1.msra.mxu0 %v1024
        %1061 = vmatprep.subr.mxu0 0.0
        %1062 = vmatpush1.msra.mxu0 %v1023
        %1063 = vmatprep.subr.mxu0 0.0
        %1064 = vmatpush1.msra.mxu0 %v1022
        %1065 = vmatprep.subr.mxu0 0.0
        %1066 = vmatpush2.msra.mxu0 0.0
        %1067 = vmatprep.subr.mxu0 0.0
        %1068 = vmatpush2.msra.mxu0 0.0
        %1069 = vmatprep.subr.mxu0 0.0
        %1070 = vmatpush2.msra.mxu0 0.0
        %1071 = vmatprep.subr.mxu0 0.0
        %1072 = vmatpush2.msra.mxu0 0.0
        %1073 = vmatprep.subr.mxu0 0.0
        %1074 = vmatpush2.msra.mxu0 0.0
        %1075 = vmatprep.subr.mxu0 0.0
        %1076 = vmatpush2.msra.mxu0 0.0
        %1077 = vmatprep.subr.mxu0 0.0
        %1078 = vmatpush2.msra.mxu0 0.0
        %1079 = vmatprep.subr.mxu0 0.0
        %1080 = vmatpush2.msra.mxu0 0.0
        %1081 = vmatprep.subr.mxu0 0.0
        %1082 = vmatpush2.msra.mxu0 0.0
        %1083 = vmatprep.subr.mxu0 0.0
        %1084 = vmatpush2.msra.mxu0 0.0
        %1085 = vmatprep.subr.mxu0 0.0
        %1086 = vmatpush2.msra.mxu0 0.0
        %1087 = vmatprep.subr.mxu0 0.0
        %1088 = vmatpush2.msra.mxu0 0.0
        %1089 = vmatprep.subr.mxu0 0.0
        %1090 = vmatpush2.msra.mxu0 0.0
        %1091 = vmatprep.subr.mxu0 0.0
        %1092 = vmatpush2.msra.mxu0 0.0
        %1093 = vmatprep.subr.mxu0 0.0
        %1094 = vmatpush2.msra.mxu0 0.0
        %1095 = vmatprep.subr.mxu0 0.0
        %1096 = vmatpush2.msra.mxu0 0.0
        %1097 = vmatprep.mubr.f32.mxu0 0.0
        %1098 = vmatmul.mubr.f32.gmra.mxu0 %v942
        %v1099 = vpop.f32.mrf.mxu0
        %v1100 = vadd.f32 %v1031, %v1099
        %v1101 = vpop.f32.mrf.mxu0
        %1102 = vmatprep.mubr.f32.mxu0 0.0
        %1103 = vmatmul.mubr.f32.gmra.mxu0 %v945
        %v1104 = vpop.f32.mrf.mxu0
        %v1105 = vadd.f32 %v1031, %v1104
        %v1106 = vpop.f32.mrf.mxu0
        %1107 = vdwg.mxu0
        %v1108 = vld [vmem:[%s886] sm:$0xff]
        %v1109 = vld [vmem:[%s886 + $0x8] sm:$0xff]
        %v1110 = vld [vmem:[%s886 + $0x10] sm:$0xff]
        %v1111 = vld [vmem:[%s886 + $0x18] sm:$0xff]
        %v1112 = vld [vmem:[%s889] sm:$0x1]
        %v1114 = vlaneseq
        %v1115 = vshrl.u32 %v1114, 7
        %v1116 = vsub.s32 0, %v1115
        %v1117 = vrot.slane %v1112, %v1116
        %1119 = vmatprep.subr.mxu0 0.0
        %1120 = vmatpush1.msra.mxu0 0.0
        %1121 = vmatprep.subr.mxu0 0.0
        %1122 = vmatpush1.msra.mxu0 0.0
        %1123 = vmatprep.subr.mxu0 0.0
        %1124 = vmatpush1.msra.mxu0 0.0
        %1125 = vmatprep.subr.mxu0 0.0
        %1126 = vmatpush1.msra.mxu0 0.0
        %1127 = vmatprep.subr.mxu0 0.0
        %1128 = vmatpush1.msra.mxu0 0.0
        %1129 = vmatprep.subr.mxu0 0.0
        %1130 = vmatpush1.msra.mxu0 0.0
        %1131 = vmatprep.subr.mxu0 0.0
        %1132 = vmatpush1.msra.mxu0 0.0
        %1133 = vmatprep.subr.mxu0 0.0
        %1134 = vmatpush1.msra.mxu0 0.0
        %1135 = vmatprep.subr.mxu0 0.0
        %1136 = vmatpush1.msra.mxu0 0.0
        %1137 = vmatprep.subr.mxu0 0.0
        %1138 = vmatpush1.msra.mxu0 0.0
        %1139 = vmatprep.subr.mxu0 0.0
        %1140 = vmatpush1.msra.mxu0 0.0
        %1141 = vmatprep.subr.mxu0 0.0
        %1142 = vmatpush1.msra.mxu0 0.0
        %1143 = vmatprep.subr.mxu0 0.0
        %1144 = vmatpush1.msra.mxu0 %v1111
        %1145 = vmatprep.subr.mxu0 0.0
        %1146 = vmatpush1.msra.mxu0 %v1110
        %1147 = vmatprep.subr.mxu0 0.0
        %1148 = vmatpush1.msra.mxu0 %v1109
        %1149 = vmatprep.subr.mxu0 0.0
        %1150 = vmatpush1.msra.mxu0 %v1108
        %1151 = vmatprep.subr.mxu0 0.0
        %1152 = vmatpush2.msra.mxu0 0.0
        %1153 = vmatprep.subr.mxu0 0.0
        %1154 = vmatpush2.msra.mxu0 0.0
        %1155 = vmatprep.subr.mxu0 0.0
        %1156 = vmatpush2.msra.mxu0 0.0
        %1157 = vmatprep.subr.mxu0 0.0
        %1158 = vmatpush2.msra.mxu0 0.0
        %1159 = vmatprep.subr.mxu0 0.0
        %1160 = vmatpush2.msra.mxu0 0.0
        %1161 = vmatprep.subr.mxu0 0.0
        %1162 = vmatpush2.msra.mxu0 0.0
        %1163 = vmatprep.subr.mxu0 0.0
        %1164 = vmatpush2.msra.mxu0 0.0
        %1165 = vmatprep.subr.mxu0 0.0
        %1166 = vmatpush2.msra.mxu0 0.0
        %1167 = vmatprep.subr.mxu0 0.0
        %1168 = vmatpush2.msra.mxu0 0.0
        %1169 = vmatprep.subr.mxu0 0.0
        %1170 = vmatpush2.msra.mxu0 0.0
        %1171 = vmatprep.subr.mxu0 0.0
        %1172 = vmatpush2.msra.mxu0 0.0
        %1173 = vmatprep.subr.mxu0 0.0
        %1174 = vmatpush2.msra.mxu0 0.0
        %1175 = vmatprep.subr.mxu0 0.0
        %1176 = vmatpush2.msra.mxu0 0.0
        %1177 = vmatprep.subr.mxu0 0.0
        %1178 = vmatpush2.msra.mxu0 0.0
        %1179 = vmatprep.subr.mxu0 0.0
        %1180 = vmatpush2.msra.mxu0 0.0
        %1181 = vmatprep.subr.mxu0 0.0
        %1182 = vmatpush2.msra.mxu0 0.0
        %1183 = vmatprep.mubr.f32.mxu0 0.0
        %1184 = vmatmul.mubr.f32.gmra.mxu0 %v942
        %v1185 = vpop.f32.mrf.mxu0
        %v1186 = vadd.f32 %v1117, %v1185
        %v1187 = vpop.f32.mrf.mxu0
        %1188 = vmatprep.mubr.f32.mxu0 0.0
        %1189 = vmatmul.mubr.f32.gmra.mxu0 %v945
        %v1190 = vpop.f32.mrf.mxu0
        %v1191 = vadd.f32 %v1117, %v1190
        %v1192 = vpop.f32.mrf.mxu0
        %1193 = vdwg.mxu0
        %v1194 = vld [vmem:[%s742] sm:$0xff]
        %v1195 = vld [vmem:[%s742 + $0x8] sm:$0xff]
        %v1196 = vld [vmem:[%s742 + $0x10] sm:$0xff]
        %v1197 = vld [vmem:[%s742 + $0x18] sm:$0xff]
        %vm1198 = vcmask 64512
        %v1200 = vsel %vm1198, %v1014, 0
        %v1203 = vsel %vm1198, %v1100, 0
        %1205 = vmatprep.subr.mxu0 0.0
        %1206 = vmatpush1.xpose.msra.mxu0 0.0
        %1207 = vmatprep.subr.mxu0 0.0
        %1208 = vmatpush1.xpose.msra.mxu0 0.0
        %1209 = vmatprep.subr.mxu0 0.0
        %1210 = vmatpush1.xpose.msra.mxu0 0.0
        %1211 = vmatprep.subr.mxu0 0.0
        %1212 = vmatpush1.xpose.msra.mxu0 0.0
        %1213 = vmatprep.subr.mxu0 0.0
        %1214 = vmatpush1.xpose.msra.mxu0 0.0
        %1215 = vmatprep.subr.mxu0 0.0
        %1216 = vmatpush1.xpose.msra.mxu0 0.0
        %1217 = vmatprep.subr.mxu0 0.0
        %1218 = vmatpush1.xpose.msra.mxu0 0.0
        %1219 = vmatprep.subr.mxu0 0.0
        %1220 = vmatpush1.xpose.msra.mxu0 0.0
        %1221 = vmatprep.subr.mxu0 0.0
        %1222 = vmatpush1.xpose.msra.mxu0 0.0
        %1223 = vmatprep.subr.mxu0 0.0
        %1224 = vmatpush1.xpose.msra.mxu0 0.0
        %1225 = vmatprep.subr.mxu0 0.0
        %1226 = vmatpush1.xpose.msra.mxu0 0.0
        %1227 = vmatprep.subr.mxu0 0.0
        %1228 = vmatpush1.xpose.msra.mxu0 0.0
        %1229 = vmatprep.subr.mxu0 0.0
        %1230 = vmatpush1.xpose.msra.mxu0 0.0
        %1231 = vmatprep.subr.mxu0 0.0
        %1232 = vmatpush1.xpose.msra.mxu0 0.0
        %1233 = vmatprep.subr.mxu0 0.0
        %1234 = vmatpush1.xpose.msra.mxu0 0.0
        %1235 = vmatprep.subr.mxu0 0.0
        %1236 = vmatpush1.xpose.msra.mxu0 %v1203
        %1237 = vmatprep.subr.mxu0 0.0
        %1238 = vmatpush2.xpose.msra.mxu0 0.0
        %1239 = vmatprep.subr.mxu0 0.0
        %1240 = vmatpush2.xpose.msra.mxu0 0.0
        %1241 = vmatprep.subr.mxu0 0.0
        %1242 = vmatpush2.xpose.msra.mxu0 0.0
        %1243 = vmatprep.subr.mxu0 0.0
        %1244 = vmatpush2.xpose.msra.mxu0 0.0
        %1245 = vmatprep.subr.mxu0 0.0
        %1246 = vmatpush2.xpose.msra.mxu0 0.0
        %1247 = vmatprep.subr.mxu0 0.0
        %1248 = vmatpush2.xpose.msra.mxu0 0.0
        %1249 = vmatprep.subr.mxu0 0.0
        %1250 = vmatpush2.xpose.msra.mxu0 0.0
        %1251 = vmatprep.subr.mxu0 0.0
        %1252 = vmatpush2.xpose.msra.mxu0 0.0
        %1253 = vmatprep.subr.mxu0 0.0
        %1254 = vmatpush2.xpose.msra.mxu0 0.0
        %1255 = vmatprep.subr.mxu0 0.0
        %1256 = vmatpush2.xpose.msra.mxu0 0.0
        %1257 = vmatprep.subr.mxu0 0.0
        %1258 = vmatpush2.xpose.msra.mxu0 0.0
        %1259 = vmatprep.subr.mxu0 0.0
        %1260 = vmatpush2.xpose.msra.mxu0 0.0
        %1261 = vmatprep.subr.mxu0 0.0
        %1262 = vmatpush2.xpose.msra.mxu0 0.0
        %1263 = vmatprep.subr.mxu0 0.0
        %1264 = vmatpush2.xpose.msra.mxu0 0.0
        %1265 = vmatprep.subr.mxu0 0.0
        %1266 = vmatpush2.xpose.msra.mxu0 0.0
        %1267 = vmatprep.subr.mxu0 0.0
        %1268 = vmatpush2.xpose.msra.mxu0 0.0
        %1269 = vmatprep.mubr.f32.mxu0 0.0
        %1270 = vmatmul.mubr.f32.gmra.mxu0 %v1200
        %v1271 = vpop.f32.mrf.mxu0
        %v1272 = vadd.f32 0.0, %v1271
        %v1273 = vpop.f32.mrf.mxu0
        %1274 = vdwg.mxu0
        %v1276 = vsel %vm1198, %v1019, 0
        %v1279 = vsel %vm1198, %v1105, 0
        %1281 = vmatprep.subr.mxu0 0.0
        %1282 = vmatpush1.xpose.msra.mxu0 0.0
        %1283 = vmatprep.subr.mxu0 0.0
        %1284 = vmatpush1.xpose.msra.mxu0 0.0
        %1285 = vmatprep.subr.mxu0 0.0
        %1286 = vmatpush1.xpose.msra.mxu0 0.0
        %1287 = vmatprep.subr.mxu0 0.0
        %1288 = vmatpush1.xpose.msra.mxu0 0.0
        %1289 = vmatprep.subr.mxu0 0.0
        %1290 = vmatpush1.xpose.msra.mxu0 0.0
        %1291 = vmatprep.subr.mxu0 0.0
        %1292 = vmatpush1.xpose.msra.mxu0 0.0
        %1293 = vmatprep.subr.mxu0 0.0
        %1294 = vmatpush1.xpose.msra.mxu0 0.0
        %1295 = vmatprep.subr.mxu0 0.0
        %1296 = vmatpush1.xpose.msra.mxu0 0.0
        %1297 = vmatprep.subr.mxu0 0.0
        %1298 = vmatpush1.xpose.msra.mxu0 0.0
        %1299 = vmatprep.subr.mxu0 0.0
        %1300 = vmatpush1.xpose.msra.mxu0 0.0
        %1301 = vmatprep.subr.mxu0 0.0
        %1302 = vmatpush1.xpose.msra.mxu0 0.0
        %1303 = vmatprep.subr.mxu0 0.0
        %1304 = vmatpush1.xpose.msra.mxu0 0.0
        %1305 = vmatprep.subr.mxu0 0.0
        %1306 = vmatpush1.xpose.msra.mxu0 0.0
        %1307 = vmatprep.subr.mxu0 0.0
        %1308 = vmatpush1.xpose.msra.mxu0 0.0
        %1309 = vmatprep.subr.mxu0 0.0
        %1310 = vmatpush1.xpose.msra.mxu0 0.0
        %1311 = vmatprep.subr.mxu0 0.0
        %1312 = vmatpush1.xpose.msra.mxu0 %v1279
        %1313 = vmatprep.subr.mxu0 0.0
        %1314 = vmatpush2.xpose.msra.mxu0 0.0
        %1315 = vmatprep.subr.mxu0 0.0
        %1316 = vmatpush2.xpose.msra.mxu0 0.0
        %1317 = vmatprep.subr.mxu0 0.0
        %1318 = vmatpush2.xpose.msra.mxu0 0.0
        %1319 = vmatprep.subr.mxu0 0.0
        %1320 = vmatpush2.xpose.msra.mxu0 0.0
        %1321 = vmatprep.subr.mxu0 0.0
        %1322 = vmatpush2.xpose.msra.mxu0 0.0
        %1323 = vmatprep.subr.mxu0 0.0
        %1324 = vmatpush2.xpose.msra.mxu0 0.0
        %1325 = vmatprep.subr.mxu0 0.0
        %1326 = vmatpush2.xpose.msra.mxu0 0.0
        %1327 = vmatprep.subr.mxu0 0.0
        %1328 = vmatpush2.xpose.msra.mxu0 0.0
        %1329 = vmatprep.subr.mxu0 0.0
        %1330 = vmatpush2.xpose.msra.mxu0 0.0
        %1331 = vmatprep.subr.mxu0 0.0
        %1332 = vmatpush2.xpose.msra.mxu0 0.0
        %1333 = vmatprep.subr.mxu0 0.0
        %1334 = vmatpush2.xpose.msra.mxu0 0.0
        %1335 = vmatprep.subr.mxu0 0.0
        %1336 = vmatpush2.xpose.msra.mxu0 0.0
        %1337 = vmatprep.subr.mxu0 0.0
        %1338 = vmatpush2.xpose.msra.mxu0 0.0
        %1339 = vmatprep.subr.mxu0 0.0
        %1340 = vmatpush2.xpose.msra.mxu0 0.0
        %1341 = vmatprep.subr.mxu0 0.0
        %1342 = vmatpush2.xpose.msra.mxu0 0.0
        %1343 = vmatprep.subr.mxu0 0.0
        %1344 = vmatpush2.xpose.msra.mxu0 0.0
        %1345 = vmatprep.mubr.f32.mxu0 0.0
        %1346 = vmatmul.mubr.f32.gmra.mxu0 %v1276
        %v1347 = vpop.f32.mrf.mxu0
        %v1348 = vadd.f32 0.0, %v1347
        %v1349 = vpop.f32.mrf.mxu0
        %1350 = vdwg.mxu0
        %v1351 = vmul.f32 %v1272, 0.35355338
        %v1352 = vmul.f32 %v1348, 0.35355338
        %v1355 = vlaneseq
        %v1356 = vshrl.u32 %v1355, 7
        %v1357 = vsub.s32 0, %v1356
        %v1358 = vrot.slane %v927, %v1357
        %v1359 = vlaneseq
        %v1360 = vshrl.u32 %v1359, 7
        %v1361 = vsub.s32 0, %v1360
        %v1362 = vrot.slane %v928, %v1361
        %v1365 = vadd.f32 %v1351, %v1358
        %v1366 = vadd.f32 %v1352, %v1362
        %v1367 = vsel %vm1198, %v1365, -inf
        %1368 = vmax.xlane.f32.xlu0 %v1367
        %v1369 = vpop.xlane.xlu0 %1368
        %v1370 = vsel %vm1198, %v1366, -inf
        %1371 = vmax.xlane.f32.xlu0 %v1370
        %v1372 = vpop.xlane.xlu0 %1371
        %v1373 = vsub.f32 %v1365, %v1369
        %v1374 = vsub.f32 %v1366, %v1372
        %v1375 = vmul.f32 %v1373, 1.442695
        %v1376 = vpow.pop %v1375
        %v1377 = vmul.f32 %v1374, 1.442695
        %v1378 = vpow.pop %v1377
        %v1379 = vsel %vm1198, %v1376, 0.0
        %1380 = vadd.xlane.f32.xlu0 %v1379
        %v1381 = vpop.xlane.xlu0 %1380
        %v1382 = vsel %vm1198, %v1378, 0.0
        %1383 = vadd.xlane.f32.xlu0 %v1382
        %v1384 = vpop.xlane.xlu0 %1383
        %v1385 = vrcp.pop %v1381
        %v1386 = vrcp.pop %v1384
        %v1387 = vmul.f32 %v1376, %v1385
        %v1388 = vmul.f32 %v1378, %v1386
        %v1390 = vsel %vm1198, %v1387, 0
        %1392 = vmatprep.subr.mxu0 0.0
        %1393 = vmatpush1.msra.mxu0 0.0
        %1394 = vmatprep.subr.mxu0 0.0
        %1395 = vmatpush1.msra.mxu0 0.0
        %1396 = vmatprep.subr.mxu0 0.0
        %1397 = vmatpush1.msra.mxu0 0.0
        %1398 = vmatprep.subr.mxu0 0.0
        %1399 = vmatpush1.msra.mxu0 0.0
        %1400 = vmatprep.subr.mxu0 0.0
        %1401 = vmatpush1.msra.mxu0 0.0
        %1402 = vmatprep.subr.mxu0 0.0
        %1403 = vmatpush1.msra.mxu0 0.0
        %1404 = vmatprep.subr.mxu0 0.0
        %1405 = vmatpush1.msra.mxu0 0.0
        %1406 = vmatprep.subr.mxu0 0.0
        %1407 = vmatpush1.msra.mxu0 0.0
        %1408 = vmatprep.subr.mxu0 0.0
        %1409 = vmatpush1.msra.mxu0 0.0
        %1410 = vmatprep.subr.mxu0 0.0
        %1411 = vmatpush1.msra.mxu0 0.0
        %1412 = vmatprep.subr.mxu0 0.0
        %1413 = vmatpush1.msra.mxu0 0.0
        %1414 = vmatprep.subr.mxu0 0.0
        %1415 = vmatpush1.msra.mxu0 0.0
        %1416 = vmatprep.subr.mxu0 0.0
        %1417 = vmatpush1.msra.mxu0 0.0
        %1418 = vmatprep.subr.mxu0 0.0
        %1419 = vmatpush1.msra.mxu0 0.0
        %1420 = vmatprep.subr.mxu0 0.0
        %1421 = vmatpush1.msra.mxu0 0.0
        %1422 = vmatprep.subr.mxu0 0.0
        %1423 = vmatpush1.msra.mxu0 %v1186
        %1424 = vmatprep.subr.mxu0 0.0
        %1425 = vmatpush2.msra.mxu0 0.0
        %1426 = vmatprep.subr.mxu0 0.0
        %1427 = vmatpush2.msra.mxu0 0.0
        %1428 = vmatprep.subr.mxu0 0.0
        %1429 = vmatpush2.msra.mxu0 0.0
        %1430 = vmatprep.subr.mxu0 0.0
        %1431 = vmatpush2.msra.mxu0 0.0
        %1432 = vmatprep.subr.mxu0 0.0
        %1433 = vmatpush2.msra.mxu0 0.0
        %1434 = vmatprep.subr.mxu0 0.0
        %1435 = vmatpush2.msra.mxu0 0.0
        %1436 = vmatprep.subr.mxu0 0.0
        %1437 = vmatpush2.msra.mxu0 0.0
        %1438 = vmatprep.subr.mxu0 0.0
        %1439 = vmatpush2.msra.mxu0 0.0
        %1440 = vmatprep.subr.mxu0 0.0
        %1441 = vmatpush2.msra.mxu0 0.0
        %1442 = vmatprep.subr.mxu0 0.0
        %1443 = vmatpush2.msra.mxu0 0.0
        %1444 = vmatprep.subr.mxu0 0.0
        %1445 = vmatpush2.msra.mxu0 0.0
        %1446 = vmatprep.subr.mxu0 0.0
        %1447 = vmatpush2.msra.mxu0 0.0
        %1448 = vmatprep.subr.mxu0 0.0
        %1449 = vmatpush2.msra.mxu0 0.0
        %1450 = vmatprep.subr.mxu0 0.0
        %1451 = vmatpush2.msra.mxu0 0.0
        %1452 = vmatprep.subr.mxu0 0.0
        %1453 = vmatpush2.msra.mxu0 0.0
        %1454 = vmatprep.subr.mxu0 0.0
        %1455 = vmatpush2.msra.mxu0 0.0
        %1456 = vmatprep.mubr.f32.mxu0 0.0
        %1457 = vmatmul.mubr.f32.gmra.mxu0 %v1390
        %v1458 = vpop.f32.mrf.mxu0
        %v1459 = vadd.f32 0.0, %v1458
        %v1460 = vpop.f32.mrf.mxu0
        %1461 = vdwg.mxu0
        %v1463 = vsel %vm1198, %v1388, 0
        %1465 = vmatprep.subr.mxu0 0.0
        %1466 = vmatpush1.msra.mxu0 0.0
        %1467 = vmatprep.subr.mxu0 0.0
        %1468 = vmatpush1.msra.mxu0 0.0
        %1469 = vmatprep.subr.mxu0 0.0
        %1470 = vmatpush1.msra.mxu0 0.0
        %1471 = vmatprep.subr.mxu0 0.0
        %1472 = vmatpush1.msra.mxu0 0.0
        %1473 = vmatprep.subr.mxu0 0.0
        %1474 = vmatpush1.msra.mxu0 0.0
        %1475 = vmatprep.subr.mxu0 0.0
        %1476 = vmatpush1.msra.mxu0 0.0
        %1477 = vmatprep.subr.mxu0 0.0
        %1478 = vmatpush1.msra.mxu0 0.0
        %1479 = vmatprep.subr.mxu0 0.0
        %1480 = vmatpush1.msra.mxu0 0.0
        %1481 = vmatprep.subr.mxu0 0.0
        %1482 = vmatpush1.msra.mxu0 0.0
        %1483 = vmatprep.subr.mxu0 0.0
        %1484 = vmatpush1.msra.mxu0 0.0
        %1485 = vmatprep.subr.mxu0 0.0
        %1486 = vmatpush1.msra.mxu0 0.0
        %1487 = vmatprep.subr.mxu0 0.0
        %1488 = vmatpush1.msra.mxu0 0.0
        %1489 = vmatprep.subr.mxu0 0.0
        %1490 = vmatpush1.msra.mxu0 0.0
        %1491 = vmatprep.subr.mxu0 0.0
        %1492 = vmatpush1.msra.mxu0 0.0
        %1493 = vmatprep.subr.mxu0 0.0
        %1494 = vmatpush1.msra.mxu0 0.0
        %1495 = vmatprep.subr.mxu0 0.0
        %1496 = vmatpush1.msra.mxu0 %v1191
        %1497 = vmatprep.subr.mxu0 0.0
        %1498 = vmatpush2.msra.mxu0 0.0
        %1499 = vmatprep.subr.mxu0 0.0
        %1500 = vmatpush2.msra.mxu0 0.0
        %1501 = vmatprep.subr.mxu0 0.0
        %1502 = vmatpush2.msra.mxu0 0.0
        %1503 = vmatprep.subr.mxu0 0.0
        %1504 = vmatpush2.msra.mxu0 0.0
        %1505 = vmatprep.subr.mxu0 0.0
        %1506 = vmatpush2.msra.mxu0 0.0
        %1507 = vmatprep.subr.mxu0 0.0
        %1508 = vmatpush2.msra.mxu0 0.0
        %1509 = vmatprep.subr.mxu0 0.0
        %1510 = vmatpush2.msra.mxu0 0.0
        %1511 = vmatprep.subr.mxu0 0.0
        %1512 = vmatpush2.msra.mxu0 0.0
        %1513 = vmatprep.subr.mxu0 0.0
        %1514 = vmatpush2.msra.mxu0 0.0
        %1515 = vmatprep.subr.mxu0 0.0
        %1516 = vmatpush2.msra.mxu0 0.0
        %1517 = vmatprep.subr.mxu0 0.0
        %1518 = vmatpush2.msra.mxu0 0.0
        %1519 = vmatprep.subr.mxu0 0.0
        %1520 = vmatpush2.msra.mxu0 0.0
        %1521 = vmatprep.subr.mxu0 0.0
        %1522 = vmatpush2.msra.mxu0 0.0
        %1523 = vmatprep.subr.mxu0 0.0
        %1524 = vmatpush2.msra.mxu0 0.0
        %1525 = vmatprep.subr.mxu0 0.0
        %1526 = vmatpush2.msra.mxu0 0.0
        %1527 = vmatprep.subr.mxu0 0.0
        %1528 = vmatpush2.msra.mxu0 0.0
        %1529 = vmatprep.mubr.f32.mxu0 0.0
        %1530 = vmatmul.mubr.f32.gmra.mxu0 %v1463
        %v1531 = vpop.f32.mrf.mxu0
        %v1532 = vadd.f32 0.0, %v1531
        %v1533 = vpop.f32.mrf.mxu0
        %1534 = vdwg.mxu0
        %1535 = vrot.lane.b32.xlu0 %v1014, 120
        %v1536 = vpop.permute.xlu0 %1535
        %1537 = vrot.lane.b32.xlu0 %v1100, 120
        %v1538 = vpop.permute.xlu0 %1537
        %v1539 = vsel %vm1198, %v1536, 0
        %v1541 = vsel %vm1198, %v1538, 0
        %1543 = vmatprep.subr.mxu0 0.0
        %1544 = vmatpush1.xpose.msra.mxu0 0.0
        %1545 = vmatprep.subr.mxu0 0.0
        %1546 = vmatpush1.xpose.msra.mxu0 0.0
        %1547 = vmatprep.subr.mxu0 0.0
        %1548 = vmatpush1.xpose.msra.mxu0 0.0
        %1549 = vmatprep.subr.mxu0 0.0
        %1550 = vmatpush1.xpose.msra.mxu0 0.0
        %1551 = vmatprep.subr.mxu0 0.0
        %1552 = vmatpush1.xpose.msra.mxu0 0.0
        %1553 = vmatprep.subr.mxu0 0.0
        %1554 = vmatpush1.xpose.msra.mxu0 0.0
        %1555 = vmatprep.subr.mxu0 0.0
        %1556 = vmatpush1.xpose.msra.mxu0 0.0
        %1557 = vmatprep.subr.mxu0 0.0
        %1558 = vmatpush1.xpose.msra.mxu0 0.0
        %1559 = vmatprep.subr.mxu0 0.0
        %1560 = vmatpush1.xpose.msra.mxu0 0.0
        %1561 = vmatprep.subr.mxu0 0.0
        %1562 = vmatpush1.xpose.msra.mxu0 0.0
        %1563 = vmatprep.subr.mxu0 0.0
        %1564 = vmatpush1.xpose.msra.mxu0 0.0
        %1565 = vmatprep.subr.mxu0 0.0
        %1566 = vmatpush1.xpose.msra.mxu0 0.0
        %1567 = vmatprep.subr.mxu0 0.0
        %1568 = vmatpush1.xpose.msra.mxu0 0.0
        %1569 = vmatprep.subr.mxu0 0.0
        %1570 = vmatpush1.xpose.msra.mxu0 0.0
        %1571 = vmatprep.subr.mxu0 0.0
        %1572 = vmatpush1.xpose.msra.mxu0 0.0
        %1573 = vmatprep.subr.mxu0 0.0
        %1574 = vmatpush1.xpose.msra.mxu0 %v1541
        %1575 = vmatprep.subr.mxu0 0.0
        %1576 = vmatpush2.xpose.msra.mxu0 0.0
        %1577 = vmatprep.subr.mxu0 0.0
        %1578 = vmatpush2.xpose.msra.mxu0 0.0
        %1579 = vmatprep.subr.mxu0 0.0
        %1580 = vmatpush2.xpose.msra.mxu0 0.0
        %1581 = vmatprep.subr.mxu0 0.0
        %1582 = vmatpush2.xpose.msra.mxu0 0.0
        %1583 = vmatprep.subr.mxu0 0.0
        %1584 = vmatpush2.xpose.msra.mxu0 0.0
        %1585 = vmatprep.subr.mxu0 0.0
        %1586 = vmatpush2.xpose.msra.mxu0 0.0
        %1587 = vmatprep.subr.mxu0 0.0
        %1588 = vmatpush2.xpose.msra.mxu0 0.0
        %1589 = vmatprep.subr.mxu0 0.0
        %1590 = vmatpush2.xpose.msra.mxu0 0.0
        %1591 = vmatprep.subr.mxu0 0.0
        %1592 = vmatpush2.xpose.msra.mxu0 0.0
        %1593 = vmatprep.subr.mxu0 0.0
        %1594 = vmatpush2.xpose.msra.mxu0 0.0
        %1595 = vmatprep.subr.mxu0 0.0
        %1596 = vmatpush2.xpose.msra.mxu0 0.0
        %1597 = vmatprep.subr.mxu0 0.0
        %1598 = vmatpush2.xpose.msra.mxu0 0.0
        %1599 = vmatprep.subr.mxu0 0.0
        %1600 = vmatpush2.xpose.msra.mxu0 0.0
        %1601 = vmatprep.subr.mxu0 0.0
        %1602 = vmatpush2.xpose.msra.mxu0 0.0
        %1603 = vmatprep.subr.mxu0 0.0
        %1604 = vmatpush2.xpose.msra.mxu0 0.0
        %1605 = vmatprep.subr.mxu0 0.0
        %1606 = vmatpush2.xpose.msra.mxu0 0.0
        %1607 = vmatprep.mubr.f32.mxu0 0.0
        %1608 = vmatmul.mubr.f32.gmra.mxu0 %v1539
        %v1609 = vpop.f32.mrf.mxu0
        %v1610 = vadd.f32 0.0, %v1609
        %v1611 = vpop.f32.mrf.mxu0
        %1612 = vdwg.mxu0
        %1613 = vrot.lane.b32.xlu0 %v1019, 120
        %v1614 = vpop.permute.xlu0 %1613
        %1615 = vrot.lane.b32.xlu0 %v1105, 120
        %v1616 = vpop.permute.xlu0 %1615
        %v1617 = vsel %vm1198, %v1614, 0
        %v1619 = vsel %vm1198, %v1616, 0
        %1621 = vmatprep.subr.mxu0 0.0
        %1622 = vmatpush1.xpose.msra.mxu0 0.0
        %1623 = vmatprep.subr.mxu0 0.0
        %1624 = vmatpush1.xpose.msra.mxu0 0.0
        %1625 = vmatprep.subr.mxu0 0.0
        %1626 = vmatpush1.xpose.msra.mxu0 0.0
        %1627 = vmatprep.subr.mxu0 0.0
        %1628 = vmatpush1.xpose.msra.mxu0 0.0
        %1629 = vmatprep.subr.mxu0 0.0
        %1630 = vmatpush1.xpose.msra.mxu0 0.0
        %1631 = vmatprep.subr.mxu0 0.0
        %1632 = vmatpush1.xpose.msra.mxu0 0.0
        %1633 = vmatprep.subr.mxu0 0.0
        %1634 = vmatpush1.xpose.msra.mxu0 0.0
        %1635 = vmatprep.subr.mxu0 0.0
        %1636 = vmatpush1.xpose.msra.mxu0 0.0
        %1637 = vmatprep.subr.mxu0 0.0
        %1638 = vmatpush1.xpose.msra.mxu0 0.0
        %1639 = vmatprep.subr.mxu0 0.0
        %1640 = vmatpush1.xpose.msra.mxu0 0.0
        %1641 = vmatprep.subr.mxu0 0.0
        %1642 = vmatpush1.xpose.msra.mxu0 0.0
        %1643 = vmatprep.subr.mxu0 0.0
        %1644 = vmatpush1.xpose.msra.mxu0 0.0
        %1645 = vmatprep.subr.mxu0 0.0
        %1646 = vmatpush1.xpose.msra.mxu0 0.0
        %1647 = vmatprep.subr.mxu0 0.0
        %1648 = vmatpush1.xpose.msra.mxu0 0.0
        %1649 = vmatprep.subr.mxu0 0.0
        %1650 = vmatpush1.xpose.msra.mxu0 0.0
        %1651 = vmatprep.subr.mxu0 0.0
        %1652 = vmatpush1.xpose.msra.mxu0 %v1619
        %1653 = vmatprep.subr.mxu0 0.0
        %1654 = vmatpush2.xpose.msra.mxu0 0.0
        %1655 = vmatprep.subr.mxu0 0.0
        %1656 = vmatpush2.xpose.msra.mxu0 0.0
        %1657 = vmatprep.subr.mxu0 0.0
        %1658 = vmatpush2.xpose.msra.mxu0 0.0
        %1659 = vmatprep.subr.mxu0 0.0
        %1660 = vmatpush2.xpose.msra.mxu0 0.0
        %1661 = vmatprep.subr.mxu0 0.0
        %1662 = vmatpush2.xpose.msra.mxu0 0.0
        %1663 = vmatprep.subr.mxu0 0.0
        %1664 = vmatpush2.xpose.msra.mxu0 0.0
        %1665 = vmatprep.subr.mxu0 0.0
        %1666 = vmatpush2.xpose.msra.mxu0 0.0
        %1667 = vmatprep.subr.mxu0 0.0
        %1668 = vmatpush2.xpose.msra.mxu0 0.0
        %1669 = vmatprep.subr.mxu0 0.0
        %1670 = vmatpush2.xpose.msra.mxu0 0.0
        %1671 = vmatprep.subr.mxu0 0.0
        %1672 = vmatpush2.xpose.msra.mxu0 0.0
        %1673 = vmatprep.subr.mxu0 0.0
        %1674 = vmatpush2.xpose.msra.mxu0 0.0
        %1675 = vmatprep.subr.mxu0 0.0
        %1676 = vmatpush2.xpose.msra.mxu0 0.0
        %1677 = vmatprep.subr.mxu0 0.0
        %1678 = vmatpush2.xpose.msra.mxu0 0.0
        %1679 = vmatprep.subr.mxu0 0.0
        %1680 = vmatpush2.xpose.msra.mxu0 0.0
        %1681 = vmatprep.subr.mxu0 0.0
        %1682 = vmatpush2.xpose.msra.mxu0 0.0
        %1683 = vmatprep.subr.mxu0 0.0
        %1684 = vmatpush2.xpose.msra.mxu0 0.0
        %1685 = vmatprep.mubr.f32.mxu0 0.0
        %1686 = vmatmul.mubr.f32.gmra.mxu0 %v1617
        %v1687 = vpop.f32.mrf.mxu0
        %v1688 = vadd.f32 0.0, %v1687
        %v1689 = vpop.f32.mrf.mxu0
        %1690 = vdwg.mxu0
        %v1691 = vmul.f32 %v1610, 0.35355338
        %v1692 = vmul.f32 %v1688, 0.35355338
        %v1693 = vadd.f32 %v1691, %v1358
        %v1694 = vadd.f32 %v1692, %v1362
        %v1695 = vsel %vm1198, %v1693, -inf
        %1696 = vmax.xlane.f32.xlu0 %v1695
        %v1697 = vpop.xlane.xlu0 %1696
        %v1698 = vsel %vm1198, %v1694, -inf
        %1699 = vmax.xlane.f32.xlu0 %v1698
        %v1700 = vpop.xlane.xlu0 %1699
        %v1701 = vsub.f32 %v1693, %v1697
        %v1702 = vsub.f32 %v1694, %v1700
        %v1703 = vmul.f32 %v1701, 1.442695
        %v1704 = vpow.pop %v1703
        %v1705 = vmul.f32 %v1702, 1.442695
        %v1706 = vpow.pop %v1705
        %v1707 = vsel %vm1198, %v1704, 0.0
        %1708 = vadd.xlane.f32.xlu0 %v1707
        %v1709 = vpop.xlane.xlu0 %1708
        %v1710 = vsel %vm1198, %v1706, 0.0
        %1711 = vadd.xlane.f32.xlu0 %v1710
        %v1712 = vpop.xlane.xlu0 %1711
        %v1713 = vrcp.pop %v1709
        %v1714 = vrcp.pop %v1712
        %v1715 = vmul.f32 %v1704, %v1713
        %v1716 = vmul.f32 %v1706, %v1714
        %1718 = vrot.lane.b32.xlu0 %v1186, 120
        %v1719 = vpop.permute.xlu0 %1718
        %v1722 = vsel %vm1198, %v1715, 0
        %1724 = vmatprep.subr.mxu0 0.0
        %1725 = vmatpush1.msra.mxu0 0.0
        %1726 = vmatprep.subr.mxu0 0.0
        %1727 = vmatpush1.msra.mxu0 0.0
        %1728 = vmatprep.subr.mxu0 0.0
        %1729 = vmatpush1.msra.mxu0 0.0
        %1730 = vmatprep.subr.mxu0 0.0
        %1731 = vmatpush1.msra.mxu0 0.0
        %1732 = vmatprep.subr.mxu0 0.0
        %1733 = vmatpush1.msra.mxu0 0.0
        %1734 = vmatprep.subr.mxu0 0.0
        %1735 = vmatpush1.msra.mxu0 0.0
        %1736 = vmatprep.subr.mxu0 0.0
        %1737 = vmatpush1.msra.mxu0 0.0
        %1738 = vmatprep.subr.mxu0 0.0
        %1739 = vmatpush1.msra.mxu0 0.0
        %1740 = vmatprep.subr.mxu0 0.0
        %1741 = vmatpush1.msra.mxu0 0.0
        %1742 = vmatprep.subr.mxu0 0.0
        %1743 = vmatpush1.msra.mxu0 0.0
        %1744 = vmatprep.subr.mxu0 0.0
        %1745 = vmatpush1.msra.mxu0 0.0
        %1746 = vmatprep.subr.mxu0 0.0
        %1747 = vmatpush1.msra.mxu0 0.0
        %1748 = vmatprep.subr.mxu0 0.0
        %1749 = vmatpush1.msra.mxu0 0.0
        %1750 = vmatprep.subr.mxu0 0.0
        %1751 = vmatpush1.msra.mxu0 0.0
        %1752 = vmatprep.subr.mxu0 0.0
        %1753 = vmatpush1.msra.mxu0 0.0
        %1754 = vmatprep.subr.mxu0 0.0
        %1755 = vmatpush1.msra.mxu0 %v1719
        %1756 = vmatprep.subr.mxu0 0.0
        %1757 = vmatpush2.msra.mxu0 0.0
        %1758 = vmatprep.subr.mxu0 0.0
        %1759 = vmatpush2.msra.mxu0 0.0
        %1760 = vmatprep.subr.mxu0 0.0
        %1761 = vmatpush2.msra.mxu0 0.0
        %1762 = vmatprep.subr.mxu0 0.0
        %1763 = vmatpush2.msra.mxu0 0.0
        %1764 = vmatprep.subr.mxu0 0.0
        %1765 = vmatpush2.msra.mxu0 0.0
        %1766 = vmatprep.subr.mxu0 0.0
        %1767 = vmatpush2.msra.mxu0 0.0
        %1768 = vmatprep.subr.mxu0 0.0
        %1769 = vmatpush2.msra.mxu0 0.0
        %1770 = vmatprep.subr.mxu0 0.0
        %1771 = vmatpush2.msra.mxu0 0.0
        %1772 = vmatprep.subr.mxu0 0.0
        %1773 = vmatpush2.msra.mxu0 0.0
        %1774 = vmatprep.subr.mxu0 0.0
        %1775 = vmatpush2.msra.mxu0 0.0
        %1776 = vmatprep.subr.mxu0 0.0
        %1777 = vmatpush2.msra.mxu0 0.0
        %1778 = vmatprep.subr.mxu0 0.0
        %1779 = vmatpush2.msra.mxu0 0.0
        %1780 = vmatprep.subr.mxu0 0.0
        %1781 = vmatpush2.msra.mxu0 0.0
        %1782 = vmatprep.subr.mxu0 0.0
        %1783 = vmatpush2.msra.mxu0 0.0
        %1784 = vmatprep.subr.mxu0 0.0
        %1785 = vmatpush2.msra.mxu0 0.0
        %1786 = vmatprep.subr.mxu0 0.0
        %1787 = vmatpush2.msra.mxu0 0.0
        %1788 = vmatprep.mubr.f32.mxu0 0.0
        %1789 = vmatmul.mubr.f32.gmra.mxu0 %v1722
        %v1790 = vpop.f32.mrf.mxu0
        %v1791 = vadd.f32 0.0, %v1790
        %v1792 = vpop.f32.mrf.mxu0
        %1793 = vdwg.mxu0
        %1795 = vrot.lane.b32.xlu0 %v1191, 120
        %v1796 = vpop.permute.xlu0 %1795
        %v1799 = vsel %vm1198, %v1716, 0
        %1801 = vmatprep.subr.mxu0 0.0
        %1802 = vmatpush1.msra.mxu0 0.0
        %1803 = vmatprep.subr.mxu0 0.0
        %1804 = vmatpush1.msra.mxu0 0.0
        %1805 = vmatprep.subr.mxu0 0.0
        %1806 = vmatpush1.msra.mxu0 0.0
        %1807 = vmatprep.subr.mxu0 0.0
        %1808 = vmatpush1.msra.mxu0 0.0
        %1809 = vmatprep.subr.mxu0 0.0
        %1810 = vmatpush1.msra.mxu0 0.0
        %1811 = vmatprep.subr.mxu0 0.0
        %1812 = vmatpush1.msra.mxu0 0.0
        %1813 = vmatprep.subr.mxu0 0.0
        %1814 = vmatpush1.msra.mxu0 0.0
        %1815 = vmatprep.subr.mxu0 0.0
        %1816 = vmatpush1.msra.mxu0 0.0
        %1817 = vmatprep.subr.mxu0 0.0
        %1818 = vmatpush1.msra.mxu0 0.0
        %1819 = vmatprep.subr.mxu0 0.0
        %1820 = vmatpush1.msra.mxu0 0.0
        %1821 = vmatprep.subr.mxu0 0.0
        %1822 = vmatpush1.msra.mxu0 0.0
        %1823 = vmatprep.subr.mxu0 0.0
        %1824 = vmatpush1.msra.mxu0 0.0
        %1825 = vmatprep.subr.mxu0 0.0
        %1826 = vmatpush1.msra.mxu0 0.0
        %1827 = vmatprep.subr.mxu0 0.0
        %1828 = vmatpush1.msra.mxu0 0.0
        %1829 = vmatprep.subr.mxu0 0.0
        %1830 = vmatpush1.msra.mxu0 0.0
        %1831 = vmatprep.subr.mxu0 0.0
        %1832 = vmatpush1.msra.mxu0 %v1796
        %1833 = vmatprep.subr.mxu0 0.0
        %1834 = vmatpush2.msra.mxu0 0.0
        %1835 = vmatprep.subr.mxu0 0.0
        %1836 = vmatpush2.msra.mxu0 0.0
        %1837 = vmatprep.subr.mxu0 0.0
        %1838 = vmatpush2.msra.mxu0 0.0
        %1839 = vmatprep.subr.mxu0 0.0
        %1840 = vmatpush2.msra.mxu0 0.0
        %1841 = vmatprep.subr.mxu0 0.0
        %1842 = vmatpush2.msra.mxu0 0.0
        %1843 = vmatprep.subr.mxu0 0.0
        %1844 = vmatpush2.msra.mxu0 0.0
        %1845 = vmatprep.subr.mxu0 0.0
        %1846 = vmatpush2.msra.mxu0 0.0
        %1847 = vmatprep.subr.mxu0 0.0
        %1848 = vmatpush2.msra.mxu0 0.0
        %1849 = vmatprep.subr.mxu0 0.0
        %1850 = vmatpush2.msra.mxu0 0.0
        %1851 = vmatprep.subr.mxu0 0.0
        %1852 = vmatpush2.msra.mxu0 0.0
        %1853 = vmatprep.subr.mxu0 0.0
        %1854 = vmatpush2.msra.mxu0 0.0
        %1855 = vmatprep.subr.mxu0 0.0
        %1856 = vmatpush2.msra.mxu0 0.0
        %1857 = vmatprep.subr.mxu0 0.0
        %1858 = vmatpush2.msra.mxu0 0.0
        %1859 = vmatprep.subr.mxu0 0.0
        %1860 = vmatpush2.msra.mxu0 0.0
        %1861 = vmatprep.subr.mxu0 0.0
        %1862 = vmatpush2.msra.mxu0 0.0
        %1863 = vmatprep.subr.mxu0 0.0
        %1864 = vmatpush2.msra.mxu0 0.0
        %1865 = vmatprep.mubr.f32.mxu0 0.0
        %1866 = vmatmul.mubr.f32.gmra.mxu0 %v1799
        %v1867 = vpop.f32.mrf.mxu0
        %v1868 = vadd.f32 0.0, %v1867
        %v1869 = vpop.f32.mrf.mxu0
        %1870 = vdwg.mxu0
        %v1872 = vsel %vm1198, %v1791, 0
        %v1875 = vsel %vm1198, %v1868, 0
        %1877 = vmatprep.subr.mxu0 0.0
        %1878 = vmatpush1.msra.mxu0 0.0
        %1879 = vmatprep.subr.mxu0 0.0
        %1880 = vmatpush1.msra.mxu0 0.0
        %1881 = vmatprep.subr.mxu0 0.0
        %1882 = vmatpush1.msra.mxu0 0.0
        %1883 = vmatprep.subr.mxu0 0.0
        %1884 = vmatpush1.msra.mxu0 0.0
        %1885 = vmatprep.subr.mxu0 0.0
        %1886 = vmatpush1.msra.mxu0 0.0
        %1887 = vmatprep.subr.mxu0 0.0
        %1888 = vmatpush1.msra.mxu0 0.0
        %1889 = vmatprep.subr.mxu0 0.0
        %1890 = vmatpush1.msra.mxu0 0.0
        %1891 = vmatprep.subr.mxu0 0.0
        %1892 = vmatpush1.msra.mxu0 0.0
        %1893 = vmatprep.subr.mxu0 0.0
        %1894 = vmatpush1.msra.mxu0 0.0
        %1895 = vmatprep.subr.mxu0 0.0
        %1896 = vmatpush1.msra.mxu0 0.0
        %1897 = vmatprep.subr.mxu0 0.0
        %1898 = vmatpush1.msra.mxu0 0.0
        %1899 = vmatprep.subr.mxu0 0.0
        %1900 = vmatpush1.msra.mxu0 0.0
        %1901 = vmatprep.subr.mxu0 0.0
        %1902 = vmatpush1.msra.mxu0 0.0
        %1903 = vmatprep.subr.mxu0 0.0
        %1904 = vmatpush1.msra.mxu0 0.0
        %1905 = vmatprep.subr.mxu0 0.0
        %1906 = vmatpush1.msra.mxu0 0.0
        %1907 = vmatprep.subr.mxu0 0.0
        %1908 = vmatpush1.msra.mxu0 %v1195
        %1909 = vmatprep.subr.mxu0 0.0
        %1910 = vmatpush2.msra.mxu0 0.0
        %1911 = vmatprep.subr.mxu0 0.0
        %1912 = vmatpush2.msra.mxu0 0.0
        %1913 = vmatprep.subr.mxu0 0.0
        %1914 = vmatpush2.msra.mxu0 0.0
        %1915 = vmatprep.subr.mxu0 0.0
        %1916 = vmatpush2.msra.mxu0 0.0
        %1917 = vmatprep.subr.mxu0 0.0
        %1918 = vmatpush2.msra.mxu0 0.0
        %1919 = vmatprep.subr.mxu0 0.0
        %1920 = vmatpush2.msra.mxu0 0.0
        %1921 = vmatprep.subr.mxu0 0.0
        %1922 = vmatpush2.msra.mxu0 0.0
        %1923 = vmatprep.subr.mxu0 0.0
        %1924 = vmatpush2.msra.mxu0 0.0
        %1925 = vmatprep.subr.mxu0 0.0
        %1926 = vmatpush2.msra.mxu0 0.0
        %1927 = vmatprep.subr.mxu0 0.0
        %1928 = vmatpush2.msra.mxu0 0.0
        %1929 = vmatprep.subr.mxu0 0.0
        %1930 = vmatpush2.msra.mxu0 0.0
        %1931 = vmatprep.subr.mxu0 0.0
        %1932 = vmatpush2.msra.mxu0 0.0
        %1933 = vmatprep.subr.mxu0 0.0
        %1934 = vmatpush2.msra.mxu0 0.0
        %1935 = vmatprep.subr.mxu0 0.0
        %1936 = vmatpush2.msra.mxu0 0.0
        %1937 = vmatprep.subr.mxu0 0.0
        %1938 = vmatpush2.msra.mxu0 0.0
        %1939 = vmatprep.subr.mxu0 0.0
        %1940 = vmatpush2.msra.mxu0 0.0
        %1941 = vmatprep.mubr.f32.mxu0 0.0
        %1942 = vmatmul.mubr.f32.gmra.mxu0 %v1872
        %v1943 = vpop.f32.mrf.mxu0
        %v1944 = vadd.f32 0.0, %v1943
        %v1945 = vpop.f32.mrf.mxu0
        %1946 = vmatprep.mubr.f32.mxu0 0.0
        %1947 = vmatmul.mubr.f32.gmra.mxu0 %v1875
        %v1948 = vpop.f32.mrf.mxu0
        %v1949 = vadd.f32 0.0, %v1948
        %v1950 = vpop.f32.mrf.mxu0
        %1951 = vdwg.mxu0
        %v1953 = vsel %vm1198, %v1459, 0
        %v1956 = vsel %vm1198, %v1532, 0
        %1958 = vmatprep.subr.mxu0 0.0
        %1959 = vmatpush1.msra.mxu0 0.0
        %1960 = vmatprep.subr.mxu0 0.0
        %1961 = vmatpush1.msra.mxu0 0.0
        %1962 = vmatprep.subr.mxu0 0.0
        %1963 = vmatpush1.msra.mxu0 0.0
        %1964 = vmatprep.subr.mxu0 0.0
        %1965 = vmatpush1.msra.mxu0 0.0
        %1966 = vmatprep.subr.mxu0 0.0
        %1967 = vmatpush1.msra.mxu0 0.0
        %1968 = vmatprep.subr.mxu0 0.0
        %1969 = vmatpush1.msra.mxu0 0.0
        %1970 = vmatprep.subr.mxu0 0.0
        %1971 = vmatpush1.msra.mxu0 0.0
        %1972 = vmatprep.subr.mxu0 0.0
        %1973 = vmatpush1.msra.mxu0 0.0
        %1974 = vmatprep.subr.mxu0 0.0
        %1975 = vmatpush1.msra.mxu0 0.0
        %1976 = vmatprep.subr.mxu0 0.0
        %1977 = vmatpush1.msra.mxu0 0.0
        %1978 = vmatprep.subr.mxu0 0.0
        %1979 = vmatpush1.msra.mxu0 0.0
        %1980 = vmatprep.subr.mxu0 0.0
        %1981 = vmatpush1.msra.mxu0 0.0
        %1982 = vmatprep.subr.mxu0 0.0
        %1983 = vmatpush1.msra.mxu0 0.0
        %1984 = vmatprep.subr.mxu0 0.0
        %1985 = vmatpush1.msra.mxu0 0.0
        %1986 = vmatprep.subr.mxu0 0.0
        %1987 = vmatpush1.msra.mxu0 0.0
        %1988 = vmatprep.subr.mxu0 0.0
        %1989 = vmatpush1.msra.mxu0 %v1194
        %1990 = vmatprep.subr.mxu0 0.0
        %1991 = vmatpush2.msra.mxu0 0.0
        %1992 = vmatprep.subr.mxu0 0.0
        %1993 = vmatpush2.msra.mxu0 0.0
        %1994 = vmatprep.subr.mxu0 0.0
        %1995 = vmatpush2.msra.mxu0 0.0
        %1996 = vmatprep.subr.mxu0 0.0
        %1997 = vmatpush2.msra.mxu0 0.0
        %1998 = vmatprep.subr.mxu0 0.0
        %1999 = vmatpush2.msra.mxu0 0.0
        %2000 = vmatprep.subr.mxu0 0.0
        %2001 = vmatpush2.msra.mxu0 0.0
        %2002 = vmatprep.subr.mxu0 0.0
        %2003 = vmatpush2.msra.mxu0 0.0
        %2004 = vmatprep.subr.mxu0 0.0
        %2005 = vmatpush2.msra.mxu0 0.0
        %2006 = vmatprep.subr.mxu0 0.0
        %2007 = vmatpush2.msra.mxu0 0.0
        %2008 = vmatprep.subr.mxu0 0.0
        %2009 = vmatpush2.msra.mxu0 0.0
        %2010 = vmatprep.subr.mxu0 0.0
        %2011 = vmatpush2.msra.mxu0 0.0
        %2012 = vmatprep.subr.mxu0 0.0
        %2013 = vmatpush2.msra.mxu0 0.0
        %2014 = vmatprep.subr.mxu0 0.0
        %2015 = vmatpush2.msra.mxu0 0.0
        %2016 = vmatprep.subr.mxu0 0.0
        %2017 = vmatpush2.msra.mxu0 0.0
        %2018 = vmatprep.subr.mxu0 0.0
        %2019 = vmatpush2.msra.mxu0 0.0
        %2020 = vmatprep.subr.mxu0 0.0
        %2021 = vmatpush2.msra.mxu0 0.0
        %2022 = vmatprep.mubr.f32.mxu0 0.0
        %2023 = vmatmul.mubr.f32.gmra.mxu0 %v1953
        %v2024 = vpop.f32.mrf.mxu0
        %v2025 = vadd.f32 %v1944, %v2024
        %v2026 = vpop.f32.mrf.mxu0
        %2027 = vmatprep.mubr.f32.mxu0 0.0
        %2028 = vmatmul.mubr.f32.gmra.mxu0 %v1956
        %v2029 = vpop.f32.mrf.mxu0
        %v2030 = vadd.f32 %v1949, %v2029
        %v2031 = vpop.f32.mrf.mxu0
        %2032 = vdwg.mxu0
        %2033 = vrot.lane.b32.xlu0 %v1014, 112
        %v2034 = vpop.permute.xlu0 %2033
        %2035 = vrot.lane.b32.xlu0 %v1100, 112
        %v2036 = vpop.permute.xlu0 %2035
        %v2037 = vsel %vm1198, %v2034, 0
        %v2039 = vsel %vm1198, %v2036, 0
        %2041 = vmatprep.subr.mxu0 0.0
        %2042 = vmatpush1.xpose.msra.mxu0 0.0
        %2043 = vmatprep.subr.mxu0 0.0
        %2044 = vmatpush1.xpose.msra.mxu0 0.0
        %2045 = vmatprep.subr.mxu0 0.0
        %2046 = vmatpush1.xpose.msra.mxu0 0.0
        %2047 = vmatprep.subr.mxu0 0.0
        %2048 = vmatpush1.xpose.msra.mxu0 0.0
        %2049 = vmatprep.subr.mxu0 0.0
        %2050 = vmatpush1.xpose.msra.mxu0 0.0
        %2051 = vmatprep.subr.mxu0 0.0
        %2052 = vmatpush1.xpose.msra.mxu0 0.0
        %2053 = vmatprep.subr.mxu0 0.0
        %2054 = vmatpush1.xpose.msra.mxu0 0.0
        %2055 = vmatprep.subr.mxu0 0.0
        %2056 = vmatpush1.xpose.msra.mxu0 0.0
        %2057 = vmatprep.subr.mxu0 0.0
        %2058 = vmatpush1.xpose.msra.mxu0 0.0
        %2059 = vmatprep.subr.mxu0 0.0
        %2060 = vmatpush1.xpose.msra.mxu0 0.0
        %2061 = vmatprep.subr.mxu0 0.0
        %2062 = vmatpush1.xpose.msra.mxu0 0.0
        %2063 = vmatprep.subr.mxu0 0.0
        %2064 = vmatpush1.xpose.msra.mxu0 0.0
        %2065 = vmatprep.subr.mxu0 0.0
        %2066 = vmatpush1.xpose.msra.mxu0 0.0
        %2067 = vmatprep.subr.mxu0 0.0
        %2068 = vmatpush1.xpose.msra.mxu0 0.0
        %2069 = vmatprep.subr.mxu0 0.0
        %2070 = vmatpush1.xpose.msra.mxu0 0.0
        %2071 = vmatprep.subr.mxu0 0.0
        %2072 = vmatpush1.xpose.msra.mxu0 %v2039
        %2073 = vmatprep.subr.mxu0 0.0
        %2074 = vmatpush2.xpose.msra.mxu0 0.0
        %2075 = vmatprep.subr.mxu0 0.0
        %2076 = vmatpush2.xpose.msra.mxu0 0.0
        %2077 = vmatprep.subr.mxu0 0.0
        %2078 = vmatpush2.xpose.msra.mxu0 0.0
        %2079 = vmatprep.subr.mxu0 0.0
        %2080 = vmatpush2.xpose.msra.mxu0 0.0
        %2081 = vmatprep.subr.mxu0 0.0
        %2082 = vmatpush2.xpose.msra.mxu0 0.0
        %2083 = vmatprep.subr.mxu0 0.0
        %2084 = vmatpush2.xpose.msra.mxu0 0.0
        %2085 = vmatprep.subr.mxu0 0.0
        %2086 = vmatpush2.xpose.msra.mxu0 0.0
        %2087 = vmatprep.subr.mxu0 0.0
        %2088 = vmatpush2.xpose.msra.mxu0 0.0
        %2089 = vmatprep.subr.mxu0 0.0
        %2090 = vmatpush2.xpose.msra.mxu0 0.0
        %2091 = vmatprep.subr.mxu0 0.0
        %2092 = vmatpush2.xpose.msra.mxu0 0.0
        %2093 = vmatprep.subr.mxu0 0.0
        %2094 = vmatpush2.xpose.msra.mxu0 0.0
        %2095 = vmatprep.subr.mxu0 0.0
        %2096 = vmatpush2.xpose.msra.mxu0 0.0
        %2097 = vmatprep.subr.mxu0 0.0
        %2098 = vmatpush2.xpose.msra.mxu0 0.0
        %2099 = vmatprep.subr.mxu0 0.0
        %2100 = vmatpush2.xpose.msra.mxu0 0.0
        %2101 = vmatprep.subr.mxu0 0.0
        %2102 = vmatpush2.xpose.msra.mxu0 0.0
        %2103 = vmatprep.subr.mxu0 0.0
        %2104 = vmatpush2.xpose.msra.mxu0 0.0
        %2105 = vmatprep.mubr.f32.mxu0 0.0
        %2106 = vmatmul.mubr.f32.gmra.mxu0 %v2037
        %v2107 = vpop.f32.mrf.mxu0
        %v2108 = vadd.f32 0.0, %v2107
        %v2109 = vpop.f32.mrf.mxu0
        %2110 = vdwg.mxu0
        %2111 = vrot.lane.b32.xlu0 %v1019, 112
        %v2112 = vpop.permute.xlu0 %2111
        %2113 = vrot.lane.b32.xlu0 %v1105, 112
        %v2114 = vpop.permute.xlu0 %2113
        %v2115 = vsel %vm1198, %v2112, 0
        %v2117 = vsel %vm1198, %v2114, 0
        %2119 = vmatprep.subr.mxu0 0.0
        %2120 = vmatpush1.xpose.msra.mxu0 0.0
        %2121 = vmatprep.subr.mxu0 0.0
        %2122 = vmatpush1.xpose.msra.mxu0 0.0
        %2123 = vmatprep.subr.mxu0 0.0
        %2124 = vmatpush1.xpose.msra.mxu0 0.0
        %2125 = vmatprep.subr.mxu0 0.0
        %2126 = vmatpush1.xpose.msra.mxu0 0.0
        %2127 = vmatprep.subr.mxu0 0.0
        %2128 = vmatpush1.xpose.msra.mxu0 0.0
        %2129 = vmatprep.subr.mxu0 0.0
        %2130 = vmatpush1.xpose.msra.mxu0 0.0
        %2131 = vmatprep.subr.mxu0 0.0
        %2132 = vmatpush1.xpose.msra.mxu0 0.0
        %2133 = vmatprep.subr.mxu0 0.0
        %2134 = vmatpush1.xpose.msra.mxu0 0.0
        %2135 = vmatprep.subr.mxu0 0.0
        %2136 = vmatpush1.xpose.msra.mxu0 0.0
        %2137 = vmatprep.subr.mxu0 0.0
        %2138 = vmatpush1.xpose.msra.mxu0 0.0
        %2139 = vmatprep.subr.mxu0 0.0
        %2140 = vmatpush1.xpose.msra.mxu0 0.0
        %2141 = vmatprep.subr.mxu0 0.0
        %2142 = vmatpush1.xpose.msra.mxu0 0.0
        %2143 = vmatprep.subr.mxu0 0.0
        %2144 = vmatpush1.xpose.msra.mxu0 0.0
        %2145 = vmatprep.subr.mxu0 0.0
        %2146 = vmatpush1.xpose.msra.mxu0 0.0
        %2147 = vmatprep.subr.mxu0 0.0
        %2148 = vmatpush1.xpose.msra.mxu0 0.0
        %2149 = vmatprep.subr.mxu0 0.0
        %2150 = vmatpush1.xpose.msra.mxu0 %v2117
        %2151 = vmatprep.subr.mxu0 0.0
        %2152 = vmatpush2.xpose.msra.mxu0 0.0
        %2153 = vmatprep.subr.mxu0 0.0
        %2154 = vmatpush2.xpose.msra.mxu0 0.0
        %2155 = vmatprep.subr.mxu0 0.0
        %2156 = vmatpush2.xpose.msra.mxu0 0.0
        %2157 = vmatprep.subr.mxu0 0.0
        %2158 = vmatpush2.xpose.msra.mxu0 0.0
        %2159 = vmatprep.subr.mxu0 0.0
        %2160 = vmatpush2.xpose.msra.mxu0 0.0
        %2161 = vmatprep.subr.mxu0 0.0
        %2162 = vmatpush2.xpose.msra.mxu0 0.0
        %2163 = vmatprep.subr.mxu0 0.0
        %2164 = vmatpush2.xpose.msra.mxu0 0.0
        %2165 = vmatprep.subr.mxu0 0.0
        %2166 = vmatpush2.xpose.msra.mxu0 0.0
        %2167 = vmatprep.subr.mxu0 0.0
        %2168 = vmatpush2.xpose.msra.mxu0 0.0
        %2169 = vmatprep.subr.mxu0 0.0
        %2170 = vmatpush2.xpose.msra.mxu0 0.0
        %2171 = vmatprep.subr.mxu0 0.0
        %2172 = vmatpush2.xpose.msra.mxu0 0.0
        %2173 = vmatprep.subr.mxu0 0.0
        %2174 = vmatpush2.xpose.msra.mxu0 0.0
        %2175 = vmatprep.subr.mxu0 0.0
        %2176 = vmatpush2.xpose.msra.mxu0 0.0
        %2177 = vmatprep.subr.mxu0 0.0
        %2178 = vmatpush2.xpose.msra.mxu0 0.0
        %2179 = vmatprep.subr.mxu0 0.0
        %2180 = vmatpush2.xpose.msra.mxu0 0.0
        %2181 = vmatprep.subr.mxu0 0.0
        %2182 = vmatpush2.xpose.msra.mxu0 0.0
        %2183 = vmatprep.mubr.f32.mxu0 0.0
        %2184 = vmatmul.mubr.f32.gmra.mxu0 %v2115
        %v2185 = vpop.f32.mrf.mxu0
        %v2186 = vadd.f32 0.0, %v2185
        %v2187 = vpop.f32.mrf.mxu0
        %2188 = vdwg.mxu0
        %v2189 = vmul.f32 %v2108, 0.35355338
        %v2190 = vmul.f32 %v2186, 0.35355338
        %v2191 = vadd.f32 %v2189, %v1358
        %v2192 = vadd.f32 %v2190, %v1362
        %v2193 = vsel %vm1198, %v2191, -inf
        %2194 = vmax.xlane.f32.xlu0 %v2193
        %v2195 = vpop.xlane.xlu0 %2194
        %v2196 = vsel %vm1198, %v2192, -inf
        %2197 = vmax.xlane.f32.xlu0 %v2196
        %v2198 = vpop.xlane.xlu0 %2197
        %v2199 = vsub.f32 %v2191, %v2195
        %v2200 = vsub.f32 %v2192, %v2198
        %v2201 = vmul.f32 %v2199, 1.442695
        %v2202 = vpow.pop %v2201
        %v2203 = vmul.f32 %v2200, 1.442695
        %v2204 = vpow.pop %v2203
        %v2205 = vsel %vm1198, %v2202, 0.0
        %2206 = vadd.xlane.f32.xlu0 %v2205
        %v2207 = vpop.xlane.xlu0 %2206
        %v2208 = vsel %vm1198, %v2204, 0.0
        %2209 = vadd.xlane.f32.xlu0 %v2208
        %v2210 = vpop.xlane.xlu0 %2209
        %v2211 = vrcp.pop %v2207
        %v2212 = vrcp.pop %v2210
        %v2213 = vmul.f32 %v2202, %v2211
        %v2214 = vmul.f32 %v2204, %v2212
        %2215 = vrot.lane.b32.xlu0 %v1186, 112
        %v2216 = vpop.permute.xlu0 %2215
        %v2219 = vsel %vm1198, %v2213, 0
        %2221 = vmatprep.subr.mxu0 0.0
        %2222 = vmatpush1.msra.mxu0 0.0
        %2223 = vmatprep.subr.mxu0 0.0
        %2224 = vmatpush1.msra.mxu0 0.0
        %2225 = vmatprep.subr.mxu0 0.0
        %2226 = vmatpush1.msra.mxu0 0.0
        %2227 = vmatprep.subr.mxu0 0.0
        %2228 = vmatpush1.msra.mxu0 0.0
        %2229 = vmatprep.subr.mxu0 0.0
        %2230 = vmatpush1.msra.mxu0 0.0
        %2231 = vmatprep.subr.mxu0 0.0
        %2232 = vmatpush1.msra.mxu0 0.0
        %2233 = vmatprep.subr.mxu0 0.0
        %2234 = vmatpush1.msra.mxu0 0.0
        %2235 = vmatprep.subr.mxu0 0.0
        %2236 = vmatpush1.msra.mxu0 0.0
        %2237 = vmatprep.subr.mxu0 0.0
        %2238 = vmatpush1.msra.mxu0 0.0
        %2239 = vmatprep.subr.mxu0 0.0
        %2240 = vmatpush1.msra.mxu0 0.0
        %2241 = vmatprep.subr.mxu0 0.0
        %2242 = vmatpush1.msra.mxu0 0.0
        %2243 = vmatprep.subr.mxu0 0.0
        %2244 = vmatpush1.msra.mxu0 0.0
        %2245 = vmatprep.subr.mxu0 0.0
        %2246 = vmatpush1.msra.mxu0 0.0
        %2247 = vmatprep.subr.mxu0 0.0
        %2248 = vmatpush1.msra.mxu0 0.0
        %2249 = vmatprep.subr.mxu0 0.0
        %2250 = vmatpush1.msra.mxu0 0.0
        %2251 = vmatprep.subr.mxu0 0.0
        %2252 = vmatpush1.msra.mxu0 %v2216
        %2253 = vmatprep.subr.mxu0 0.0
        %2254 = vmatpush2.msra.mxu0 0.0
        %2255 = vmatprep.subr.mxu0 0.0
        %2256 = vmatpush2.msra.mxu0 0.0
        %2257 = vmatprep.subr.mxu0 0.0
        %2258 = vmatpush2.msra.mxu0 0.0
        %2259 = vmatprep.subr.mxu0 0.0
        %2260 = vmatpush2.msra.mxu0 0.0
        %2261 = vmatprep.subr.mxu0 0.0
        %2262 = vmatpush2.msra.mxu0 0.0
        %2263 = vmatprep.subr.mxu0 0.0
        %2264 = vmatpush2.msra.mxu0 0.0
        %2265 = vmatprep.subr.mxu0 0.0
        %2266 = vmatpush2.msra.mxu0 0.0
        %2267 = vmatprep.subr.mxu0 0.0
        %2268 = vmatpush2.msra.mxu0 0.0
        %2269 = vmatprep.subr.mxu0 0.0
        %2270 = vmatpush2.msra.mxu0 0.0
        %2271 = vmatprep.subr.mxu0 0.0
        %2272 = vmatpush2.msra.mxu0 0.0
        %2273 = vmatprep.subr.mxu0 0.0
        %2274 = vmatpush2.msra.mxu0 0.0
        %2275 = vmatprep.subr.mxu0 0.0
        %2276 = vmatpush2.msra.mxu0 0.0
        %2277 = vmatprep.subr.mxu0 0.0
        %2278 = vmatpush2.msra.mxu0 0.0
        %2279 = vmatprep.subr.mxu0 0.0
        %2280 = vmatpush2.msra.mxu0 0.0
        %2281 = vmatprep.subr.mxu0 0.0
        %2282 = vmatpush2.msra.mxu0 0.0
        %2283 = vmatprep.subr.mxu0 0.0
        %2284 = vmatpush2.msra.mxu0 0.0
        %2285 = vmatprep.mubr.f32.mxu0 0.0
        %2286 = vmatmul.mubr.f32.gmra.mxu0 %v2219
        %v2287 = vpop.f32.mrf.mxu0
        %v2288 = vadd.f32 0.0, %v2287
        %v2289 = vpop.f32.mrf.mxu0
        %2290 = vdwg.mxu0
        %2291 = vrot.lane.b32.xlu0 %v1191, 112
        %v2292 = vpop.permute.xlu0 %2291
        %v2295 = vsel %vm1198, %v2214, 0
        %2297 = vmatprep.subr.mxu0 0.0
        %2298 = vmatpush1.msra.mxu0 0.0
        %2299 = vmatprep.subr.mxu0 0.0
        %2300 = vmatpush1.msra.mxu0 0.0
        %2301 = vmatprep.subr.mxu0 0.0
        %2302 = vmatpush1.msra.mxu0 0.0
        %2303 = vmatprep.subr.mxu0 0.0
        %2304 = vmatpush1.msra.mxu0 0.0
        %2305 = vmatprep.subr.mxu0 0.0
        %2306 = vmatpush1.msra.mxu0 0.0
        %2307 = vmatprep.subr.mxu0 0.0
        %2308 = vmatpush1.msra.mxu0 0.0
        %2309 = vmatprep.subr.mxu0 0.0
        %2310 = vmatpush1.msra.mxu0 0.0
        %2311 = vmatprep.subr.mxu0 0.0
        %2312 = vmatpush1.msra.mxu0 0.0
        %2313 = vmatprep.subr.mxu0 0.0
        %2314 = vmatpush1.msra.mxu0 0.0
        %2315 = vmatprep.subr.mxu0 0.0
        %2316 = vmatpush1.msra.mxu0 0.0
        %2317 = vmatprep.subr.mxu0 0.0
        %2318 = vmatpush1.msra.mxu0 0.0
        %2319 = vmatprep.subr.mxu0 0.0
        %2320 = vmatpush1.msra.mxu0 0.0
        %2321 = vmatprep.subr.mxu0 0.0
        %2322 = vmatpush1.msra.mxu0 0.0
        %2323 = vmatprep.subr.mxu0 0.0
        %2324 = vmatpush1.msra.mxu0 0.0
        %2325 = vmatprep.subr.mxu0 0.0
        %2326 = vmatpush1.msra.mxu0 0.0
        %2327 = vmatprep.subr.mxu0 0.0
        %2328 = vmatpush1.msra.mxu0 %v2292
        %2329 = vmatprep.subr.mxu0 0.0
        %2330 = vmatpush2.msra.mxu0 0.0
        %2331 = vmatprep.subr.mxu0 0.0
        %2332 = vmatpush2.msra.mxu0 0.0
        %2333 = vmatprep.subr.mxu0 0.0
        %2334 = vmatpush2.msra.mxu0 0.0
        %2335 = vmatprep.subr.mxu0 0.0
        %2336 = vmatpush2.msra.mxu0 0.0
        %2337 = vmatprep.subr.mxu0 0.0
        %2338 = vmatpush2.msra.mxu0 0.0
        %2339 = vmatprep.subr.mxu0 0.0
        %2340 = vmatpush2.msra.mxu0 0.0
        %2341 = vmatprep.subr.mxu0 0.0
        %2342 = vmatpush2.msra.mxu0 0.0
        %2343 = vmatprep.subr.mxu0 0.0
        %2344 = vmatpush2.msra.mxu0 0.0
        %2345 = vmatprep.subr.mxu0 0.0
        %2346 = vmatpush2.msra.mxu0 0.0
        %2347 = vmatprep.subr.mxu0 0.0
        %2348 = vmatpush2.msra.mxu0 0.0
        %2349 = vmatprep.subr.mxu0 0.0
        %2350 = vmatpush2.msra.mxu0 0.0
        %2351 = vmatprep.subr.mxu0 0.0
        %2352 = vmatpush2.msra.mxu0 0.0
        %2353 = vmatprep.subr.mxu0 0.0
        %2354 = vmatpush2.msra.mxu0 0.0
        %2355 = vmatprep.subr.mxu0 0.0
        %2356 = vmatpush2.msra.mxu0 0.0
        %2357 = vmatprep.subr.mxu0 0.0
        %2358 = vmatpush2.msra.mxu0 0.0
        %2359 = vmatprep.subr.mxu0 0.0
        %2360 = vmatpush2.msra.mxu0 0.0
        %2361 = vmatprep.mubr.f32.mxu0 0.0
        %2362 = vmatmul.mubr.f32.gmra.mxu0 %v2295
        %v2363 = vpop.f32.mrf.mxu0
        %v2364 = vadd.f32 0.0, %v2363
        %v2365 = vpop.f32.mrf.mxu0
        %2366 = vdwg.mxu0
        %v2368 = vsel %vm1198, %v2288, 0
        %v2371 = vsel %vm1198, %v2364, 0
        %2373 = vmatprep.subr.mxu0 0.0
        %2374 = vmatpush1.msra.mxu0 0.0
        %2375 = vmatprep.subr.mxu0 0.0
        %2376 = vmatpush1.msra.mxu0 0.0
        %2377 = vmatprep.subr.mxu0 0.0
        %2378 = vmatpush1.msra.mxu0 0.0
        %2379 = vmatprep.subr.mxu0 0.0
        %2380 = vmatpush1.msra.mxu0 0.0
        %2381 = vmatprep.subr.mxu0 0.0
        %2382 = vmatpush1.msra.mxu0 0.0
        %2383 = vmatprep.subr.mxu0 0.0
        %2384 = vmatpush1.msra.mxu0 0.0
        %2385 = vmatprep.subr.mxu0 0.0
        %2386 = vmatpush1.msra.mxu0 0.0
        %2387 = vmatprep.subr.mxu0 0.0
        %2388 = vmatpush1.msra.mxu0 0.0
        %2389 = vmatprep.subr.mxu0 0.0
        %2390 = vmatpush1.msra.mxu0 0.0
        %2391 = vmatprep.subr.mxu0 0.0
        %2392 = vmatpush1.msra.mxu0 0.0
        %2393 = vmatprep.subr.mxu0 0.0
        %2394 = vmatpush1.msra.mxu0 0.0
        %2395 = vmatprep.subr.mxu0 0.0
        %2396 = vmatpush1.msra.mxu0 0.0
        %2397 = vmatprep.subr.mxu0 0.0
        %2398 = vmatpush1.msra.mxu0 0.0
        %2399 = vmatprep.subr.mxu0 0.0
        %2400 = vmatpush1.msra.mxu0 0.0
        %2401 = vmatprep.subr.mxu0 0.0
        %2402 = vmatpush1.msra.mxu0 0.0
        %2403 = vmatprep.subr.mxu0 0.0
        %2404 = vmatpush1.msra.mxu0 %v1196
        %2405 = vmatprep.subr.mxu0 0.0
        %2406 = vmatpush2.msra.mxu0 0.0
        %2407 = vmatprep.subr.mxu0 0.0
        %2408 = vmatpush2.msra.mxu0 0.0
        %2409 = vmatprep.subr.mxu0 0.0
        %2410 = vmatpush2.msra.mxu0 0.0
        %2411 = vmatprep.subr.mxu0 0.0
        %2412 = vmatpush2.msra.mxu0 0.0
        %2413 = vmatprep.subr.mxu0 0.0
        %2414 = vmatpush2.msra.mxu0 0.0
        %2415 = vmatprep.subr.mxu0 0.0
        %2416 = vmatpush2.msra.mxu0 0.0
        %2417 = vmatprep.subr.mxu0 0.0
        %2418 = vmatpush2.msra.mxu0 0.0
        %2419 = vmatprep.subr.mxu0 0.0
        %2420 = vmatpush2.msra.mxu0 0.0
        %2421 = vmatprep.subr.mxu0 0.0
        %2422 = vmatpush2.msra.mxu0 0.0
        %2423 = vmatprep.subr.mxu0 0.0
        %2424 = vmatpush2.msra.mxu0 0.0
        %2425 = vmatprep.subr.mxu0 0.0
        %2426 = vmatpush2.msra.mxu0 0.0
        %2427 = vmatprep.subr.mxu0 0.0
        %2428 = vmatpush2.msra.mxu0 0.0
        %2429 = vmatprep.subr.mxu0 0.0
        %2430 = vmatpush2.msra.mxu0 0.0
        %2431 = vmatprep.subr.mxu0 0.0
        %2432 = vmatpush2.msra.mxu0 0.0
        %2433 = vmatprep.subr.mxu0 0.0
        %2434 = vmatpush2.msra.mxu0 0.0
        %2435 = vmatprep.subr.mxu0 0.0
        %2436 = vmatpush2.msra.mxu0 0.0
        %2437 = vmatprep.mubr.f32.mxu0 0.0
        %2438 = vmatmul.mubr.f32.gmra.mxu0 %v2368
        %v2439 = vpop.f32.mrf.mxu0
        %v2440 = vadd.f32 0.0, %v2439
        %v2441 = vpop.f32.mrf.mxu0
        %2442 = vmatprep.mubr.f32.mxu0 0.0
        %2443 = vmatmul.mubr.f32.gmra.mxu0 %v2371
        %v2444 = vpop.f32.mrf.mxu0
        %v2445 = vadd.f32 0.0, %v2444
        %v2446 = vpop.f32.mrf.mxu0
        %2447 = vdwg.mxu0
        %v2448 = vadd.f32 %v2025, %v2440
        %v2449 = vadd.f32 %v2030, %v2445
        %2450 = vrot.lane.b32.xlu0 %v1014, 104
        %v2451 = vpop.permute.xlu0 %2450
        %2452 = vrot.lane.b32.xlu0 %v1100, 104
        %v2453 = vpop.permute.xlu0 %2452
        %v2454 = vsel %vm1198, %v2451, 0
        %v2456 = vsel %vm1198, %v2453, 0
        %2458 = vmatprep.subr.mxu0 0.0
        %2459 = vmatpush1.xpose.msra.mxu0 0.0
        %2460 = vmatprep.subr.mxu0 0.0
        %2461 = vmatpush1.xpose.msra.mxu0 0.0
        %2462 = vmatprep.subr.mxu0 0.0
        %2463 = vmatpush1.xpose.msra.mxu0 0.0
        %2464 = vmatprep.subr.mxu0 0.0
        %2465 = vmatpush1.xpose.msra.mxu0 0.0
        %2466 = vmatprep.subr.mxu0 0.0
        %2467 = vmatpush1.xpose.msra.mxu0 0.0
        %2468 = vmatprep.subr.mxu0 0.0
        %2469 = vmatpush1.xpose.msra.mxu0 0.0
        %2470 = vmatprep.subr.mxu0 0.0
        %2471 = vmatpush1.xpose.msra.mxu0 0.0
        %2472 = vmatprep.subr.mxu0 0.0
        %2473 = vmatpush1.xpose.msra.mxu0 0.0
        %2474 = vmatprep.subr.mxu0 0.0
        %2475 = vmatpush1.xpose.msra.mxu0 0.0
        %2476 = vmatprep.subr.mxu0 0.0
        %2477 = vmatpush1.xpose.msra.mxu0 0.0
        %2478 = vmatprep.subr.mxu0 0.0
        %2479 = vmatpush1.xpose.msra.mxu0 0.0
        %2480 = vmatprep.subr.mxu0 0.0
        %2481 = vmatpush1.xpose.msra.mxu0 0.0
        %2482 = vmatprep.subr.mxu0 0.0
        %2483 = vmatpush1.xpose.msra.mxu0 0.0
        %2484 = vmatprep.subr.mxu0 0.0
        %2485 = vmatpush1.xpose.msra.mxu0 0.0
        %2486 = vmatprep.subr.mxu0 0.0
        %2487 = vmatpush1.xpose.msra.mxu0 0.0
        %2488 = vmatprep.subr.mxu0 0.0
        %2489 = vmatpush1.xpose.msra.mxu0 %v2456
        %2490 = vmatprep.subr.mxu0 0.0
        %2491 = vmatpush2.xpose.msra.mxu0 0.0
        %2492 = vmatprep.subr.mxu0 0.0
        %2493 = vmatpush2.xpose.msra.mxu0 0.0
        %2494 = vmatprep.subr.mxu0 0.0
        %2495 = vmatpush2.xpose.msra.mxu0 0.0
        %2496 = vmatprep.subr.mxu0 0.0
        %2497 = vmatpush2.xpose.msra.mxu0 0.0
        %2498 = vmatprep.subr.mxu0 0.0
        %2499 = vmatpush2.xpose.msra.mxu0 0.0
        %2500 = vmatprep.subr.mxu0 0.0
        %2501 = vmatpush2.xpose.msra.mxu0 0.0
        %2502 = vmatprep.subr.mxu0 0.0
        %2503 = vmatpush2.xpose.msra.mxu0 0.0
        %2504 = vmatprep.subr.mxu0 0.0
        %2505 = vmatpush2.xpose.msra.mxu0 0.0
        %2506 = vmatprep.subr.mxu0 0.0
        %2507 = vmatpush2.xpose.msra.mxu0 0.0
        %2508 = vmatprep.subr.mxu0 0.0
        %2509 = vmatpush2.xpose.msra.mxu0 0.0
        %2510 = vmatprep.subr.mxu0 0.0
        %2511 = vmatpush2.xpose.msra.mxu0 0.0
        %2512 = vmatprep.subr.mxu0 0.0
        %2513 = vmatpush2.xpose.msra.mxu0 0.0
        %2514 = vmatprep.subr.mxu0 0.0
        %2515 = vmatpush2.xpose.msra.mxu0 0.0
        %2516 = vmatprep.subr.mxu0 0.0
        %2517 = vmatpush2.xpose.msra.mxu0 0.0
        %2518 = vmatprep.subr.mxu0 0.0
        %2519 = vmatpush2.xpose.msra.mxu0 0.0
        %2520 = vmatprep.subr.mxu0 0.0
        %2521 = vmatpush2.xpose.msra.mxu0 0.0
        %2522 = vmatprep.mubr.f32.mxu0 0.0
        %2523 = vmatmul.mubr.f32.gmra.mxu0 %v2454
        %v2524 = vpop.f32.mrf.mxu0
        %v2525 = vadd.f32 0.0, %v2524
        %v2526 = vpop.f32.mrf.mxu0
        %2527 = vdwg.mxu0
        %2528 = vrot.lane.b32.xlu0 %v1019, 104
        %v2529 = vpop.permute.xlu0 %2528
        %2530 = vrot.lane.b32.xlu0 %v1105, 104
        %v2531 = vpop.permute.xlu0 %2530
        %v2532 = vsel %vm1198, %v2529, 0
        %v2534 = vsel %vm1198, %v2531, 0
        %2536 = vmatprep.subr.mxu0 0.0
        %2537 = vmatpush1.xpose.msra.mxu0 0.0
        %2538 = vmatprep.subr.mxu0 0.0
        %2539 = vmatpush1.xpose.msra.mxu0 0.0
        %2540 = vmatprep.subr.mxu0 0.0
        %2541 = vmatpush1.xpose.msra.mxu0 0.0
        %2542 = vmatprep.subr.mxu0 0.0
        %2543 = vmatpush1.xpose.msra.mxu0 0.0
        %2544 = vmatprep.subr.mxu0 0.0
        %2545 = vmatpush1.xpose.msra.mxu0 0.0
        %2546 = vmatprep.subr.mxu0 0.0
        %2547 = vmatpush1.xpose.msra.mxu0 0.0
        %2548 = vmatprep.subr.mxu0 0.0
        %2549 = vmatpush1.xpose.msra.mxu0 0.0
        %2550 = vmatprep.subr.mxu0 0.0
        %2551 = vmatpush1.xpose.msra.mxu0 0.0
        %2552 = vmatprep.subr.mxu0 0.0
        %2553 = vmatpush1.xpose.msra.mxu0 0.0
        %2554 = vmatprep.subr.mxu0 0.0
        %2555 = vmatpush1.xpose.msra.mxu0 0.0
        %2556 = vmatprep.subr.mxu0 0.0
        %2557 = vmatpush1.xpose.msra.mxu0 0.0
        %2558 = vmatprep.subr.mxu0 0.0
        %2559 = vmatpush1.xpose.msra.mxu0 0.0
        %2560 = vmatprep.subr.mxu0 0.0
        %2561 = vmatpush1.xpose.msra.mxu0 0.0
        %2562 = vmatprep.subr.mxu0 0.0
        %2563 = vmatpush1.xpose.msra.mxu0 0.0
        %2564 = vmatprep.subr.mxu0 0.0
        %2565 = vmatpush1.xpose.msra.mxu0 0.0
        %2566 = vmatprep.subr.mxu0 0.0
        %2567 = vmatpush1.xpose.msra.mxu0 %v2534
        %2568 = vmatprep.subr.mxu0 0.0
        %2569 = vmatpush2.xpose.msra.mxu0 0.0
        %2570 = vmatprep.subr.mxu0 0.0
        %2571 = vmatpush2.xpose.msra.mxu0 0.0
        %2572 = vmatprep.subr.mxu0 0.0
        %2573 = vmatpush2.xpose.msra.mxu0 0.0
        %2574 = vmatprep.subr.mxu0 0.0
        %2575 = vmatpush2.xpose.msra.mxu0 0.0
        %2576 = vmatprep.subr.mxu0 0.0
        %2577 = vmatpush2.xpose.msra.mxu0 0.0
        %2578 = vmatprep.subr.mxu0 0.0
        %2579 = vmatpush2.xpose.msra.mxu0 0.0
        %2580 = vmatprep.subr.mxu0 0.0
        %2581 = vmatpush2.xpose.msra.mxu0 0.0
        %2582 = vmatprep.subr.mxu0 0.0
        %2583 = vmatpush2.xpose.msra.mxu0 0.0
        %2584 = vmatprep.subr.mxu0 0.0
        %2585 = vmatpush2.xpose.msra.mxu0 0.0
        %2586 = vmatprep.subr.mxu0 0.0
        %2587 = vmatpush2.xpose.msra.mxu0 0.0
        %2588 = vmatprep.subr.mxu0 0.0
        %2589 = vmatpush2.xpose.msra.mxu0 0.0
        %2590 = vmatprep.subr.mxu0 0.0
        %2591 = vmatpush2.xpose.msra.mxu0 0.0
        %2592 = vmatprep.subr.mxu0 0.0
        %2593 = vmatpush2.xpose.msra.mxu0 0.0
        %2594 = vmatprep.subr.mxu0 0.0
        %2595 = vmatpush2.xpose.msra.mxu0 0.0
        %2596 = vmatprep.subr.mxu0 0.0
        %2597 = vmatpush2.xpose.msra.mxu0 0.0
        %2598 = vmatprep.subr.mxu0 0.0
        %2599 = vmatpush2.xpose.msra.mxu0 0.0
        %2600 = vmatprep.mubr.f32.mxu0 0.0
        %2601 = vmatmul.mubr.f32.gmra.mxu0 %v2532
        %v2602 = vpop.f32.mrf.mxu0
        %v2603 = vadd.f32 0.0, %v2602
        %v2604 = vpop.f32.mrf.mxu0
        %2605 = vdwg.mxu0
        %v2606 = vmul.f32 %v2525, 0.35355338
        %v2607 = vmul.f32 %v2603, 0.35355338
        %v2608 = vadd.f32 %v2606, %v1358
        %v2609 = vadd.f32 %v2607, %v1362
        %v2610 = vsel %vm1198, %v2608, -inf
        %2611 = vmax.xlane.f32.xlu0 %v2610
        %v2612 = vpop.xlane.xlu0 %2611
        %v2613 = vsel %vm1198, %v2609, -inf
        %2614 = vmax.xlane.f32.xlu0 %v2613
        %v2615 = vpop.xlane.xlu0 %2614
        %v2616 = vsub.f32 %v2608, %v2612
        %v2617 = vsub.f32 %v2609, %v2615
        %v2618 = vmul.f32 %v2616, 1.442695
        %v2619 = vpow.pop %v2618
        %v2620 = vmul.f32 %v2617, 1.442695
        %v2621 = vpow.pop %v2620
        %v2622 = vsel %vm1198, %v2619, 0.0
        %2623 = vadd.xlane.f32.xlu0 %v2622
        %v2624 = vpop.xlane.xlu0 %2623
        %v2625 = vsel %vm1198, %v2621, 0.0
        %2626 = vadd.xlane.f32.xlu0 %v2625
        %v2627 = vpop.xlane.xlu0 %2626
        %v2628 = vrcp.pop %v2624
        %v2629 = vrcp.pop %v2627
        %v2630 = vmul.f32 %v2619, %v2628
        %v2631 = vmul.f32 %v2621, %v2629
        %2632 = vrot.lane.b32.xlu0 %v1186, 104
        %v2633 = vpop.permute.xlu0 %2632
        %v2636 = vsel %vm1198, %v2630, 0
        %2638 = vmatprep.subr.mxu0 0.0
        %2639 = vmatpush1.msra.mxu0 0.0
        %2640 = vmatprep.subr.mxu0 0.0
        %2641 = vmatpush1.msra.mxu0 0.0
        %2642 = vmatprep.subr.mxu0 0.0
        %2643 = vmatpush1.msra.mxu0 0.0
        %2644 = vmatprep.subr.mxu0 0.0
        %2645 = vmatpush1.msra.mxu0 0.0
        %2646 = vmatprep.subr.mxu0 0.0
        %2647 = vmatpush1.msra.mxu0 0.0
        %2648 = vmatprep.subr.mxu0 0.0
        %2649 = vmatpush1.msra.mxu0 0.0
        %2650 = vmatprep.subr.mxu0 0.0
        %2651 = vmatpush1.msra.mxu0 0.0
        %2652 = vmatprep.subr.mxu0 0.0
        %2653 = vmatpush1.msra.mxu0 0.0
        %2654 = vmatprep.subr.mxu0 0.0
        %2655 = vmatpush1.msra.mxu0 0.0
        %2656 = vmatprep.subr.mxu0 0.0
        %2657 = vmatpush1.msra.mxu0 0.0
        %2658 = vmatprep.subr.mxu0 0.0
        %2659 = vmatpush1.msra.mxu0 0.0
        %2660 = vmatprep.subr.mxu0 0.0
        %2661 = vmatpush1.msra.mxu0 0.0
        %2662 = vmatprep.subr.mxu0 0.0
        %2663 = vmatpush1.msra.mxu0 0.0
        %2664 = vmatprep.subr.mxu0 0.0
        %2665 = vmatpush1.msra.mxu0 0.0
        %2666 = vmatprep.subr.mxu0 0.0
        %2667 = vmatpush1.msra.mxu0 0.0
        %2668 = vmatprep.subr.mxu0 0.0
        %2669 = vmatpush1.msra.mxu0 %v2633
        %2670 = vmatprep.subr.mxu0 0.0
        %2671 = vmatpush2.msra.mxu0 0.0
        %2672 = vmatprep.subr.mxu0 0.0
        %2673 = vmatpush2.msra.mxu0 0.0
        %2674 = vmatprep.subr.mxu0 0.0
        %2675 = vmatpush2.msra.mxu0 0.0
        %2676 = vmatprep.subr.mxu0 0.0
        %2677 = vmatpush2.msra.mxu0 0.0
        %2678 = vmatprep.subr.mxu0 0.0
        %2679 = vmatpush2.msra.mxu0 0.0
        %2680 = vmatprep.subr.mxu0 0.0
        %2681 = vmatpush2.msra.mxu0 0.0
        %2682 = vmatprep.subr.mxu0 0.0
        %2683 = vmatpush2.msra.mxu0 0.0
        %2684 = vmatprep.subr.mxu0 0.0
        %2685 = vmatpush2.msra.mxu0 0.0
        %2686 = vmatprep.subr.mxu0 0.0
        %2687 = vmatpush2.msra.mxu0 0.0
        %2688 = vmatprep.subr.mxu0 0.0
        %2689 = vmatpush2.msra.mxu0 0.0
        %2690 = vmatprep.subr.mxu0 0.0
        %2691 = vmatpush2.msra.mxu0 0.0
        %2692 = vmatprep.subr.mxu0 0.0
        %2693 = vmatpush2.msra.mxu0 0.0
        %2694 = vmatprep.subr.mxu0 0.0
        %2695 = vmatpush2.msra.mxu0 0.0
        %2696 = vmatprep.subr.mxu0 0.0
        %2697 = vmatpush2.msra.mxu0 0.0
        %2698 = vmatprep.subr.mxu0 0.0
        %2699 = vmatpush2.msra.mxu0 0.0
        %2700 = vmatprep.subr.mxu0 0.0
        %2701 = vmatpush2.msra.mxu0 0.0
        %2702 = vmatprep.mubr.f32.mxu0 0.0
        %2703 = vmatmul.mubr.f32.gmra.mxu0 %v2636
        %v2704 = vpop.f32.mrf.mxu0
        %v2705 = vadd.f32 0.0, %v2704
        %v2706 = vpop.f32.mrf.mxu0
        %2707 = vdwg.mxu0
        %2708 = vrot.lane.b32.xlu0 %v1191, 104
        %v2709 = vpop.permute.xlu0 %2708
        %v2712 = vsel %vm1198, %v2631, 0
        %2714 = vmatprep.subr.mxu0 0.0
        %2715 = vmatpush1.msra.mxu0 0.0
        %2716 = vmatprep.subr.mxu0 0.0
        %2717 = vmatpush1.msra.mxu0 0.0
        %2718 = vmatprep.subr.mxu0 0.0
        %2719 = vmatpush1.msra.mxu0 0.0
        %2720 = vmatprep.subr.mxu0 0.0
        %2721 = vmatpush1.msra.mxu0 0.0
        %2722 = vmatprep.subr.mxu0 0.0
        %2723 = vmatpush1.msra.mxu0 0.0
        %2724 = vmatprep.subr.mxu0 0.0
        %2725 = vmatpush1.msra.mxu0 0.0
        %2726 = vmatprep.subr.mxu0 0.0
        %2727 = vmatpush1.msra.mxu0 0.0
        %2728 = vmatprep.subr.mxu0 0.0
        %2729 = vmatpush1.msra.mxu0 0.0
        %2730 = vmatprep.subr.mxu0 0.0
        %2731 = vmatpush1.msra.mxu0 0.0
        %2732 = vmatprep.subr.mxu0 0.0
        %2733 = vmatpush1.msra.mxu0 0.0
        %2734 = vmatprep.subr.mxu0 0.0
        %2735 = vmatpush1.msra.mxu0 0.0
        %2736 = vmatprep.subr.mxu0 0.0
        %2737 = vmatpush1.msra.mxu0 0.0
        %2738 = vmatprep.subr.mxu0 0.0
        %2739 = vmatpush1.msra.mxu0 0.0
        %2740 = vmatprep.subr.mxu0 0.0
        %2741 = vmatpush1.msra.mxu0 0.0
        %2742 = vmatprep.subr.mxu0 0.0
        %2743 = vmatpush1.msra.mxu0 0.0
        %2744 = vmatprep.subr.mxu0 0.0
        %2745 = vmatpush1.msra.mxu0 %v2709
        %2746 = vmatprep.subr.mxu0 0.0
        %2747 = vmatpush2.msra.mxu0 0.0
        %2748 = vmatprep.subr.mxu0 0.0
        %2749 = vmatpush2.msra.mxu0 0.0
        %2750 = vmatprep.subr.mxu0 0.0
        %2751 = vmatpush2.msra.mxu0 0.0
        %2752 = vmatprep.subr.mxu0 0.0
        %2753 = vmatpush2.msra.mxu0 0.0
        %2754 = vmatprep.subr.mxu0 0.0
        %2755 = vmatpush2.msra.mxu0 0.0
        %2756 = vmatprep.subr.mxu0 0.0
        %2757 = vmatpush2.msra.mxu0 0.0
        %2758 = vmatprep.subr.mxu0 0.0
        %2759 = vmatpush2.msra.mxu0 0.0
        %2760 = vmatprep.subr.mxu0 0.0
        %2761 = vmatpush2.msra.mxu0 0.0
        %2762 = vmatprep.subr.mxu0 0.0
        %2763 = vmatpush2.msra.mxu0 0.0
        %2764 = vmatprep.subr.mxu0 0.0
        %2765 = vmatpush2.msra.mxu0 0.0
        %2766 = vmatprep.subr.mxu0 0.0
        %2767 = vmatpush2.msra.mxu0 0.0
        %2768 = vmatprep.subr.mxu0 0.0
        %2769 = vmatpush2.msra.mxu0 0.0
        %2770 = vmatprep.subr.mxu0 0.0
        %2771 = vmatpush2.msra.mxu0 0.0
        %2772 = vmatprep.subr.mxu0 0.0
        %2773 = vmatpush2.msra.mxu0 0.0
        %2774 = vmatprep.subr.mxu0 0.0
        %2775 = vmatpush2.msra.mxu0 0.0
        %2776 = vmatprep.subr.mxu0 0.0
        %2777 = vmatpush2.msra.mxu0 0.0
        %2778 = vmatprep.mubr.f32.mxu0 0.0
        %2779 = vmatmul.mubr.f32.gmra.mxu0 %v2712
        %v2780 = vpop.f32.mrf.mxu0
        %v2781 = vadd.f32 0.0, %v2780
        %v2782 = vpop.f32.mrf.mxu0
        %2783 = vdwg.mxu0
        %v2785 = vsel %vm1198, %v2705, 0
        %v2788 = vsel %vm1198, %v2781, 0
        %2790 = vmatprep.subr.mxu0 0.0
        %2791 = vmatpush1.msra.mxu0 0.0
        %2792 = vmatprep.subr.mxu0 0.0
        %2793 = vmatpush1.msra.mxu0 0.0
        %2794 = vmatprep.subr.mxu0 0.0
        %2795 = vmatpush1.msra.mxu0 0.0
        %2796 = vmatprep.subr.mxu0 0.0
        %2797 = vmatpush1.msra.mxu0 0.0
        %2798 = vmatprep.subr.mxu0 0.0
        %2799 = vmatpush1.msra.mxu0 0.0
        %2800 = vmatprep.subr.mxu0 0.0
        %2801 = vmatpush1.msra.mxu0 0.0
        %2802 = vmatprep.subr.mxu0 0.0
        %2803 = vmatpush1.msra.mxu0 0.0
        %2804 = vmatprep.subr.mxu0 0.0
        %2805 = vmatpush1.msra.mxu0 0.0
        %2806 = vmatprep.subr.mxu0 0.0
        %2807 = vmatpush1.msra.mxu0 0.0
        %2808 = vmatprep.subr.mxu0 0.0
        %2809 = vmatpush1.msra.mxu0 0.0
        %2810 = vmatprep.subr.mxu0 0.0
        %2811 = vmatpush1.msra.mxu0 0.0
        %2812 = vmatprep.subr.mxu0 0.0
        %2813 = vmatpush1.msra.mxu0 0.0
        %2814 = vmatprep.subr.mxu0 0.0
        %2815 = vmatpush1.msra.mxu0 0.0
        %2816 = vmatprep.subr.mxu0 0.0
        %2817 = vmatpush1.msra.mxu0 0.0
        %2818 = vmatprep.subr.mxu0 0.0
        %2819 = vmatpush1.msra.mxu0 0.0
        %2820 = vmatprep.subr.mxu0 0.0
        %2821 = vmatpush1.msra.mxu0 %v1197
        %2822 = vmatprep.subr.mxu0 0.0
        %2823 = vmatpush2.msra.mxu0 0.0
        %2824 = vmatprep.subr.mxu0 0.0
        %2825 = vmatpush2.msra.mxu0 0.0
        %2826 = vmatprep.subr.mxu0 0.0
        %2827 = vmatpush2.msra.mxu0 0.0
        %2828 = vmatprep.subr.mxu0 0.0
        %2829 = vmatpush2.msra.mxu0 0.0
        %2830 = vmatprep.subr.mxu0 0.0
        %2831 = vmatpush2.msra.mxu0 0.0
        %2832 = vmatprep.subr.mxu0 0.0
        %2833 = vmatpush2.msra.mxu0 0.0
        %2834 = vmatprep.subr.mxu0 0.0
        %2835 = vmatpush2.msra.mxu0 0.0
        %2836 = vmatprep.subr.mxu0 0.0
        %2837 = vmatpush2.msra.mxu0 0.0
        %2838 = vmatprep.subr.mxu0 0.0
        %2839 = vmatpush2.msra.mxu0 0.0
        %2840 = vmatprep.subr.mxu0 0.0
        %2841 = vmatpush2.msra.mxu0 0.0
        %2842 = vmatprep.subr.mxu0 0.0
        %2843 = vmatpush2.msra.mxu0 0.0
        %2844 = vmatprep.subr.mxu0 0.0
        %2845 = vmatpush2.msra.mxu0 0.0
        %2846 = vmatprep.subr.mxu0 0.0
        %2847 = vmatpush2.msra.mxu0 0.0
        %2848 = vmatprep.subr.mxu0 0.0
        %2849 = vmatpush2.msra.mxu0 0.0
        %2850 = vmatprep.subr.mxu0 0.0
        %2851 = vmatpush2.msra.mxu0 0.0
        %2852 = vmatprep.subr.mxu0 0.0
        %2853 = vmatpush2.msra.mxu0 0.0
        %2854 = vmatprep.mubr.f32.mxu0 0.0
        %2855 = vmatmul.mubr.f32.gmra.mxu0 %v2785
        %v2856 = vpop.f32.mrf.mxu0
        %v2857 = vadd.f32 0.0, %v2856
        %v2858 = vpop.f32.mrf.mxu0
        %2859 = vmatprep.mubr.f32.mxu0 0.0
        %2860 = vmatmul.mubr.f32.gmra.mxu0 %v2788
        %v2861 = vpop.f32.mrf.mxu0
        %v2862 = vadd.f32 0.0, %v2861
        %v2863 = vpop.f32.mrf.mxu0
        %2864 = vdwg.mxu0
        %v2865 = vadd.f32 %v2448, %v2857
        %v2866 = vadd.f32 %v2449, %v2862
        %2867 = vst.msk [vmem:[%s865] sm:$0xff] %vm1198, %v1387
        %2868 = vst.msk [vmem:[%s865 + $0x8] sm:$0xff] %vm1198, %v1715
        %2869 = vst.msk [vmem:[%s865 + $0x10] sm:$0xff] %vm1198, %v2213
        %2870 = vst.msk [vmem:[%s865 + $0x18] sm:$0xff] %vm1198, %v2630
        %2871 = vst.msk [vmem:[%s865 + $0x20] sm:$0xff] %vm1198, %v1388
        %2872 = vst.msk [vmem:[%s865 + $0x28] sm:$0xff] %vm1198, %v1716
        %2873 = vst.msk [vmem:[%s865 + $0x30] sm:$0xff] %vm1198, %v2214
        %2874 = vst.msk [vmem:[%s865 + $0x38] sm:$0xff] %vm1198, %v2631
        %v2875 = vld [vmem:[%s892] sm:$0x1]
        %v2877 = vlaneseq
        %v2878 = vshrl.u32 %v2877, 7
        %v2879 = vsub.s32 0, %v2878
        %v2880 = vrot.slane %v2875, %v2879
        %v2882 = vadd.f32 %v2865, %v2880
        %v2883 = vadd.f32 %v2866, %v2880
        %v2884 = vadd.f32 %v2882, %v925
        %v2885 = vadd.f32 %v2883, %v926
        %v2886 = vld [vmem:[%s895] sm:$0x1]
        %v2887 = vld [vmem:[%s898] sm:$0x1]
        %v2888 = vsel %vm940, %v2884, 0.0
        %2889 = vadd.xlane.f32.xlu0 %v2888
        %v2890 = vpop.xlane.xlu0 %2889
        %v2891 = vsel %vm940, %v2885, 0.0
        %2892 = vadd.xlane.f32.xlu0 %v2891
        %v2893 = vpop.xlane.xlu0 %2892
        %v2894 = vrcp.pop 32.0
        %v2895 = vmul.f32 %v2890, %v2894
        %v2896 = vmul.f32 %v2893, %v2894
        %v2897 = vsub.f32 %v2884, %v2895
        %v2898 = vsub.f32 %v2885, %v2896
        %v2899 = vmul.f32 %v2897, %v2897
        %v2900 = vmul.f32 %v2898, %v2898
        %v2901 = vsel %vm940, %v2899, 0.0
        %2902 = vadd.xlane.f32.xlu0 %v2901
        %v2903 = vpop.xlane.xlu0 %2902
        %v2904 = vsel %vm940, %v2900, 0.0
        %2905 = vadd.xlane.f32.xlu0 %v2904
        %v2906 = vpop.xlane.xlu0 %2905
        %v2907 = vmul.f32 %v2903, %v2894
        %v2908 = vmul.f32 %v2906, %v2894
        %v2909 = vadd.f32 %v2907, 1e-12
        %v2910 = vadd.f32 %v2908, 1e-12
        %v2911 = vrsqrt.pop %v2909
        %v2912 = vrsqrt.pop %v2910
        %v2913 = vmul.f32 %v2897, %v2911
        %v2914 = vmul.f32 %v2898, %v2912
        %v2916 = vlaneseq
        %v2917 = vshrl.u32 %v2916, 7
        %v2918 = vsub.s32 0, %v2917
        %v2919 = vrot.slane %v2886, %v2918
        %v2921 = vmul.f32 %v2913, %v2919
        %v2922 = vmul.f32 %v2914, %v2919
        %v2924 = vlaneseq
        %v2925 = vshrl.u32 %v2924, 7
        %v2926 = vsub.s32 0, %v2925
        %v2927 = vrot.slane %v2887, %v2926
        %v2929 = vadd.f32 %v2921, %v2927
        %v2930 = vadd.f32 %v2922, %v2927
        %v2931 = vld [vmem:[%s751] sm:$0xff]
        %v2932 = vld [vmem:[%s751 + $0x8] sm:$0xff]
        %v2933 = vld [vmem:[%s751 + $0x10] sm:$0xff]
        %v2934 = vld [vmem:[%s751 + $0x18] sm:$0xff]
        %v2935 = vld [vmem:[%s901] sm:$0x1]
        %v2937 = vlaneseq
        %v2938 = vshrl.u32 %v2937, 7
        %v2939 = vsub.s32 0, %v2938
        %v2940 = vrot.slane %v2935, %v2939
        %v2943 = vsel %vm940, %v2929, 0
        %v2946 = vsel %vm940, %v2930, 0
        %2948 = vmatprep.subr.mxu0 0.0
        %2949 = vmatpush1.msra.mxu0 0.0
        %2950 = vmatprep.subr.mxu0 0.0
        %2951 = vmatpush1.msra.mxu0 0.0
        %2952 = vmatprep.subr.mxu0 0.0
        %2953 = vmatpush1.msra.mxu0 0.0
        %2954 = vmatprep.subr.mxu0 0.0
        %2955 = vmatpush1.msra.mxu0 0.0
        %2956 = vmatprep.subr.mxu0 0.0
        %2957 = vmatpush1.msra.mxu0 0.0
        %2958 = vmatprep.subr.mxu0 0.0
        %2959 = vmatpush1.msra.mxu0 0.0
        %2960 = vmatprep.subr.mxu0 0.0
        %2961 = vmatpush1.msra.mxu0 0.0
        %2962 = vmatprep.subr.mxu0 0.0
        %2963 = vmatpush1.msra.mxu0 0.0
        %2964 = vmatprep.subr.mxu0 0.0
        %2965 = vmatpush1.msra.mxu0 0.0
        %2966 = vmatprep.subr.mxu0 0.0
        %2967 = vmatpush1.msra.mxu0 0.0
        %2968 = vmatprep.subr.mxu0 0.0
        %2969 = vmatpush1.msra.mxu0 0.0
        %2970 = vmatprep.subr.mxu0 0.0
        %2971 = vmatpush1.msra.mxu0 0.0
        %2972 = vmatprep.subr.mxu0 0.0
        %2973 = vmatpush1.msra.mxu0 %v2934
        %2974 = vmatprep.subr.mxu0 0.0
        %2975 = vmatpush1.msra.mxu0 %v2933
        %2976 = vmatprep.subr.mxu0 0.0
        %2977 = vmatpush1.msra.mxu0 %v2932
        %2978 = vmatprep.subr.mxu0 0.0
        %2979 = vmatpush1.msra.mxu0 %v2931
        %2980 = vmatprep.subr.mxu0 0.0
        %2981 = vmatpush2.msra.mxu0 0.0
        %2982 = vmatprep.subr.mxu0 0.0
        %2983 = vmatpush2.msra.mxu0 0.0
        %2984 = vmatprep.subr.mxu0 0.0
        %2985 = vmatpush2.msra.mxu0 0.0
        %2986 = vmatprep.subr.mxu0 0.0
        %2987 = vmatpush2.msra.mxu0 0.0
        %2988 = vmatprep.subr.mxu0 0.0
        %2989 = vmatpush2.msra.mxu0 0.0
        %2990 = vmatprep.subr.mxu0 0.0
        %2991 = vmatpush2.msra.mxu0 0.0
        %2992 = vmatprep.subr.mxu0 0.0
        %2993 = vmatpush2.msra.mxu0 0.0
        %2994 = vmatprep.subr.mxu0 0.0
        %2995 = vmatpush2.msra.mxu0 0.0
        %2996 = vmatprep.subr.mxu0 0.0
        %2997 = vmatpush2.msra.mxu0 0.0
        %2998 = vmatprep.subr.mxu0 0.0
        %2999 = vmatpush2.msra.mxu0 0.0
        %3000 = vmatprep.subr.mxu0 0.0
        %3001 = vmatpush2.msra.mxu0 0.0
        %3002 = vmatprep.subr.mxu0 0.0
        %3003 = vmatpush2.msra.mxu0 0.0
        %3004 = vmatprep.subr.mxu0 0.0
        %3005 = vmatpush2.msra.mxu0 0.0
        %3006 = vmatprep.subr.mxu0 0.0
        %3007 = vmatpush2.msra.mxu0 0.0
        %3008 = vmatprep.subr.mxu0 0.0
        %3009 = vmatpush2.msra.mxu0 0.0
        %3010 = vmatprep.subr.mxu0 0.0
        %3011 = vmatpush2.msra.mxu0 0.0
        %3012 = vmatprep.mubr.f32.mxu0 0.0
        %3013 = vmatmul.mubr.f32.gmra.mxu0 %v2943
        %v3014 = vpop.f32.mrf.mxu0
        %v3015 = vadd.f32 %v2940, %v3014
        %v3016 = vpop.f32.mrf.mxu0
        %3017 = vmatprep.mubr.f32.mxu0 0.0
        %3018 = vmatmul.mubr.f32.gmra.mxu0 %v2946
        %v3019 = vpop.f32.mrf.mxu0
        %v3020 = vadd.f32 %v2940, %v3019
        %v3021 = vpop.f32.mrf.mxu0
        %3022 = vdwg.mxu0
        %v3023 = vmul.f32 %v3015, 0.5
        %v3024 = vmul.f32 %v3020, 0.5
        %v3025 = vmul.f32 %v3015, %v3015
        %v3026 = vmul.f32 %v3020, %v3020
        %v3027 = vmul.f32 %v3015, %v3025
        %v3028 = vmul.f32 %v3020, %v3026
        %v3029 = vmul.f32 %v3027, 0.044715
        %v3030 = vmul.f32 %v3028, 0.044715
        %v3031 = vadd.f32 %v3015, %v3029
        %v3032 = vadd.f32 %v3020, %v3030
        %v3033 = vmul.f32 %v3031, 0.7978846
        %v3034 = vmul.f32 %v3032, 0.7978846
        %v3035 = vtanh.pop %v3033
        %v3036 = vtanh.pop %v3034
        %v3037 = vadd.f32 %v3035, 1.0
        %v3038 = vadd.f32 %v3036, 1.0
        %v3039 = vmul.f32 %v3023, %v3037
        %v3040 = vmul.f32 %v3024, %v3038
        %v3041 = vld [vmem:[%s906] sm:$0xff]
        %v3042 = vld [vmem:[%s906 + $0x8] sm:$0xff]
        %v3043 = vld [vmem:[%s906 + $0x10] sm:$0xff]
        %v3044 = vld [vmem:[%s906 + $0x18] sm:$0xff]
        %v3045 = vld [vmem:[%s906 + $0x20] sm:$0xff]
        %v3046 = vld [vmem:[%s906 + $0x28] sm:$0xff]
        %v3047 = vld [vmem:[%s906 + $0x30] sm:$0xff]
        %v3048 = vld [vmem:[%s906 + $0x38] sm:$0xff]
        %v3049 = vld [vmem:[%s909] sm:$0x1]
        %v3051 = vlaneseq
        %v3052 = vshrl.u32 %v3051, 7
        %v3053 = vsub.s32 0, %v3052
        %v3054 = vrot.slane %v3049, %v3053
        %vm3056 = vcmask 523264
        %v3058 = vsel %vm3056, %v3039, 0
        %v3061 = vsel %vm3056, %v3040, 0
        %3063 = vmatprep.subr.mxu0 0.0
        %3064 = vmatpush1.msra.mxu0 0.0
        %3065 = vmatprep.subr.mxu0 0.0
        %3066 = vmatpush1.msra.mxu0 0.0
        %3067 = vmatprep.subr.mxu0 0.0
        %3068 = vmatpush1.msra.mxu0 0.0
        %3069 = vmatprep.subr.mxu0 0.0
        %3070 = vmatpush1.msra.mxu0 0.0
        %3071 = vmatprep.subr.mxu0 0.0
        %3072 = vmatpush1.msra.mxu0 0.0
        %3073 = vmatprep.subr.mxu0 0.0
        %3074 = vmatpush1.msra.mxu0 0.0
        %3075 = vmatprep.subr.mxu0 0.0
        %3076 = vmatpush1.msra.mxu0 0.0
        %3077 = vmatprep.subr.mxu0 0.0
        %3078 = vmatpush1.msra.mxu0 0.0
        %3079 = vmatprep.subr.mxu0 0.0
        %3080 = vmatpush1.msra.mxu0 %v3048
        %3081 = vmatprep.subr.mxu0 0.0
        %3082 = vmatpush1.msra.mxu0 %v3047
        %3083 = vmatprep.subr.mxu0 0.0
        %3084 = vmatpush1.msra.mxu0 %v3046
        %3085 = vmatprep.subr.mxu0 0.0
        %3086 = vmatpush1.msra.mxu0 %v3045
        %3087 = vmatprep.subr.mxu0 0.0
        %3088 = vmatpush1.msra.mxu0 %v3044
        %3089 = vmatprep.subr.mxu0 0.0
        %3090 = vmatpush1.msra.mxu0 %v3043
        %3091 = vmatprep.subr.mxu0 0.0
        %3092 = vmatpush1.msra.mxu0 %v3042
        %3093 = vmatprep.subr.mxu0 0.0
        %3094 = vmatpush1.msra.mxu0 %v3041
        %3095 = vmatprep.subr.mxu0 0.0
        %3096 = vmatpush2.msra.mxu0 0.0
        %3097 = vmatprep.subr.mxu0 0.0
        %3098 = vmatpush2.msra.mxu0 0.0
        %3099 = vmatprep.subr.mxu0 0.0
        %3100 = vmatpush2.msra.mxu0 0.0
        %3101 = vmatprep.subr.mxu0 0.0
        %3102 = vmatpush2.msra.mxu0 0.0
        %3103 = vmatprep.subr.mxu0 0.0
        %3104 = vmatpush2.msra.mxu0 0.0
        %3105 = vmatprep.subr.mxu0 0.0
        %3106 = vmatpush2.msra.mxu0 0.0
        %3107 = vmatprep.subr.mxu0 0.0
        %3108 = vmatpush2.msra.mxu0 0.0
        %3109 = vmatprep.subr.mxu0 0.0
        %3110 = vmatpush2.msra.mxu0 0.0
        %3111 = vmatprep.subr.mxu0 0.0
        %3112 = vmatpush2.msra.mxu0 0.0
        %3113 = vmatprep.subr.mxu0 0.0
        %3114 = vmatpush2.msra.mxu0 0.0
        %3115 = vmatprep.subr.mxu0 0.0
        %3116 = vmatpush2.msra.mxu0 0.0
        %3117 = vmatprep.subr.mxu0 0.0
        %3118 = vmatpush2.msra.mxu0 0.0
        %3119 = vmatprep.subr.mxu0 0.0
        %3120 = vmatpush2.msra.mxu0 0.0
        %3121 = vmatprep.subr.mxu0 0.0
        %3122 = vmatpush2.msra.mxu0 0.0
        %3123 = vmatprep.subr.mxu0 0.0
        %3124 = vmatpush2.msra.mxu0 0.0
        %3125 = vmatprep.subr.mxu0 0.0
        %3126 = vmatpush2.msra.mxu0 0.0
        %3127 = vmatprep.mubr.f32.mxu0 0.0
        %3128 = vmatmul.mubr.f32.gmra.mxu0 %v3058
        %v3129 = vpop.f32.mrf.mxu0
        %v3130 = vadd.f32 %v3054, %v3129
        %v3131 = vpop.f32.mrf.mxu0
        %3132 = vmatprep.mubr.f32.mxu0 0.0
        %3133 = vmatmul.mubr.f32.gmra.mxu0 %v3061
        %v3134 = vpop.f32.mrf.mxu0
        %v3135 = vadd.f32 %v3054, %v3134
        %v3136 = vpop.f32.mrf.mxu0
        %3137 = vdwg.mxu0
        %v3138 = vadd.f32 %v3130, %v2929
        %v3139 = vadd.f32 %v3135, %v2930
        %v3140 = vld [vmem:[%s912] sm:$0x1]
        %v3141 = vld [vmem:[%s915] sm:$0x1]
        %v3142 = vsel %vm940, %v3138, 0.0
        %3143 = vadd.xlane.f32.xlu0 %v3142
        %v3144 = vpop.xlane.xlu0 %3143
        %v3145 = vsel %vm940, %v3139, 0.0
        %3146 = vadd.xlane.f32.xlu0 %v3145
        %v3147 = vpop.xlane.xlu0 %3146
        %v3148 = vmul.f32 %v3144, %v2894
        %v3149 = vmul.f32 %v3147, %v2894
        %v3150 = vsub.f32 %v3138, %v3148
        %v3151 = vsub.f32 %v3139, %v3149
        %v3152 = vmul.f32 %v3150, %v3150
        %v3153 = vmul.f32 %v3151, %v3151
        %v3154 = vsel %vm940, %v3152, 0.0
        %3155 = vadd.xlane.f32.xlu0 %v3154
        %v3156 = vpop.xlane.xlu0 %3155
        %v3157 = vsel %vm940, %v3153, 0.0
        %3158 = vadd.xlane.f32.xlu0 %v3157
        %v3159 = vpop.xlane.xlu0 %3158
        %v3160 = vmul.f32 %v3156, %v2894
        %v3161 = vmul.f32 %v3159, %v2894
        %v3162 = vadd.f32 %v3160, 1e-12
        %v3163 = vadd.f32 %v3161, 1e-12
        %v3164 = vrsqrt.pop %v3162
        %v3165 = vrsqrt.pop %v3163
        %v3166 = vmul.f32 %v3150, %v3164
        %v3167 = vmul.f32 %v3151, %v3165
        %v3169 = vlaneseq
        %v3170 = vshrl.u32 %v3169, 7
        %v3171 = vsub.s32 0, %v3170
        %v3172 = vrot.slane %v3140, %v3171
        %v3174 = vmul.f32 %v3166, %v3172
        %v3175 = vmul.f32 %v3167, %v3172
        %v3177 = vlaneseq
        %v3178 = vshrl.u32 %v3177, 7
        %v3179 = vsub.s32 0, %v3178
        %v3180 = vrot.slane %v3141, %v3179
        %v3182 = vadd.f32 %v3174, %v3180
        %v3183 = vadd.f32 %v3175, %v3180
        %3184 = vst.msk [vmem:[#allocation2] sm:$0xff] %vm940, %v3182
        %3185 = vst.msk [vmem:[#allocation2 + $0x8] sm:$0xff] %vm940, %v3183
        %3186 = vst.msk [vmem:[%s858] sm:$0xff] %vm940, %v3182
        %3187 = vst.msk [vmem:[%s858 + $0x8] sm:$0xff] %vm940, %v3183
        %s3188 = sand.u32 %s505, 1
        %s3189 = scalar_lea.sflag [#allocation5], %s3188
        %s3190 = sand.u32 %s505, 1
        %s3191 = smul.addr %s3190, 16
        %s3192 = scalar_lea.vmem [#allocation10], %s3191
        %s3193 = sand.u32 %s531, 1
        %s3194 = scalar_lea.sflag [#allocation12], %s3193
        %s3195 = sand.u32 %s531, 1
        %s3196 = smul.addr %s3195, 64
        %s3197 = scalar_lea.vmem [#allocation11], %s3196
        // Predicated region
        $region113: #{tpu_custom_call.1} parent=91 // pred_check
          %p3198 = pneg %p515
        $region114: #{tpu_custom_call.1} parent=91 // pred_check_branch
          %3200 = sbr.rel (%p3198) target = $region116
        $region115: #{tpu_custom_call.1} parent=91 // pred_region
          %s3202 = ssub.s32 256, 256
          %3203 = vsyncadd %s3189, %s3202
          %s3204 = smul.addr %s39, 2
          %s3205 = smul.addr %s3204, 128
          %s3206 = scalar_lea.hbm %s18, %s3205
          %s3207 = sshll.u32 %s3192, 4
          %s3208 = int_to_ptr.vmem [resolvable:$true] %s3207
          %3213 = dma.vmem_to_hbm [thread:$0]  %s3208, 256, %s3206, %s3189, 128, 128, 8
        $region116: #{tpu_custom_call.1} parent=91 // pred_fallthru
          _
        // Predicated region
        $region117: #{tpu_custom_call.1} parent=91 // pred_check
          %p3214 = pneg %p541
        $region118: #{tpu_custom_call.1} parent=91 // pred_check_branch
          %3216 = sbr.rel (%p3214) target = $region120
        $region119: #{tpu_custom_call.1} parent=91 // pred_region
          %s3218 = ssub.s32 1024, 1024
          %3219 = vsyncadd %s3194, %s3218
          %s3220 = smul.addr %s39, 8
          %s3221 = smul.addr %s3220, 128
          %s3222 = scalar_lea.hbm %s19, %s3221
          %s3223 = sshll.u32 %s3197, 4
          %s3224 = int_to_ptr.vmem [resolvable:$true] %s3223
          %3229 = dma.vmem_to_hbm [thread:$0]  %s3224, 1024, %s3222, %s3194, 128, 128, 8
        $region120: #{tpu_custom_call.1} parent=91 // pred_fallthru
          _
      $region92: #{tpu_custom_call.1} parent=5 // pred_fallthru
        _
      %p3230 = scmp.le.s32.totalorder 2, %s34
      // Predicated region
      $region121: #{tpu_custom_call.1} parent=5 // pred_check
        %p3231 = pneg %p3230
      $region122: #{tpu_custom_call.1} parent=5 // pred_check_branch
        %3233 = sbr.rel (%p3231) target = $region124
      $region123: #{tpu_custom_call.1} parent=5 // pred_region
        %s3234 = ssub.s32 %s34, 2
        // Predicated region
        $region125: #{tpu_custom_call.1} parent=123 // pred_check
          %p3235 = pneg %p521
        $region126: #{tpu_custom_call.1} parent=123 // pred_check_branch
          %3237 = sbr.rel (%p3235) target = $region128
        $region127: #{tpu_custom_call.1} parent=123 // pred_region
          %s3238 = sand.u32 %s506, 1
          %s3239 = scalar_lea.sflag [#allocation5], %s3238
          %s3240 = sand.u32 %s506, 1
          %s3241 = smul.addr %s3240, 16
          %s3242 = scalar_lea.vmem [#allocation10], %s3241
          %3243 = dma.done %s3239, 256
        $region128: #{tpu_custom_call.1} parent=123 // pred_fallthru
          _
        // Predicated region
        $region129: #{tpu_custom_call.1} parent=123 // pred_check
          %p3244 = pneg %p547
        $region130: #{tpu_custom_call.1} parent=123 // pred_check_branch
          %3246 = sbr.rel (%p3244) target = $region132
        $region131: #{tpu_custom_call.1} parent=123 // pred_region
          %s3247 = sand.u32 %s532, 1
          %s3248 = scalar_lea.sflag [#allocation12], %s3247
          %s3249 = sand.u32 %s532, 1
          %s3250 = smul.addr %s3249, 64
          %s3251 = scalar_lea.vmem [#allocation11], %s3250
          %3252 = dma.done %s3248, 1024
        $region132: #{tpu_custom_call.1} parent=123 // pred_fallthru
          _
      $region124: #{tpu_custom_call.1} parent=5 // pred_fallthru
        _
    $region6: #{tpu_custom_call.1} parent=1 // loop_footer
      %s38 = sadd.s32 1, %s34
    $region7: #{tpu_custom_call.1} parent=1 // loop_footer_branch
      %33 = sbr.rel target = $region3
    $region8: #{tpu_custom_call.1} parent=1 // loop_exit
      _
    %3253 = vsyncpa [#allocation4], 1
    %s3254 = scalar_lea.sflag [#allocation4], 1
    %3255 = vsyncpa %s3254, 1
    %3256 = vsyncpa [#allocation7], 1
    %3257 = vsyncpa [#allocation5], 1
    %s3258 = scalar_lea.sflag [#allocation5], 1
    %3259 = vsyncpa %s3258, 1
    %3260 = vsyncpa [#allocation12], 1
    %s3261 = scalar_lea.sflag [#allocation12], 1
    %3262 = vsyncpa %s3261, 1

</llo_original>
